<compile_context>
chip_gen: v7x
topology: tpu7x:2x2x1
jax: 0.10.0
libtpu: 0.0.40
codegen_flags: <defaults>
</compile_context>

<pallas_src>
import jax
import jax.numpy as jnp
from jax.experimental import pallas as pl
from jax.experimental.pallas import tpu as pltpu

_NEG_BIG = -1e30  # finite "-inf": avoids inf-inf -> NaN on fully-masked rows


# ---------------------------------------------------------------------------
# helpers
# ---------------------------------------------------------------------------
def _pick_tile(dim, target):
    """Largest multiple-of-128 tile <= target that divides `dim`; falls back to
    the full dimension (single block) only when no such tile exists."""
    # TODO(synk): pad + masked tails for large dims that are not multiples of 128.
    t = (min(dim, target) // 128) * 128
    while t >= 128:
        if dim % t == 0:
            return t
        t -= 128
    return dim


# ---------------------------------------------------------------------------
# kernel 1: LayerNorm1 + shared Q/K/V projection (Q == K == V in the source)
# ---------------------------------------------------------------------------
def _ln_proj_kernel(x_ref, g_ref, b_ref, w_ref, wb_ref, q_ref):
    x = x_ref[0].astype(jnp.float32)                         # (TS, D)
    mu = jnp.mean(x, axis=-1, keepdims=True)
    var = jnp.mean((x - mu) ** 2, axis=-1, keepdims=True)
    xn = (x - mu) * jax.lax.rsqrt(var + 1e-5) * g_ref[0] + b_ref[0]
    q = jnp.dot(xn.astype(jnp.bfloat16), w_ref[...],
                preferred_element_type=jnp.float32) + wb_ref[0]
    q_ref[0] = q.astype(q_ref.dtype)


# ---------------------------------------------------------------------------
# kernel 2: flash attention on the (B, S, D) layout (no head transposes)
# ---------------------------------------------------------------------------
def _make_flash_kernel(num_heads, head_dim, tq, tk, mode):
    """mode: 'causal' (mask built in-kernel, dead KV tiles skipped),
    'mask' (explicit (B, S, S) mask tile), or 'none'."""
    scale = 1.0 / (head_dim ** 0.5)

    def kernel(*refs):
        if mode == "mask":
            mask_ref, q_ref, k_ref, ctx_ref, m_s, l_s, acc_s = refs
        else:
            q_ref, k_ref, ctx_ref, m_s, l_s, acc_s = refs
        qi = pl.program_id(1)
        ki = pl.program_id(2)

        @pl.when(ki == 0)
        def _():
            m_s[...] = jnp.full_like(m_s, _NEG_BIG)
            l_s[...] = jnp.zeros_like(l_s)
            acc_s[...] = jnp.zeros_like(acc_s)

        def compute_tile():
            if mode == "causal":
                rows = qi * tq + jax.lax.broadcasted_iota(jnp.int32, (tq, tk), 0)
                cols = ki * tk + jax.lax.broadcasted_iota(jnp.int32, (tq, tk), 1)
                keep = cols <= rows                     # upper triangle masked out
            elif mode == "mask":
                keep = mask_ref[0] == 0                 # nonzero => mask out
            else:
                keep = None

            for h in range(num_heads):                  # static loop, lane-aligned slices
                lo, hi = h * head_dim, (h + 1) * head_dim
                qh = q_ref[0, :, lo:hi] * scale         # fold 1/sqrt(hd) into Q
                kh = k_ref[0, :, lo:hi]                 # keys == values == Q projection
                s = jax.lax.dot_general(                # (TQ, TK), contract head_dim
                    qh, kh, (((1,), (1,)), ((), ())),
                    preferred_element_type=jnp.float32)
                if keep is not None:
                    s = jnp.where(keep, s, _NEG_BIG)
                m_prev = m_s[h]
                m_new = jnp.maximum(m_prev, jnp.max(s, axis=-1, keepdims=True))
                alpha = jnp.exp(m_prev - m_new)
                p = jnp.exp(s - m_new)
                l_s[h] = alpha * l_s[h] + jnp.sum(p, axis=-1, keepdims=True)
                acc_s[:, lo:hi] = alpha * acc_s[:, lo:hi] + jnp.dot(
                    p.astype(k_ref.dtype), kh, preferred_element_type=jnp.float32)
                m_s[h] = m_new

        if mode == "causal":
            # Skip KV tiles that lie entirely above the diagonal (fully masked).
            pl.when(ki * tk < (qi + 1) * tq)(compute_tile)
        else:
            compute_tile()

        @pl.when(ki == pl.num_programs(2) - 1)
        def _():
            for h in range(num_heads):
                lo, hi = h * head_dim, (h + 1) * head_dim
                inv_l = pl.reciprocal(l_s[h], approx=True)
                ctx_ref[0, :, lo:hi] = (acc_s[:, lo:hi] * inv_l).astype(ctx_ref.dtype)

    return kernel


# ---------------------------------------------------------------------------
# kernel 3: out-projection + residual + LayerNorm2 + hidden-tiled FFN + residual
# ---------------------------------------------------------------------------
def _proj_ffn_kernel(x_ref, ctx_ref, wo_ref, bo_ref, g2_ref, bt2_ref,
                     w1_ref, b1_ref, w2_ref, b2_ref, out_ref,
                     x1_s, x1n_s, acc_s):
    kh = pl.program_id(2)

    @pl.when(kh == 0)
    def _():
        x = x_ref[0].astype(jnp.float32)                     # (TS, D)
        attn = jnp.dot(ctx_ref[0], wo_ref[...],
                       preferred_element_type=jnp.float32) + bo_ref[0]
        x1 = x + attn                                        # residual 1 (dropout == id)
        mu = jnp.mean(x1, axis=-1, keepdims=True)
        var = jnp.mean((x1 - mu) ** 2, axis=-1, keepdims=True)
        x1n = (x1 - mu) * jax.lax.rsqrt(var + 1e-5) * g2_ref[0] + bt2_ref[0]
        x1_s[...] = x1
        x1n_s[...] = x1n.astype(jnp.bfloat16)
        acc_s[...] = jnp.zeros_like(acc_s)

    # one hidden-dim tile of the FFN: relu(x1n @ w1_tile + b1_tile) @ w2_tile
    h1 = jnp.maximum(
        jnp.dot(x1n_s[...], w1_ref[...],
                preferred_element_type=jnp.float32) + b1_ref[0], 0.0)
    acc_s[...] += jnp.dot(h1.astype(jnp.bfloat16), w2_ref[...],
                          preferred_element_type=jnp.float32)

    @pl.when(kh == pl.num_programs(2) - 1)
    def _():
        out_ref[0] = (x1_s[...] + acc_s[...] + b2_ref[0]).astype(out_ref.dtype)


# ---------------------------------------------------------------------------
# wrapper
# ---------------------------------------------------------------------------
def encoder_layer(x, params, num_heads, mask=None, causal=False,
                  seq_tile=256, q_tile=256, kv_tile=128, hidden_tile=256):
    B, S, D = x.shape
    assert D % num_heads == 0, "model_size must be divisible by num_heads"
    hd = D // num_heads
    H_ff = params["w1"].shape[1]

    ts = _pick_tile(S, seq_tile)
    tq = _pick_tile(S, q_tile)
    tk = _pick_tile(S, kv_tile)
    th = _pick_tile(H_ff, hidden_tile)

    f32, bf16 = jnp.float32, jnp.bfloat16
    wq = params["wq"].astype(bf16)
    wo = params["wo"].astype(bf16)
    w1 = params["w1"].astype(bf16)
    w2 = params["w2"].astype(bf16)

    # ---- kernel 1: LN1 + shared QKV projection -> q (B, S, D) bf16 ----
    # wq stays block-resident (constant block index -> fetched once).
    # TODO(synk): tile wq / wo output dims for D >= ~2048 on v7x (64 MiB VMEM).
    q = pl.pallas_call(
        _ln_proj_kernel,
        out_shape=jax.ShapeDtypeStruct((B, S, D), bf16),
        grid=(B, S // ts),
        in_specs=[
            pl.BlockSpec((1, ts, D), lambda b, s: (b, s, 0)),
            pl.BlockSpec((1, D), lambda b, s: (0, 0)),
            pl.BlockSpec((1, D), lambda b, s: (0, 0)),
            pl.BlockSpec((D, D), lambda b, s: (0, 0)),
            pl.BlockSpec((1, D), lambda b, s: (0, 0)),
        ],
        out_specs=pl.BlockSpec((1, ts, D), lambda b, s: (b, s, 0)),
        compiler_params=pltpu.CompilerParams(
            dimension_semantics=("parallel", "parallel")),
    )(x, params["ln1_g"], params["ln1_b"], wq, params["bq"])

    # ---- kernel 2: flash attention directly on (B, S, D) layout ----
    if causal:
        mode = "causal"
    elif mask is not None:
        mode = "mask"
    else:
        mode = "none"

    if mode == "causal":
        # Clamp dead (fully masked) KV-tile indices to the last live one so
        # Pallas never re-DMAs a K block for skipped tiles.
        k_map = lambda b, qi, ki: (b, jnp.minimum(ki, ((qi + 1) * tq - 1) // tk), 0)
    else:
        k_map = lambda b, qi, ki: (b, ki, 0)

    in_specs = []
    args = []
    if mode == "mask":
        in_specs.append(pl.BlockSpec((1, tq, tk), lambda b, qi, ki: (b, qi, ki)))
        args.append(mask)
    in_specs += [
        pl.BlockSpec((1, tq, D), lambda b, qi, ki: (b, qi, 0)),
        pl.BlockSpec((1, tk, D), k_map),
    ]
    args += [q, q]           # K == V == Q projection (faithful to the source)

    ctx = pl.pallas_call(
        _make_flash_kernel(num_heads, hd, tq, tk, mode),
        out_shape=jax.ShapeDtypeStruct((B, S, D), bf16),
        grid=(B, S // tq, S // tk),
        in_specs=in_specs,
        out_specs=pl.BlockSpec((1, tq, D), lambda b, qi, ki: (b, qi, 0)),
        scratch_shapes=[
            pltpu.VMEM((num_heads, tq, 1), f32),   # running max per head
            pltpu.VMEM((num_heads, tq, 1), f32),   # running sum per head
            pltpu.VMEM((tq, D), f32),              # context accumulator (lane-dense)
        ],
        compiler_params=pltpu.CompilerParams(
            dimension_semantics=("parallel", "parallel", "arbitrary")),
    )(*args)

    # ---- kernel 3: out-proj + residual + LN2 + hidden-tiled FFN + residual ----
    out = pl.pallas_call(
        _proj_ffn_kernel,
        out_shape=jax.ShapeDtypeStruct((B, S, D), x.dtype),
        grid=(B, S // ts, H_ff // th),
        in_specs=[
            pl.BlockSpec((1, ts, D), lambda b, s, k: (b, s, 0)),   # x (residual)
            pl.BlockSpec((1, ts, D), lambda b, s, k: (b, s, 0)),   # attention context
            pl.BlockSpec((D, D), lambda b, s, k: (0, 0)),          # wo
            pl.BlockSpec((1, D), lambda b, s, k: (0, 0)),          # bo
            pl.BlockSpec((1, D), lambda b, s, k: (0, 0)),          # ln2 gamma
            pl.BlockSpec((1, D), lambda b, s, k: (0, 0)),          # ln2 beta
            pl.BlockSpec((D, th), lambda b, s, k: (0, k)),         # w1 hidden tile
            pl.BlockSpec((1, th), lambda b, s, k: (0, k)),         # b1 hidden tile
            pl.BlockSpec((th, D), lambda b, s, k: (k, 0)),         # w2 hidden tile
            pl.BlockSpec((1, D), lambda b, s, k: (0, 0)),          # b2
        ],
        out_specs=pl.BlockSpec((1, ts, D), lambda b, s, k: (b, s, 0)),
        scratch_shapes=[
            pltpu.VMEM((ts, D), f32),     # x1 (residual carried to the output)
            pltpu.VMEM((ts, D), bf16),    # LayerNorm2(x1), FFN matmul operand
            pltpu.VMEM((ts, D), f32),     # FFN output accumulator
        ],
        compiler_params=pltpu.CompilerParams(
            dimension_semantics=("parallel", "parallel", "arbitrary")),
    )(x, ctx, wo, params["bo"], params["ln2_g"], params["ln2_b"],
      w1, params["b1"], w2, params["b2"])

    return out


# ---------------------------------------------------------------------------
# pure-JAX reference (compute_dtype controls matmul-operand precision)
# ---------------------------------------------------------------------------
def encoder_layer_ref(x, mask, params, num_heads, compute_dtype=jnp.float32):
    B, S, D = x.shape
    hd = D // num_heads
    eps = 1e-5
    cd = compute_dtype
    scale = 1.0 / (hd ** 0.5)

    def ln(z, g, b):
        mu = jnp.mean(z, axis=-1, keepdims=True)
        var = jnp.mean((z - mu) ** 2, axis=-1, keepdims=True)
        return (z - mu) / jnp.sqrt(var + eps) * g[0] + b[0]

    def mm(a, w):
        return jnp.dot(a.astype(cd), w.astype(cd),
                       preferred_element_type=jnp.float32)

    xn = ln(x, params["ln1_g"], params["ln1_b"])
    q = mm(xn, params["wq"]) + params["bq"][0]
    qh = q.reshape(B, S, num_heads, hd).transpose(0, 2, 1, 3).astype(cd)
    s = jnp.einsum("bhqd,bhkd->bhqk", qh * scale, qh,
                   preferred_element_type=jnp.float32)
    s = jnp.where(mask[:, None] > 0, -jnp.inf, s)
    p = jax.nn.softmax(s, axis=-1)
    ctx = jnp.einsum("bhqk,bhkd->bhqd", p.astype(cd), qh,
                     preferred_element_type=jnp.float32)
    ctx = ctx.transpose(0, 2, 1, 3).reshape(B, S, D)
    attn = mm(ctx, params["wo"]) + params["bo"][0]
    x1 = x + attn
    x1n = ln(x1, params["ln2_g"], params["ln2_b"])
    h1 = jax.nn.relu(mm(x1n, params["w1"]) + params["b1"][0])
    ff = mm(h1, params["w2"]) + params["b2"][0]
    return x1 + ff


def make_params(key, model_size, hidden_size):
    ks = jax.random.split(key, 6)
    D, H = model_size, hidden_size
    scale_d = 1.0 / jnp.sqrt(jnp.float32(D))
    scale_h = 1.0 / jnp.sqrt(jnp.float32(H))
    return {
        "ln1_g": jnp.ones((1, D), jnp.float32),
        "ln1_b": jnp.zeros((1, D), jnp.float32),
        "ln2_g": jnp.ones((1, D), jnp.float32),
        "ln2_b": jnp.zeros((1, D), jnp.float32),
        # weights stored (in, out) so kernels compute x @ W + b
        "wq": jax.random.normal(ks[0], (D, D), jnp.float32) * scale_d,
        "bq": jax.random.normal(ks[1], (1, D), jnp.float32) * 0.01,
        "wo": jax.random.normal(ks[2], (D, D), jnp.float32) * scale_d,
        "bo": jnp.zeros((1, D), jnp.float32),
        "w1": jax.random.normal(ks[3], (D, H), jnp.float32) * scale_d,
        "b1": jax.random.normal(ks[4], (1, H), jnp.float32) * 0.01,
        "w2": jax.random.normal(ks[5], (H, D), jnp.float32) * scale_h,
        "b2": jnp.zeros((1, D), jnp.float32),
    }


if __name__ == "__main__":
    # head_dim = D / num_heads = 128 keeps every per-head slice lane-aligned and
    # the MXU reasonably fed (per the review); S=512 exercises 2 q-tiles,
    # 4 kv-tiles (2 of which are skipped for qi=0), and 2 FFN hidden tiles.
    B, S, D = 2, 512, 512
    num_heads = 4
    hidden_size = 512

    key = jax.random.PRNGKey(0)
    k_x, k_p, k_m = jax.random.split(key, 3)
    x = jax.random.normal(k_x, (B, S, D), jnp.float32)
    params = make_params(k_p, D, hidden_size)

    # --- causal path: mask generated in-kernel, fully-masked KV tiles skipped ---
    out_c = encoder_layer(x, params, num_heads, causal=True)
    out_c = jax.block_until_ready(out_c)
    assert out_c.shape == (B, S, D)

    causal_mask = jnp.broadcast_to(
        jnp.triu(jnp.ones((S, S), jnp.float32), k=1), (B, S, S))
    ref_bf16 = encoder_layer_ref(x, causal_mask, params, num_heads, jnp.bfloat16)
    ref_f32 = encoder_layer_ref(x, causal_mask, params, num_heads, jnp.float32)
    assert jnp.allclose(out_c, ref_bf16, atol=3e-2, rtol=3e-2), (
        "causal path mismatch vs bf16-matched reference, max abs err = %e"
        % float(jnp.max(jnp.abs(out_c - ref_bf16))))
    assert jnp.allclose(out_c, ref_f32, atol=2e-1, rtol=2e-1), (
        "causal path mismatch vs f32 reference, max abs err = %e"
        % float(jnp.max(jnp.abs(out_c - ref_f32))))

    # --- explicit (arbitrary) mask path: mask tile compared == 0 in-kernel ---
    rmask = (jax.random.uniform(k_m, (B, S, S)) < 0.25).astype(jnp.float32)
    rmask = rmask.at[:, :, 0].set(0.0)       # never mask a full row
    out_m = encoder_layer(x, params, num_heads, mask=rmask)
    out_m = jax.block_until_ready(out_m)
    ref_m = encoder_layer_ref(x, rmask, params, num_heads, jnp.bfloat16)
    assert jnp.allclose(out_m, ref_m, atol=3e-2, rtol=3e-2), (
        "masked path mismatch vs bf16-matched reference, max abs err = %e"
        % float(jnp.max(jnp.abs(out_m - ref_m))))

    print("KERNEL_OK")
</pallas_src>

<mosaic_0001>
module attributes {stable_mosaic.version = 11 : i64} {
  func.func @_ln_proj_kernel(%arg0: i32, %arg1: i32, %arg2: memref<1x256x512xf32, #tpu.memory_space<vmem>>, %arg3: memref<1x512xf32, #tpu.memory_space<vmem>>, %arg4: memref<1x512xf32, #tpu.memory_space<vmem>>, %arg5: memref<512x512xbf16, #tpu.memory_space<vmem>>, %arg6: memref<1x512xf32, #tpu.memory_space<vmem>>, %arg7: memref<1x256x512xbf16, #tpu.memory_space<vmem>>) attributes {dimension_semantics = [#tpu.dimension_semantics<parallel>, #tpu.dimension_semantics<parallel>], iteration_bounds = array<i64: 2, 2>, scalar_prefetch = 0 : i64, scratch_operands = 0 : i64, tpu.core_type = #tpu.core_type<tc>, window_params = [{transform_indices = @transform_0, window_bounds = array<i64: 1, 256, 512>}, {pipeline_mode = #tpu.pipeline_mode<synchronous>, transform_indices = @transform_1, window_bounds = array<i64: 1, 512>}, {pipeline_mode = #tpu.pipeline_mode<synchronous>, transform_indices = @transform_2, window_bounds = array<i64: 1, 512>}, {pipeline_mode = #tpu.pipeline_mode<synchronous>, transform_indices = @transform_3, window_bounds = array<i64: 512, 512>}, {pipeline_mode = #tpu.pipeline_mode<synchronous>, transform_indices = @transform_4, window_bounds = array<i64: 1, 512>}, {transform_indices = @transform_5, window_bounds = array<i64: 1, 256, 512>}]} {
    %c0 = arith.constant 0 : index
    %c0_0 = arith.constant 0 : index
    %c0_1 = arith.constant 0 : index
    %0 = vector.load %arg2[%c0, %c0_0, %c0_1] : memref<1x256x512xf32, #tpu.memory_space<vmem>>, vector<1x256x512xf32>
    %1 = vector.shape_cast %0 : vector<1x256x512xf32> to vector<256x512xf32>
    %cst = arith.constant dense<0.000000e+00> : vector<256xf32>
    %2 = vector.multi_reduction <add>, %1, %cst [1] : vector<256x512xf32> to vector<256xf32>
    %3 = vector.shape_cast %2 : vector<256xf32> to vector<256x1xf32>
    %cst_2 = arith.constant 5.120000e+02 : f32
    %4 = vector.broadcast %cst_2 : f32 to vector<256x1xf32>
    %5 = arith.divf %3, %4 : vector<256x1xf32>
    %6 = vector.broadcast %5 : vector<256x1xf32> to vector<256x512xf32>
    %7 = arith.subf %1, %6 : vector<256x512xf32>
    %8 = arith.mulf %7, %7 : vector<256x512xf32>
    %cst_3 = arith.constant dense<0.000000e+00> : vector<256xf32>
    %9 = vector.multi_reduction <add>, %8, %cst_3 [1] : vector<256x512xf32> to vector<256xf32>
    %10 = vector.shape_cast %9 : vector<256xf32> to vector<256x1xf32>
    %cst_4 = arith.constant 5.120000e+02 : f32
    %11 = vector.broadcast %cst_4 : f32 to vector<256x1xf32>
    %12 = arith.divf %10, %11 : vector<256x1xf32>
    %13 = vector.broadcast %5 : vector<256x1xf32> to vector<256x512xf32>
    %14 = arith.subf %1, %13 : vector<256x512xf32>
    %cst_5 = arith.constant 9.99999974E-6 : f32
    %15 = vector.broadcast %cst_5 : f32 to vector<256x1xf32>
    %16 = arith.addf %12, %15 : vector<256x1xf32>
    %17 = math.rsqrt %16 : vector<256x1xf32>
    %18 = vector.broadcast %17 : vector<256x1xf32> to vector<256x512xf32>
    %19 = arith.mulf %14, %18 : vector<256x512xf32>
    %c0_6 = arith.constant 0 : index
    %c0_7 = arith.constant 0 : index
    %20 = vector.load %arg3[%c0_6, %c0_7] : memref<1x512xf32, #tpu.memory_space<vmem>>, vector<1x512xf32>
    %21 = vector.shape_cast %20 : vector<1x512xf32> to vector<512xf32>
    %22 = vector.shape_cast %21 : vector<512xf32> to vector<1x512xf32>
    %23 = vector.broadcast %22 : vector<1x512xf32> to vector<256x512xf32>
    %24 = arith.mulf %19, %23 : vector<256x512xf32>
    %c0_8 = arith.constant 0 : index
    %c0_9 = arith.constant 0 : index
    %25 = vector.load %arg4[%c0_8, %c0_9] : memref<1x512xf32, #tpu.memory_space<vmem>>, vector<1x512xf32>
    %26 = vector.shape_cast %25 : vector<1x512xf32> to vector<512xf32>
    %27 = vector.shape_cast %26 : vector<512xf32> to vector<1x512xf32>
    %28 = vector.broadcast %27 : vector<1x512xf32> to vector<256x512xf32>
    %29 = arith.addf %24, %28 : vector<256x512xf32>
    %30 = arith.truncf %29 : vector<256x512xf32> to vector<256x512xbf16>
    %c0_10 = arith.constant 0 : index
    %c0_11 = arith.constant 0 : index
    %31 = vector.load %arg5[%c0_10, %c0_11] : memref<512x512xbf16, #tpu.memory_space<vmem>>, vector<512x512xbf16>
    %cst_12 = arith.constant dense<0.000000e+00> : vector<256x512xf32>
    %32 = tpu.matmul %30, %31, %cst_12 {dimension_numbers = #tpu.dot_dimension_numbers<[1], [0], [0], [1], [0, 0, 1, 1], [], []>} : vector<256x512xbf16>, vector<512x512xbf16>, vector<256x512xf32> -> vector<256x512xf32>
    %c0_13 = arith.constant 0 : index
    %c0_14 = arith.constant 0 : index
    %33 = vector.load %arg6[%c0_13, %c0_14] : memref<1x512xf32, #tpu.memory_space<vmem>>, vector<1x512xf32>
    %34 = vector.shape_cast %33 : vector<1x512xf32> to vector<512xf32>
    %35 = vector.shape_cast %34 : vector<512xf32> to vector<1x512xf32>
    %36 = vector.broadcast %35 : vector<1x512xf32> to vector<256x512xf32>
    %37 = arith.addf %32, %36 : vector<256x512xf32>
    %38 = arith.truncf %37 : vector<256x512xf32> to vector<256x512xbf16>
    %c0_15 = arith.constant 0 : index
    %c0_16 = arith.constant 0 : index
    %c0_17 = arith.constant 0 : index
    %39 = vector.load %arg7[%c0_15, %c0_16, %c0_17] : memref<1x256x512xbf16, #tpu.memory_space<vmem>>, vector<1x256x512xbf16>
    %40 = vector.shape_cast %39 : vector<1x256x512xbf16> to vector<256x512xbf16>
    %41 = vector.shape_cast %38 : vector<256x512xbf16> to vector<1x256x512xbf16>
    tpu.vector_store %arg7[%c0_15, %c0_16, %c0_17], %41 {strides = array<i32>} : memref<1x256x512xbf16, #tpu.memory_space<vmem>>, vector<1x256x512xbf16>,
    return
  }
  func.func @transform_0(%arg0: i32, %arg1: i32) -> (i32, i32, i32) {
    %c0_i32 = arith.constant 0 : i32
    %c0_i32_0 = arith.constant 0 : i32
    return %arg0, %arg1, %c0_i32 : i32, i32, i32
  }
  func.func @transform_1(%arg0: i32, %arg1: i32) -> (i32, i32) {
    %c0_i32 = arith.constant 0 : i32
    %c0_i32_0 = arith.constant 0 : i32
    %c0_i32_1 = arith.constant 0 : i32
    return %c0_i32, %c0_i32_0 : i32, i32
  }
  func.func @transform_2(%arg0: i32, %arg1: i32) -> (i32, i32) {
    %c0_i32 = arith.constant 0 : i32
    %c0_i32_0 = arith.constant 0 : i32
    %c0_i32_1 = arith.constant 0 : i32
    return %c0_i32, %c0_i32_0 : i32, i32
  }
  func.func @transform_3(%arg0: i32, %arg1: i32) -> (i32, i32) {
    %c0_i32 = arith.constant 0 : i32
    %c0_i32_0 = arith.constant 0 : i32
    %c0_i32_1 = arith.constant 0 : i32
    return %c0_i32, %c0_i32_0 : i32, i32
  }
  func.func @transform_4(%arg0: i32, %arg1: i32) -> (i32, i32) {
    %c0_i32 = arith.constant 0 : i32
    %c0_i32_0 = arith.constant 0 : i32
    %c0_i32_1 = arith.constant 0 : i32
    return %c0_i32, %c0_i32_0 : i32, i32
  }
  func.func @transform_5(%arg0: i32, %arg1: i32) -> (i32, i32, i32) {
    %c0_i32 = arith.constant 0 : i32
    %c0_i32_0 = arith.constant 0 : i32
    return %arg0, %arg1, %c0_i32 : i32, i32, i32
  }
}

</mosaic_0001>

<llo_original>
// kernel: tpu_custom_call.1
$region0: #{tpu_custom_call.1}
  #allocation0 [shape = 'u32[]', space=smem, size = 0x4, offset = 0x4, fixed_abs, tag = 'smem constant byte address 0x4 - core index']
  #allocation1 [shape = 'u32[144,128]{1,0:T(1,128)}', space=vmem, size = 0x12000, scoped, tag = 'internal scratch']
  %s0 = inlined_call_operand.hbm [shape: f32[2,512,512], index: 0, kind: input, shape index: {}]
  %s1 = inlined_call_operand.hbm [shape: f32[1,512], index: 1, kind: input, shape index: {}]
  %s2 = inlined_call_operand.hbm [shape: f32[1,512], index: 2, kind: input, shape index: {}]
  %s3 = inlined_call_operand.hbm [shape: bf16[512,512], index: 3, kind: input, shape index: {}]
  %s4 = inlined_call_operand.hbm [shape: f32[1,512], index: 4, kind: input, shape index: {}]
  %s5 = inlined_call_operand.hbm [shape: bf16[2,512,512], index: 5, kind: output, shape index: {}]
  %s6 = sld [smem:[#allocation0]]
  $region73: #{tpu_custom_call.1} parent=0
    _
  %s8 = ssub.s32 1, %s6
  %s9 = scalar_select 0, %s8, %s6
  $region1: #{tpu_custom_call.1} parent=0
    #allocation2 [shape = 'u8[1048576]{0}', space=vmem, size = 0x100000, scoped, tag = 'input window, operand 0']
    #allocation3 [shape = 's32[2]{0}', space=sflag, size = 0x8, scoped, tag = 'scoped memory for tpu_custom_call.1']
    #allocation4 [shape = 's32[2]{0}', space=sflag, size = 0x8, scoped, tag = 'scoped memory for tpu_custom_call.1']
    #allocation5 [shape = 'u8[2048]{0}', space=vmem, size = 0x800, scoped, tag = 'input window, operand 1, single buffered']
    #allocation6 [shape = 's32[1]{0}', space=sflag, size = 0x4, scoped, tag = 'scoped memory for tpu_custom_call.1']
    #allocation7 [shape = 'u8[2048]{0}', space=vmem, size = 0x800, scoped, tag = 'input window, operand 2, single buffered']
    #allocation8 [shape = 'u8[524288]{0}', space=vmem, size = 0x80000, scoped, tag = 'input window, operand 3, single buffered']
    #allocation9 [shape = 's32[1]{0}', space=sflag, size = 0x4, scoped, tag = 'scoped memory for tpu_custom_call.1']
    #allocation10 [shape = 'u8[2048]{0}', space=vmem, size = 0x800, scoped, tag = 'input window, operand 4, single buffered']
    #allocation11 [shape = 'u8[524288]{0}', space=vmem, size = 0x80000, scoped, tag = 'output window, operand 0']
    %10 = vsyncpa [#allocation3], 0
    %s11 = scalar_lea.sflag [#allocation3], 1
    %12 = vsyncpa %s11, 0
    %13 = vsyncpa [#allocation6], 0
    %14 = vsyncpa [#allocation9], 0
    %15 = vsyncpa [#allocation4], 0
    %s16 = scalar_lea.sflag [#allocation4], 1
    %17 = vsyncpa %s16, 0
    loop: start=0, step=1, limit=6
    $region2: #{tpu_custom_call.1} parent=1 // loop_pre_header
      _
    $region3: #{tpu_custom_call.1} parent=1 // loop_header
      %s19 = sphi 0, %s23
      %p20 = scmp.ge.s32.totalorder %s19, 6
      %s26 = sphi 0, %s38
      %s27 = sphi 0, %s34
      %s28 = sphi 0, %s26
      %s29 = sphi 0, %s27
      %s30 = sphi 0, %s28
      %s31 = sphi 0, %s29
      %s43 = sphi 0, %s45
      %s46 = sphi 0, %s43
      %s47 = sphi 0, %s46
      %s63 = sphi 0, %s47
      %s67 = sphi 0, %s67
      %s69 = sphi 0, %s67
      %s70 = sphi 0, %s69
      %s84 = sphi 0, %s70
      %s88 = sphi 0, %s88
      %s90 = sphi 0, %s88
      %s91 = sphi 0, %s90
      %s105 = sphi 0, %s91
      %s109 = sphi 0, %s109
      %s111 = sphi 0, %s109
      %s112 = sphi 0, %s111
      %s126 = sphi 0, %s112
      %s130 = sphi 0, %s130
      %s132 = sphi 0, %s130
      %s133 = sphi 0, %s132
      %s147 = sphi 0, %s133
      %s155 = sphi 0, %s157
      %s158 = sphi 0, %s155
      %s159 = sphi 0, %s158
      %s175 = sphi 0, %s159
    $region4: #{tpu_custom_call.1} parent=1 // loop_header_branch
      %22 = sbr.rel (%p20) target = $region8
    $region5: #{tpu_custom_call.1} parent=1 // loop_body
      %s24 = ssub.s32 %s19, 1
      %s25 = ssub.s32 %s19, 2
      %s32 = sadd.s32 1, %s27
      %p33 = scmp.ge.s32.totalorder %s32, 2
      %s34 = scalar_select %p33, 0, %s32
      %s35 = sadd.s32 1, %s26
      %s36 = scalar_select %p33, %s35, %s26
      %p37 = scmp.ge.s32.totalorder %s36, 2
      %s38 = scalar_select %p37, 0, %s36
      %s39 = ssub.s32 %s26, %s38
      %s40 = ssub.s32 %s27, %s34
      %s41 = sor.u32 %s39, %s40
      %p42 = scmp.eq.s32.totalorder %s41, 0
      %s44 = sadd.s32 %s43, 1
      %s45 = scalar_select %p42, %s43, %s44
      %p48 = pneg %p42
      %p49 = scmp.eq.s32.totalorder %s19, 3
      %p50 = por %p48, %p49
      %p51 = scmp.ne.s32.totalorder %s43, %s46
      %p52 = scmp.eq.s32.totalorder %s19, 0
      %p53 = por %p51, %p52
      %p54 = scmp.ne.s32.totalorder %s43, %s46
      %p55 = scmp.eq.s32.totalorder %s24, 3
      %p56 = por %p54, %p55
      %p57 = scmp.ne.s32.totalorder %s46, %s47
      %p58 = scmp.eq.s32.totalorder %s24, 0
      %p59 = por %p57, %p58
      %p60 = scmp.ne.s32.totalorder %s46, %s47
      %p61 = scmp.eq.s32.totalorder %s25, 3
      %p62 = por %p60, %p61
      %p64 = scmp.ne.s32.totalorder %s47, %s63
      %p65 = scmp.eq.s32.totalorder %s25, 0
      %p66 = por %p64, %p65
      %s68 = sadd.s32 %s67, 1
      %p71 = scmp.eq.s32.totalorder %s19, 3
      %p72 = scmp.ne.s32.totalorder %s67, %s69
      %p73 = scmp.eq.s32.totalorder %s19, 0
      %p74 = por %p72, %p73
      %p75 = scmp.ne.s32.totalorder %s67, %s69
      %p76 = scmp.eq.s32.totalorder %s24, 3
      %p77 = por %p75, %p76
      %p78 = scmp.ne.s32.totalorder %s69, %s70
      %p79 = scmp.eq.s32.totalorder %s24, 0
      %p80 = por %p78, %p79
      %p81 = scmp.ne.s32.totalorder %s69, %s70
      %p82 = scmp.eq.s32.totalorder %s25, 3
      %p83 = por %p81, %p82
      %p85 = scmp.ne.s32.totalorder %s70, %s84
      %p86 = scmp.eq.s32.totalorder %s25, 0
      %p87 = por %p85, %p86
      %s89 = sadd.s32 %s88, 1
      %p92 = scmp.eq.s32.totalorder %s19, 3
      %p93 = scmp.ne.s32.totalorder %s88, %s90
      %p94 = scmp.eq.s32.totalorder %s19, 0
      %p95 = por %p93, %p94
      %p96 = scmp.ne.s32.totalorder %s88, %s90
      %p97 = scmp.eq.s32.totalorder %s24, 3
      %p98 = por %p96, %p97
      %p99 = scmp.ne.s32.totalorder %s90, %s91
      %p100 = scmp.eq.s32.totalorder %s24, 0
      %p101 = por %p99, %p100
      %p102 = scmp.ne.s32.totalorder %s90, %s91
      %p103 = scmp.eq.s32.totalorder %s25, 3
      %p104 = por %p102, %p103
      %p106 = scmp.ne.s32.totalorder %s91, %s105
      %p107 = scmp.eq.s32.totalorder %s25, 0
      %p108 = por %p106, %p107
      %s110 = sadd.s32 %s109, 1
      %p113 = scmp.eq.s32.totalorder %s19, 3
      %p114 = scmp.ne.s32.totalorder %s109, %s111
      %p115 = scmp.eq.s32.totalorder %s19, 0
      %p116 = por %p114, %p115
      %p117 = scmp.ne.s32.totalorder %s109, %s111
      %p118 = scmp.eq.s32.totalorder %s24, 3
      %p119 = por %p117, %p118
      %p120 = scmp.ne.s32.totalorder %s111, %s112
      %p121 = scmp.eq.s32.totalorder %s24, 0
      %p122 = por %p120, %p121
      %p123 = scmp.ne.s32.totalorder %s111, %s112
      %p124 = scmp.eq.s32.totalorder %s25, 3
      %p125 = por %p123, %p124
      %p127 = scmp.ne.s32.totalorder %s112, %s126
      %p128 = scmp.eq.s32.totalorder %s25, 0
      %p129 = por %p127, %p128
      %s131 = sadd.s32 %s130, 1
      %p134 = scmp.eq.s32.totalorder %s19, 3
      %p135 = scmp.ne.s32.totalorder %s130, %s132
      %p136 = scmp.eq.s32.totalorder %s19, 0
      %p137 = por %p135, %p136
      %p138 = scmp.ne.s32.totalorder %s130, %s132
      %p139 = scmp.eq.s32.totalorder %s24, 3
      %p140 = por %p138, %p139
      %p141 = scmp.ne.s32.totalorder %s132, %s133
      %p142 = scmp.eq.s32.totalorder %s24, 0
      %p143 = por %p141, %p142
      %p144 = scmp.ne.s32.totalorder %s132, %s133
      %p145 = scmp.eq.s32.totalorder %s25, 3
      %p146 = por %p144, %p145
      %p148 = scmp.ne.s32.totalorder %s133, %s147
      %p149 = scmp.eq.s32.totalorder %s25, 0
      %p150 = por %p148, %p149
      %s151 = ssub.s32 %s26, %s38
      %s152 = ssub.s32 %s27, %s34
      %s153 = sor.u32 %s151, %s152
      %p154 = scmp.eq.s32.totalorder %s153, 0
      %s156 = sadd.s32 %s155, 1
      %s157 = scalar_select %p154, %s155, %s156
      %p160 = pneg %p154
      %p161 = scmp.eq.s32.totalorder %s19, 3
      %p162 = por %p160, %p161
      %p163 = scmp.ne.s32.totalorder %s155, %s158
      %p164 = scmp.eq.s32.totalorder %s19, 0
      %p165 = por %p163, %p164
      %p166 = scmp.ne.s32.totalorder %s155, %s158
      %p167 = scmp.eq.s32.totalorder %s24, 3
      %p168 = por %p166, %p167
      %p169 = scmp.ne.s32.totalorder %s158, %s159
      %p170 = scmp.eq.s32.totalorder %s24, 0
      %p171 = por %p169, %p170
      %p172 = scmp.ne.s32.totalorder %s158, %s159
      %p173 = scmp.eq.s32.totalorder %s25, 3
      %p174 = por %p172, %p173
      %p176 = scmp.ne.s32.totalorder %s159, %s175
      %p177 = scmp.eq.s32.totalorder %s25, 0
      %p178 = por %p176, %p177
      %p179 = scmp.le.s32.totalorder 1, %s19
      %p180 = scmp.lt.s32.totalorder %s19, 5
      %p181 = pnand %p179, %p180
      %p182 = pneg %p181
      // Predicated region
      $region9: #{tpu_custom_call.1} parent=5 // pred_check
        _
      $region10: #{tpu_custom_call.1} parent=5 // pred_check_branch
        %184 = sbr.rel (%p181) target = $region12
      $region11: #{tpu_custom_call.1} parent=5 // pred_region
        %s185 = ssub.s32 %s19, 1
        // Predicated region
        $region13: #{tpu_custom_call.1} parent=11 // pred_check
          %p186 = pneg %p80
        $region14: #{tpu_custom_call.1} parent=11 // pred_check_branch
          %188 = sbr.rel (%p186) target = $region16
        $region15: #{tpu_custom_call.1} parent=11 // pred_region
          %s190 = ssub.s32 64, 64
          %191 = vsyncadd [#allocation6], %s190
          %s193 = sshll.u32 [#allocation5], 4
          %s194 = int_to_ptr.vmem [resolvable:$true] %s193
          %196 = dma.hbm_to_vmem [thread:$0]  %s1, 64, %s194, [#allocation6]
        $region16: #{tpu_custom_call.1} parent=11 // pred_fallthru
          _
        // Predicated region
        $region17: #{tpu_custom_call.1} parent=11 // pred_check
          %p197 = pneg %p101
        $region18: #{tpu_custom_call.1} parent=11 // pred_check_branch
          %199 = sbr.rel (%p197) target = $region20
        $region19: #{tpu_custom_call.1} parent=11 // pred_region
          %s201 = ssub.s32 64, 64
          %202 = vsyncadd [#allocation6], %s201
          %s204 = sshll.u32 [#allocation7], 4
          %s205 = int_to_ptr.vmem [resolvable:$true] %s204
          %207 = dma.hbm_to_vmem [thread:$0]  %s2, 64, %s205, [#allocation6]
        $region20: #{tpu_custom_call.1} parent=11 // pred_fallthru
          _
        // Predicated region
        $region21: #{tpu_custom_call.1} parent=11 // pred_check
          %p208 = pneg %p122
        $region22: #{tpu_custom_call.1} parent=11 // pred_check_branch
          %210 = sbr.rel (%p208) target = $region24
        $region23: #{tpu_custom_call.1} parent=11 // pred_region
          %s212 = ssub.s32 16384, 16384
          %213 = vsyncadd [#allocation9], %s212
          %s214 = sshll.u32 [#allocation8], 4
          %s215 = int_to_ptr.vmem [resolvable:$true] %s214
          %220 = dma.hbm_to_vmem [thread:$0]  %s3, 16384, %s215, [#allocation9], 256, 256, 16
        $region24: #{tpu_custom_call.1} parent=11 // pred_fallthru
          _
        // Predicated region
        $region25: #{tpu_custom_call.1} parent=11 // pred_check
          %p221 = pneg %p143
        $region26: #{tpu_custom_call.1} parent=11 // pred_check_branch
          %223 = sbr.rel (%p221) target = $region28
        $region27: #{tpu_custom_call.1} parent=11 // pred_region
          %s225 = ssub.s32 64, 64
          %226 = vsyncadd [#allocation9], %s225
          %s228 = sshll.u32 [#allocation10], 4
          %s229 = int_to_ptr.vmem [resolvable:$true] %s228
          %231 = dma.hbm_to_vmem [thread:$0]  %s4, 64, %s229, [#allocation9]
        $region28: #{tpu_custom_call.1} parent=11 // pred_fallthru
          _
      $region12: #{tpu_custom_call.1} parent=5 // pred_fallthru
        _
      %p232 = scmp.lt.s32.totalorder %s19, 4
      // Predicated region
      $region29: #{tpu_custom_call.1} parent=5 // pred_check
        %p233 = pneg %p232
      $region30: #{tpu_custom_call.1} parent=5 // pred_check_branch
        %235 = sbr.rel (%p233) target = $region32
      $region31: #{tpu_custom_call.1} parent=5 // pred_region
        // Predicated region
        $region33: #{tpu_custom_call.1} parent=31 // pred_check
          %p236 = pneg %p53
        $region34: #{tpu_custom_call.1} parent=31 // pred_check_branch
          %238 = sbr.rel (%p236) target = $region36
        $region35: #{tpu_custom_call.1} parent=31 // pred_region
          %s239 = sand.u32 %s43, 1
          %s240 = scalar_lea.sflag [#allocation3], %s239
          %s241 = sand.u32 %s43, 1
          %s242 = smul.addr %s241, 1024
          %s243 = scalar_lea.vmem [#allocation2], %s242
          %s244 = smul.u32 32, %s27
          %s246 = ssub.s32 16384, 16384
          %247 = vsyncadd %s240, %s246
          %s248 = smul.addr %s244, 4
          %s249 = smul.addr %s26, 256
          %s250 = sadd.s32 %s248, %s249
          %s251 = smul.addr %s250, 128
          %s252 = scalar_lea.hbm %s0, %s251
          %s253 = sshll.u32 %s243, 4
          %s254 = int_to_ptr.vmem [resolvable:$true] %s253
          %259 = dma.hbm_to_vmem [thread:$0]  %s252, 16384, %s254, %s240, 512, 512, 32
        $region36: #{tpu_custom_call.1} parent=31 // pred_fallthru
          _
      $region32: #{tpu_custom_call.1} parent=5 // pred_fallthru
        _
      %p260 = scmp.le.s32.totalorder 1, %s19
      %p261 = scmp.lt.s32.totalorder %s19, 5
      %p262 = pnand %p260, %p261
      %p263 = pneg %p262
      // Predicated region
      $region37: #{tpu_custom_call.1} parent=5 // pred_check
        _
      $region38: #{tpu_custom_call.1} parent=5 // pred_check_branch
        %265 = sbr.rel (%p262) target = $region40
      $region39: #{tpu_custom_call.1} parent=5 // pred_region
        %s266 = ssub.s32 %s19, 1
        %s267 = sand.u32 %s46, 1
        %s268 = scalar_lea.sflag [#allocation3], %s267
        %s269 = sand.u32 %s46, 1
        %s270 = smul.addr %s269, 1024
        %s271 = scalar_lea.vmem [#allocation2], %s270
        // Predicated region
        $region41: #{tpu_custom_call.1} parent=39 // pred_check
          %p272 = pneg %p59
        $region42: #{tpu_custom_call.1} parent=39 // pred_check_branch
          %274 = sbr.rel (%p272) target = $region44
        $region43: #{tpu_custom_call.1} parent=39 // pred_region
          %275 = dma.done %s268, 16384
        $region44: #{tpu_custom_call.1} parent=39 // pred_fallthru
          _
        // Predicated region
        $region45: #{tpu_custom_call.1} parent=39 // pred_check
          %p276 = pneg %p80
        $region46: #{tpu_custom_call.1} parent=39 // pred_check_branch
          %278 = sbr.rel (%p276) target = $region48
        $region47: #{tpu_custom_call.1} parent=39 // pred_region
          %279 = dma.done [#allocation6], 64
        $region48: #{tpu_custom_call.1} parent=39 // pred_fallthru
          _
        // Predicated region
        $region49: #{tpu_custom_call.1} parent=39 // pred_check
          %p280 = pneg %p101
        $region50: #{tpu_custom_call.1} parent=39 // pred_check_branch
          %282 = sbr.rel (%p280) target = $region52
        $region51: #{tpu_custom_call.1} parent=39 // pred_region
          %283 = dma.done [#allocation6], 64
        $region52: #{tpu_custom_call.1} parent=39 // pred_fallthru
          _
        // Predicated region
        $region53: #{tpu_custom_call.1} parent=39 // pred_check
          %p284 = pneg %p122
        $region54: #{tpu_custom_call.1} parent=39 // pred_check_branch
          %286 = sbr.rel (%p284) target = $region56
        $region55: #{tpu_custom_call.1} parent=39 // pred_region
          %287 = dma.done [#allocation9], 16384
        $region56: #{tpu_custom_call.1} parent=39 // pred_fallthru
          _
        // Predicated region
        $region57: #{tpu_custom_call.1} parent=39 // pred_check
          %p288 = pneg %p143
        $region58: #{tpu_custom_call.1} parent=39 // pred_check_branch
          %290 = sbr.rel (%p288) target = $region60
        $region59: #{tpu_custom_call.1} parent=39 // pred_region
          %291 = dma.done [#allocation9], 64
        $region60: #{tpu_custom_call.1} parent=39 // pred_fallthru
          _
        %s292 = sand.u32 %s46, 1
        %s293 = scalar_lea.sflag [#allocation3], %s292
        %s294 = sand.u32 %s46, 1
        %s295 = smul.addr %s294, 1024
        %s296 = scalar_lea.vmem [#allocation2], %s295
        %p297 = pneg %p59
        %p298 = pneg %p56
        %p299 = pneg %p80
        %p300 = pneg %p77
        %p301 = pneg %p101
        %p302 = pneg %p98
        %p303 = pneg %p122
        %p304 = pneg %p119
        %p305 = pneg %p143
        %p306 = pneg %p140
        %p307 = pneg %p171
        %p308 = pneg %p168
        %s309 = sand.u32 %s158, 1
        %s310 = scalar_lea.sflag [#allocation4], %s309
        %s311 = sand.u32 %s158, 1
        %s312 = smul.addr %s311, 512
        %s313 = scalar_lea.vmem [#allocation11], %s312
        %s314 = smul.u32 32, %s29
        %s315 = smul.u32 32, %s29
        %v316 = vld [vmem:[%s271] sm:$0xff]
        %v317 = vld [vmem:[%s271 + $0x8] sm:$0xff]
        %v318 = vld [vmem:[%s271 + $0x10] sm:$0xff]
        %v319 = vld [vmem:[%s271 + $0x18] sm:$0xff]
        %v320 = vld [vmem:[%s271 + $0x20] sm:$0xff]
        %v321 = vld [vmem:[%s271 + $0x28] sm:$0xff]
        %v322 = vld [vmem:[%s271 + $0x30] sm:$0xff]
        %v323 = vld [vmem:[%s271 + $0x38] sm:$0xff]
        %v324 = vld [vmem:[%s271 + $0x40] sm:$0xff]
        %v325 = vld [vmem:[%s271 + $0x48] sm:$0xff]
        %v326 = vld [vmem:[%s271 + $0x50] sm:$0xff]
        %v327 = vld [vmem:[%s271 + $0x58] sm:$0xff]
        %v328 = vld [vmem:[%s271 + $0x60] sm:$0xff]
        %v329 = vld [vmem:[%s271 + $0x68] sm:$0xff]
        %v330 = vld [vmem:[%s271 + $0x70] sm:$0xff]
        %v331 = vld [vmem:[%s271 + $0x78] sm:$0xff]
        %v332 = vld [vmem:[%s271 + $0x80] sm:$0xff]
        %v333 = vld [vmem:[%s271 + $0x88] sm:$0xff]
        %v334 = vld [vmem:[%s271 + $0x90] sm:$0xff]
        %v335 = vld [vmem:[%s271 + $0x98] sm:$0xff]
        %v336 = vld [vmem:[%s271 + $0xa0] sm:$0xff]
        %v337 = vld [vmem:[%s271 + $0xa8] sm:$0xff]
        %v338 = vld [vmem:[%s271 + $0xb0] sm:$0xff]
        %v339 = vld [vmem:[%s271 + $0xb8] sm:$0xff]
        %v340 = vld [vmem:[%s271 + $0xc0] sm:$0xff]
        %v341 = vld [vmem:[%s271 + $0xc8] sm:$0xff]
        %v342 = vld [vmem:[%s271 + $0xd0] sm:$0xff]
        %v343 = vld [vmem:[%s271 + $0xd8] sm:$0xff]
        %v344 = vld [vmem:[%s271 + $0xe0] sm:$0xff]
        %v345 = vld [vmem:[%s271 + $0xe8] sm:$0xff]
        %v346 = vld [vmem:[%s271 + $0xf0] sm:$0xff]
        %v347 = vld [vmem:[%s271 + $0xf8] sm:$0xff]
        %v348 = vld [vmem:[%s271 + $0x100] sm:$0xff]
        %v349 = vld [vmem:[%s271 + $0x108] sm:$0xff]
        %v350 = vld [vmem:[%s271 + $0x110] sm:$0xff]
        %v351 = vld [vmem:[%s271 + $0x118] sm:$0xff]
        %v352 = vld [vmem:[%s271 + $0x120] sm:$0xff]
        %v353 = vld [vmem:[%s271 + $0x128] sm:$0xff]
        %v354 = vld [vmem:[%s271 + $0x130] sm:$0xff]
        %v355 = vld [vmem:[%s271 + $0x138] sm:$0xff]
        %v356 = vld [vmem:[%s271 + $0x140] sm:$0xff]
        %v357 = vld [vmem:[%s271 + $0x148] sm:$0xff]
        %v358 = vld [vmem:[%s271 + $0x150] sm:$0xff]
        %v359 = vld [vmem:[%s271 + $0x158] sm:$0xff]
        %v360 = vld [vmem:[%s271 + $0x160] sm:$0xff]
        %v361 = vld [vmem:[%s271 + $0x168] sm:$0xff]
        %v362 = vld [vmem:[%s271 + $0x170] sm:$0xff]
        %v363 = vld [vmem:[%s271 + $0x178] sm:$0xff]
        %v364 = vld [vmem:[%s271 + $0x180] sm:$0xff]
        %v365 = vld [vmem:[%s271 + $0x188] sm:$0xff]
        %v366 = vld [vmem:[%s271 + $0x190] sm:$0xff]
        %v367 = vld [vmem:[%s271 + $0x198] sm:$0xff]
        %v368 = vld [vmem:[%s271 + $0x1a0] sm:$0xff]
        %v369 = vld [vmem:[%s271 + $0x1a8] sm:$0xff]
        %v370 = vld [vmem:[%s271 + $0x1b0] sm:$0xff]
        %v371 = vld [vmem:[%s271 + $0x1b8] sm:$0xff]
        %v372 = vld [vmem:[%s271 + $0x1c0] sm:$0xff]
        %v373 = vld [vmem:[%s271 + $0x1c8] sm:$0xff]
        %v374 = vld [vmem:[%s271 + $0x1d0] sm:$0xff]
        %v375 = vld [vmem:[%s271 + $0x1d8] sm:$0xff]
        %v376 = vld [vmem:[%s271 + $0x1e0] sm:$0xff]
        %v377 = vld [vmem:[%s271 + $0x1e8] sm:$0xff]
        %v378 = vld [vmem:[%s271 + $0x1f0] sm:$0xff]
        %v379 = vld [vmem:[%s271 + $0x1f8] sm:$0xff]
        %v380 = vld [vmem:[%s271 + $0x200] sm:$0xff]
        %v381 = vld [vmem:[%s271 + $0x208] sm:$0xff]
        %v382 = vld [vmem:[%s271 + $0x210] sm:$0xff]
        %v383 = vld [vmem:[%s271 + $0x218] sm:$0xff]
        %v384 = vld [vmem:[%s271 + $0x220] sm:$0xff]
        %v385 = vld [vmem:[%s271 + $0x228] sm:$0xff]
        %v386 = vld [vmem:[%s271 + $0x230] sm:$0xff]
        %v387 = vld [vmem:[%s271 + $0x238] sm:$0xff]
        %v388 = vld [vmem:[%s271 + $0x240] sm:$0xff]
        %v389 = vld [vmem:[%s271 + $0x248] sm:$0xff]
        %v390 = vld [vmem:[%s271 + $0x250] sm:$0xff]
        %v391 = vld [vmem:[%s271 + $0x258] sm:$0xff]
        %v392 = vld [vmem:[%s271 + $0x260] sm:$0xff]
        %v393 = vld [vmem:[%s271 + $0x268] sm:$0xff]
        %v394 = vld [vmem:[%s271 + $0x270] sm:$0xff]
        %v395 = vld [vmem:[%s271 + $0x278] sm:$0xff]
        %v396 = vld [vmem:[%s271 + $0x280] sm:$0xff]
        %v397 = vld [vmem:[%s271 + $0x288] sm:$0xff]
        %v398 = vld [vmem:[%s271 + $0x290] sm:$0xff]
        %v399 = vld [vmem:[%s271 + $0x298] sm:$0xff]
        %v400 = vld [vmem:[%s271 + $0x2a0] sm:$0xff]
        %v401 = vld [vmem:[%s271 + $0x2a8] sm:$0xff]
        %v402 = vld [vmem:[%s271 + $0x2b0] sm:$0xff]
        %v403 = vld [vmem:[%s271 + $0x2b8] sm:$0xff]
        %v404 = vld [vmem:[%s271 + $0x2c0] sm:$0xff]
        %v405 = vld [vmem:[%s271 + $0x2c8] sm:$0xff]
        %v406 = vld [vmem:[%s271 + $0x2d0] sm:$0xff]
        %v407 = vld [vmem:[%s271 + $0x2d8] sm:$0xff]
        %v408 = vld [vmem:[%s271 + $0x2e0] sm:$0xff]
        %v409 = vld [vmem:[%s271 + $0x2e8] sm:$0xff]
        %v410 = vld [vmem:[%s271 + $0x2f0] sm:$0xff]
        %v411 = vld [vmem:[%s271 + $0x2f8] sm:$0xff]
        %v412 = vld [vmem:[%s271 + $0x300] sm:$0xff]
        %v413 = vld [vmem:[%s271 + $0x308] sm:$0xff]
        %v414 = vld [vmem:[%s271 + $0x310] sm:$0xff]
        %v415 = vld [vmem:[%s271 + $0x318] sm:$0xff]
        %v416 = vld [vmem:[%s271 + $0x320] sm:$0xff]
        %v417 = vld [vmem:[%s271 + $0x328] sm:$0xff]
        %v418 = vld [vmem:[%s271 + $0x330] sm:$0xff]
        %v419 = vld [vmem:[%s271 + $0x338] sm:$0xff]
        %v420 = vld [vmem:[%s271 + $0x340] sm:$0xff]
        %v421 = vld [vmem:[%s271 + $0x348] sm:$0xff]
        %v422 = vld [vmem:[%s271 + $0x350] sm:$0xff]
        %v423 = vld [vmem:[%s271 + $0x358] sm:$0xff]
        %v424 = vld [vmem:[%s271 + $0x360] sm:$0xff]
        %v425 = vld [vmem:[%s271 + $0x368] sm:$0xff]
        %v426 = vld [vmem:[%s271 + $0x370] sm:$0xff]
        %v427 = vld [vmem:[%s271 + $0x378] sm:$0xff]
        %v428 = vld [vmem:[%s271 + $0x380] sm:$0xff]
        %v429 = vld [vmem:[%s271 + $0x388] sm:$0xff]
        %v430 = vld [vmem:[%s271 + $0x390] sm:$0xff]
        %v431 = vld [vmem:[%s271 + $0x398] sm:$0xff]
        %v432 = vld [vmem:[%s271 + $0x3a0] sm:$0xff]
        %v433 = vld [vmem:[%s271 + $0x3a8] sm:$0xff]
        %v434 = vld [vmem:[%s271 + $0x3b0] sm:$0xff]
        %v435 = vld [vmem:[%s271 + $0x3b8] sm:$0xff]
        %v436 = vld [vmem:[%s271 + $0x3c0] sm:$0xff]
        %v437 = vld [vmem:[%s271 + $0x3c8] sm:$0xff]
        %v438 = vld [vmem:[%s271 + $0x3d0] sm:$0xff]
        %v439 = vld [vmem:[%s271 + $0x3d8] sm:$0xff]
        %v440 = vld [vmem:[%s271 + $0x3e0] sm:$0xff]
        %v441 = vld [vmem:[%s271 + $0x3e8] sm:$0xff]
        %v442 = vld [vmem:[%s271 + $0x3f0] sm:$0xff]
        %v443 = vld [vmem:[%s271 + $0x3f8] sm:$0xff]
        %v444 = vadd.f32 %v316, %v317
        %v445 = vadd.f32 %v444, %v318
        %v446 = vadd.f32 %v445, %v319
        %447 = vadd.xlane.f32.xlu0 %v446
        %v448 = vpop.xlane.xlu0 %447
        %v449 = vadd.f32 %v320, %v321
        %v450 = vadd.f32 %v449, %v322
        %v451 = vadd.f32 %v450, %v323
        %452 = vadd.xlane.f32.xlu0 %v451
        %v453 = vpop.xlane.xlu0 %452
        %v454 = vadd.f32 %v324, %v325
        %v455 = vadd.f32 %v454, %v326
        %v456 = vadd.f32 %v455, %v327
        %457 = vadd.xlane.f32.xlu0 %v456
        %v458 = vpop.xlane.xlu0 %457
        %v459 = vadd.f32 %v328, %v329
        %v460 = vadd.f32 %v459, %v330
        %v461 = vadd.f32 %v460, %v331
        %462 = vadd.xlane.f32.xlu0 %v461
        %v463 = vpop.xlane.xlu0 %462
        %v464 = vadd.f32 %v332, %v333
        %v465 = vadd.f32 %v464, %v334
        %v466 = vadd.f32 %v465, %v335
        %467 = vadd.xlane.f32.xlu0 %v466
        %v468 = vpop.xlane.xlu0 %467
        %v469 = vadd.f32 %v336, %v337
        %v470 = vadd.f32 %v469, %v338
        %v471 = vadd.f32 %v470, %v339
        %472 = vadd.xlane.f32.xlu0 %v471
        %v473 = vpop.xlane.xlu0 %472
        %v474 = vadd.f32 %v340, %v341
        %v475 = vadd.f32 %v474, %v342
        %v476 = vadd.f32 %v475, %v343
        %477 = vadd.xlane.f32.xlu0 %v476
        %v478 = vpop.xlane.xlu0 %477
        %v479 = vadd.f32 %v344, %v345
        %v480 = vadd.f32 %v479, %v346
        %v481 = vadd.f32 %v480, %v347
        %482 = vadd.xlane.f32.xlu0 %v481
        %v483 = vpop.xlane.xlu0 %482
        %v484 = vadd.f32 %v348, %v349
        %v485 = vadd.f32 %v484, %v350
        %v486 = vadd.f32 %v485, %v351
        %487 = vadd.xlane.f32.xlu0 %v486
        %v488 = vpop.xlane.xlu0 %487
        %v489 = vadd.f32 %v352, %v353
        %v490 = vadd.f32 %v489, %v354
        %v491 = vadd.f32 %v490, %v355
        %492 = vadd.xlane.f32.xlu0 %v491
        %v493 = vpop.xlane.xlu0 %492
        %v494 = vadd.f32 %v356, %v357
        %v495 = vadd.f32 %v494, %v358
        %v496 = vadd.f32 %v495, %v359
        %497 = vadd.xlane.f32.xlu0 %v496
        %v498 = vpop.xlane.xlu0 %497
        %v499 = vadd.f32 %v360, %v361
        %v500 = vadd.f32 %v499, %v362
        %v501 = vadd.f32 %v500, %v363
        %502 = vadd.xlane.f32.xlu0 %v501
        %v503 = vpop.xlane.xlu0 %502
        %v504 = vadd.f32 %v364, %v365
        %v505 = vadd.f32 %v504, %v366
        %v506 = vadd.f32 %v505, %v367
        %507 = vadd.xlane.f32.xlu0 %v506
        %v508 = vpop.xlane.xlu0 %507
        %v509 = vadd.f32 %v368, %v369
        %v510 = vadd.f32 %v509, %v370
        %v511 = vadd.f32 %v510, %v371
        %512 = vadd.xlane.f32.xlu0 %v511
        %v513 = vpop.xlane.xlu0 %512
        %v514 = vadd.f32 %v372, %v373
        %v515 = vadd.f32 %v514, %v374
        %v516 = vadd.f32 %v515, %v375
        %517 = vadd.xlane.f32.xlu0 %v516
        %v518 = vpop.xlane.xlu0 %517
        %v519 = vadd.f32 %v376, %v377
        %v520 = vadd.f32 %v519, %v378
        %v521 = vadd.f32 %v520, %v379
        %522 = vadd.xlane.f32.xlu0 %v521
        %v523 = vpop.xlane.xlu0 %522
        %v524 = vadd.f32 %v380, %v381
        %v525 = vadd.f32 %v524, %v382
        %v526 = vadd.f32 %v525, %v383
        %527 = vadd.xlane.f32.xlu0 %v526
        %v528 = vpop.xlane.xlu0 %527
        %v529 = vadd.f32 %v384, %v385
        %v530 = vadd.f32 %v529, %v386
        %v531 = vadd.f32 %v530, %v387
        %532 = vadd.xlane.f32.xlu0 %v531
        %v533 = vpop.xlane.xlu0 %532
        %v534 = vadd.f32 %v388, %v389
        %v535 = vadd.f32 %v534, %v390
        %v536 = vadd.f32 %v535, %v391
        %537 = vadd.xlane.f32.xlu0 %v536
        %v538 = vpop.xlane.xlu0 %537
        %v539 = vadd.f32 %v392, %v393
        %v540 = vadd.f32 %v539, %v394
        %v541 = vadd.f32 %v540, %v395
        %542 = vadd.xlane.f32.xlu0 %v541
        %v543 = vpop.xlane.xlu0 %542
        %v544 = vadd.f32 %v396, %v397
        %v545 = vadd.f32 %v544, %v398
        %v546 = vadd.f32 %v545, %v399
        %547 = vadd.xlane.f32.xlu0 %v546
        %v548 = vpop.xlane.xlu0 %547
        %v549 = vadd.f32 %v400, %v401
        %v550 = vadd.f32 %v549, %v402
        %v551 = vadd.f32 %v550, %v403
        %552 = vadd.xlane.f32.xlu0 %v551
        %v553 = vpop.xlane.xlu0 %552
        %v554 = vadd.f32 %v404, %v405
        %v555 = vadd.f32 %v554, %v406
        %v556 = vadd.f32 %v555, %v407
        %557 = vadd.xlane.f32.xlu0 %v556
        %v558 = vpop.xlane.xlu0 %557
        %v559 = vadd.f32 %v408, %v409
        %v560 = vadd.f32 %v559, %v410
        %v561 = vadd.f32 %v560, %v411
        %562 = vadd.xlane.f32.xlu0 %v561
        %v563 = vpop.xlane.xlu0 %562
        %v564 = vadd.f32 %v412, %v413
        %v565 = vadd.f32 %v564, %v414
        %v566 = vadd.f32 %v565, %v415
        %567 = vadd.xlane.f32.xlu0 %v566
        %v568 = vpop.xlane.xlu0 %567
        %v569 = vadd.f32 %v416, %v417
        %v570 = vadd.f32 %v569, %v418
        %v571 = vadd.f32 %v570, %v419
        %572 = vadd.xlane.f32.xlu0 %v571
        %v573 = vpop.xlane.xlu0 %572
        %v574 = vadd.f32 %v420, %v421
        %v575 = vadd.f32 %v574, %v422
        %v576 = vadd.f32 %v575, %v423
        %577 = vadd.xlane.f32.xlu0 %v576
        %v578 = vpop.xlane.xlu0 %577
        %v579 = vadd.f32 %v424, %v425
        %v580 = vadd.f32 %v579, %v426
        %v581 = vadd.f32 %v580, %v427
        %582 = vadd.xlane.f32.xlu0 %v581
        %v583 = vpop.xlane.xlu0 %582
        %v584 = vadd.f32 %v428, %v429
        %v585 = vadd.f32 %v584, %v430
        %v586 = vadd.f32 %v585, %v431
        %587 = vadd.xlane.f32.xlu0 %v586
        %v588 = vpop.xlane.xlu0 %587
        %v589 = vadd.f32 %v432, %v433
        %v590 = vadd.f32 %v589, %v434
        %v591 = vadd.f32 %v590, %v435
        %592 = vadd.xlane.f32.xlu0 %v591
        %v593 = vpop.xlane.xlu0 %592
        %v594 = vadd.f32 %v436, %v437
        %v595 = vadd.f32 %v594, %v438
        %v596 = vadd.f32 %v595, %v439
        %597 = vadd.xlane.f32.xlu0 %v596
        %v598 = vpop.xlane.xlu0 %597
        %v599 = vadd.f32 %v440, %v441
        %v600 = vadd.f32 %v599, %v442
        %v601 = vadd.f32 %v600, %v443
        %602 = vadd.xlane.f32.xlu0 %v601
        %v603 = vpop.xlane.xlu0 %602
        %v604 = vrcp.pop 512.0
        %v605 = vmul.f32 %v448, %v604
        %v606 = vmul.f32 %v453, %v604
        %v607 = vmul.f32 %v458, %v604
        %v608 = vmul.f32 %v463, %v604
        %v609 = vmul.f32 %v468, %v604
        %v610 = vmul.f32 %v473, %v604
        %v611 = vmul.f32 %v478, %v604
        %v612 = vmul.f32 %v483, %v604
        %v613 = vmul.f32 %v488, %v604
        %v614 = vmul.f32 %v493, %v604
        %v615 = vmul.f32 %v498, %v604
        %v616 = vmul.f32 %v503, %v604
        %v617 = vmul.f32 %v508, %v604
        %v618 = vmul.f32 %v513, %v604
        %v619 = vmul.f32 %v518, %v604
        %v620 = vmul.f32 %v523, %v604
        %v621 = vmul.f32 %v528, %v604
        %v622 = vmul.f32 %v533, %v604
        %v623 = vmul.f32 %v538, %v604
        %v624 = vmul.f32 %v543, %v604
        %v625 = vmul.f32 %v548, %v604
        %v626 = vmul.f32 %v553, %v604
        %v627 = vmul.f32 %v558, %v604
        %v628 = vmul.f32 %v563, %v604
        %v629 = vmul.f32 %v568, %v604
        %v630 = vmul.f32 %v573, %v604
        %v631 = vmul.f32 %v578, %v604
        %v632 = vmul.f32 %v583, %v604
        %v633 = vmul.f32 %v588, %v604
        %v634 = vmul.f32 %v593, %v604
        %v635 = vmul.f32 %v598, %v604
        %v636 = vmul.f32 %v603, %v604
        %v637 = vsub.f32 %v316, %v605
        %v638 = vsub.f32 %v317, %v605
        %v639 = vsub.f32 %v318, %v605
        %v640 = vsub.f32 %v319, %v605
        %v641 = vsub.f32 %v320, %v606
        %v642 = vsub.f32 %v321, %v606
        %v643 = vsub.f32 %v322, %v606
        %v644 = vsub.f32 %v323, %v606
        %v645 = vsub.f32 %v324, %v607
        %v646 = vsub.f32 %v325, %v607
        %v647 = vsub.f32 %v326, %v607
        %v648 = vsub.f32 %v327, %v607
        %v649 = vsub.f32 %v328, %v608
        %v650 = vsub.f32 %v329, %v608
        %v651 = vsub.f32 %v330, %v608
        %v652 = vsub.f32 %v331, %v608
        %v653 = vsub.f32 %v332, %v609
        %v654 = vsub.f32 %v333, %v609
        %v655 = vsub.f32 %v334, %v609
        %v656 = vsub.f32 %v335, %v609
        %v657 = vsub.f32 %v336, %v610
        %v658 = vsub.f32 %v337, %v610
        %v659 = vsub.f32 %v338, %v610
        %v660 = vsub.f32 %v339, %v610
        %v661 = vsub.f32 %v340, %v611
        %v662 = vsub.f32 %v341, %v611
        %v663 = vsub.f32 %v342, %v611
        %v664 = vsub.f32 %v343, %v611
        %v665 = vsub.f32 %v344, %v612
        %v666 = vsub.f32 %v345, %v612
        %v667 = vsub.f32 %v346, %v612
        %v668 = vsub.f32 %v347, %v612
        %v669 = vsub.f32 %v348, %v613
        %v670 = vsub.f32 %v349, %v613
        %v671 = vsub.f32 %v350, %v613
        %v672 = vsub.f32 %v351, %v613
        %v673 = vsub.f32 %v352, %v614
        %v674 = vsub.f32 %v353, %v614
        %v675 = vsub.f32 %v354, %v614
        %v676 = vsub.f32 %v355, %v614
        %v677 = vsub.f32 %v356, %v615
        %v678 = vsub.f32 %v357, %v615
        %v679 = vsub.f32 %v358, %v615
        %v680 = vsub.f32 %v359, %v615
        %v681 = vsub.f32 %v360, %v616
        %v682 = vsub.f32 %v361, %v616
        %v683 = vsub.f32 %v362, %v616
        %v684 = vsub.f32 %v363, %v616
        %v685 = vsub.f32 %v364, %v617
        %v686 = vsub.f32 %v365, %v617
        %v687 = vsub.f32 %v366, %v617
        %v688 = vsub.f32 %v367, %v617
        %v689 = vsub.f32 %v368, %v618
        %v690 = vsub.f32 %v369, %v618
        %v691 = vsub.f32 %v370, %v618
        %v692 = vsub.f32 %v371, %v618
        %v693 = vsub.f32 %v372, %v619
        %v694 = vsub.f32 %v373, %v619
        %v695 = vsub.f32 %v374, %v619
        %v696 = vsub.f32 %v375, %v619
        %v697 = vsub.f32 %v376, %v620
        %v698 = vsub.f32 %v377, %v620
        %v699 = vsub.f32 %v378, %v620
        %v700 = vsub.f32 %v379, %v620
        %v701 = vsub.f32 %v380, %v621
        %v702 = vsub.f32 %v381, %v621
        %v703 = vsub.f32 %v382, %v621
        %v704 = vsub.f32 %v383, %v621
        %v705 = vsub.f32 %v384, %v622
        %v706 = vsub.f32 %v385, %v622
        %v707 = vsub.f32 %v386, %v622
        %v708 = vsub.f32 %v387, %v622
        %v709 = vsub.f32 %v388, %v623
        %v710 = vsub.f32 %v389, %v623
        %v711 = vsub.f32 %v390, %v623
        %v712 = vsub.f32 %v391, %v623
        %v713 = vsub.f32 %v392, %v624
        %v714 = vsub.f32 %v393, %v624
        %v715 = vsub.f32 %v394, %v624
        %v716 = vsub.f32 %v395, %v624
        %v717 = vsub.f32 %v396, %v625
        %v718 = vsub.f32 %v397, %v625
        %v719 = vsub.f32 %v398, %v625
        %v720 = vsub.f32 %v399, %v625
        %v721 = vsub.f32 %v400, %v626
        %v722 = vsub.f32 %v401, %v626
        %v723 = vsub.f32 %v402, %v626
        %v724 = vsub.f32 %v403, %v626
        %v725 = vsub.f32 %v404, %v627
        %v726 = vsub.f32 %v405, %v627
        %v727 = vsub.f32 %v406, %v627
        %v728 = vsub.f32 %v407, %v627
        %v729 = vsub.f32 %v408, %v628
        %v730 = vsub.f32 %v409, %v628
        %v731 = vsub.f32 %v410, %v628
        %v732 = vsub.f32 %v411, %v628
        %v733 = vsub.f32 %v412, %v629
        %v734 = vsub.f32 %v413, %v629
        %v735 = vsub.f32 %v414, %v629
        %v736 = vsub.f32 %v415, %v629
        %v737 = vsub.f32 %v416, %v630
        %v738 = vsub.f32 %v417, %v630
        %v739 = vsub.f32 %v418, %v630
        %v740 = vsub.f32 %v419, %v630
        %v741 = vsub.f32 %v420, %v631
        %v742 = vsub.f32 %v421, %v631
        %v743 = vsub.f32 %v422, %v631
        %v744 = vsub.f32 %v423, %v631
        %v745 = vsub.f32 %v424, %v632
        %v746 = vsub.f32 %v425, %v632
        %v747 = vsub.f32 %v426, %v632
        %v748 = vsub.f32 %v427, %v632
        %v749 = vsub.f32 %v428, %v633
        %v750 = vsub.f32 %v429, %v633
        %v751 = vsub.f32 %v430, %v633
        %v752 = vsub.f32 %v431, %v633
        %v753 = vsub.f32 %v432, %v634
        %v754 = vsub.f32 %v433, %v634
        %v755 = vsub.f32 %v434, %v634
        %v756 = vsub.f32 %v435, %v634
        %v757 = vsub.f32 %v436, %v635
        %v758 = vsub.f32 %v437, %v635
        %v759 = vsub.f32 %v438, %v635
        %v760 = vsub.f32 %v439, %v635
        %v761 = vsub.f32 %v440, %v636
        %v762 = vsub.f32 %v441, %v636
        %v763 = vsub.f32 %v442, %v636
        %v764 = vsub.f32 %v443, %v636
        %v765 = vmul.f32 %v637, %v637
        %v766 = vmul.f32 %v638, %v638
        %v767 = vmul.f32 %v639, %v639
        %v768 = vmul.f32 %v640, %v640
        %v769 = vmul.f32 %v641, %v641
        %v770 = vmul.f32 %v642, %v642
        %v771 = vmul.f32 %v643, %v643
        %v772 = vmul.f32 %v644, %v644
        %v773 = vmul.f32 %v645, %v645
        %v774 = vmul.f32 %v646, %v646
        %v775 = vmul.f32 %v647, %v647
        %v776 = vmul.f32 %v648, %v648
        %v777 = vmul.f32 %v649, %v649
        %v778 = vmul.f32 %v650, %v650
        %v779 = vmul.f32 %v651, %v651
        %v780 = vmul.f32 %v652, %v652
        %v781 = vmul.f32 %v653, %v653
        %v782 = vmul.f32 %v654, %v654
        %v783 = vmul.f32 %v655, %v655
        %v784 = vmul.f32 %v656, %v656
        %v785 = vmul.f32 %v657, %v657
        %v786 = vmul.f32 %v658, %v658
        %v787 = vmul.f32 %v659, %v659
        %v788 = vmul.f32 %v660, %v660
        %v789 = vmul.f32 %v661, %v661
        %v790 = vmul.f32 %v662, %v662
        %v791 = vmul.f32 %v663, %v663
        %v792 = vmul.f32 %v664, %v664
        %v793 = vmul.f32 %v665, %v665
        %v794 = vmul.f32 %v666, %v666
        %v795 = vmul.f32 %v667, %v667
        %v796 = vmul.f32 %v668, %v668
        %v797 = vmul.f32 %v669, %v669
        %v798 = vmul.f32 %v670, %v670
        %v799 = vmul.f32 %v671, %v671
        %v800 = vmul.f32 %v672, %v672
        %v801 = vmul.f32 %v673, %v673
        %v802 = vmul.f32 %v674, %v674
        %v803 = vmul.f32 %v675, %v675
        %v804 = vmul.f32 %v676, %v676
        %v805 = vmul.f32 %v677, %v677
        %v806 = vmul.f32 %v678, %v678
        %v807 = vmul.f32 %v679, %v679
        %v808 = vmul.f32 %v680, %v680
        %v809 = vmul.f32 %v681, %v681
        %v810 = vmul.f32 %v682, %v682
        %v811 = vmul.f32 %v683, %v683
        %v812 = vmul.f32 %v684, %v684
        %v813 = vmul.f32 %v685, %v685
        %v814 = vmul.f32 %v686, %v686
        %v815 = vmul.f32 %v687, %v687
        %v816 = vmul.f32 %v688, %v688
        %v817 = vmul.f32 %v689, %v689
        %v818 = vmul.f32 %v690, %v690
        %v819 = vmul.f32 %v691, %v691
        %v820 = vmul.f32 %v692, %v692
        %v821 = vmul.f32 %v693, %v693
        %v822 = vmul.f32 %v694, %v694
        %v823 = vmul.f32 %v695, %v695
        %v824 = vmul.f32 %v696, %v696
        %v825 = vmul.f32 %v697, %v697
        %v826 = vmul.f32 %v698, %v698
        %v827 = vmul.f32 %v699, %v699
        %v828 = vmul.f32 %v700, %v700
        %v829 = vmul.f32 %v701, %v701
        %v830 = vmul.f32 %v702, %v702
        %v831 = vmul.f32 %v703, %v703
        %v832 = vmul.f32 %v704, %v704
        %v833 = vmul.f32 %v705, %v705
        %v834 = vmul.f32 %v706, %v706
        %v835 = vmul.f32 %v707, %v707
        %v836 = vmul.f32 %v708, %v708
        %v837 = vmul.f32 %v709, %v709
        %v838 = vmul.f32 %v710, %v710
        %v839 = vmul.f32 %v711, %v711
        %v840 = vmul.f32 %v712, %v712
        %v841 = vmul.f32 %v713, %v713
        %v842 = vmul.f32 %v714, %v714
        %v843 = vmul.f32 %v715, %v715
        %v844 = vmul.f32 %v716, %v716
        %v845 = vmul.f32 %v717, %v717
        %v846 = vmul.f32 %v718, %v718
        %v847 = vmul.f32 %v719, %v719
        %v848 = vmul.f32 %v720, %v720
        %v849 = vmul.f32 %v721, %v721
        %v850 = vmul.f32 %v722, %v722
        %v851 = vmul.f32 %v723, %v723
        %v852 = vmul.f32 %v724, %v724
        %v853 = vmul.f32 %v725, %v725
        %v854 = vmul.f32 %v726, %v726
        %v855 = vmul.f32 %v727, %v727
        %v856 = vmul.f32 %v728, %v728
        %v857 = vmul.f32 %v729, %v729
        %v858 = vmul.f32 %v730, %v730
        %v859 = vmul.f32 %v731, %v731
        %v860 = vmul.f32 %v732, %v732
        %v861 = vmul.f32 %v733, %v733
        %v862 = vmul.f32 %v734, %v734
        %v863 = vmul.f32 %v735, %v735
        %v864 = vmul.f32 %v736, %v736
        %v865 = vmul.f32 %v737, %v737
        %v866 = vmul.f32 %v738, %v738
        %v867 = vmul.f32 %v739, %v739
        %v868 = vmul.f32 %v740, %v740
        %v869 = vmul.f32 %v741, %v741
        %v870 = vmul.f32 %v742, %v742
        %v871 = vmul.f32 %v743, %v743
        %v872 = vmul.f32 %v744, %v744
        %v873 = vmul.f32 %v745, %v745
        %v874 = vmul.f32 %v746, %v746
        %v875 = vmul.f32 %v747, %v747
        %v876 = vmul.f32 %v748, %v748
        %v877 = vmul.f32 %v749, %v749
        %v878 = vmul.f32 %v750, %v750
        %v879 = vmul.f32 %v751, %v751
        %v880 = vmul.f32 %v752, %v752
        %v881 = vmul.f32 %v753, %v753
        %v882 = vmul.f32 %v754, %v754
        %v883 = vmul.f32 %v755, %v755
        %v884 = vmul.f32 %v756, %v756
        %v885 = vmul.f32 %v757, %v757
        %v886 = vmul.f32 %v758, %v758
        %v887 = vmul.f32 %v759, %v759
        %v888 = vmul.f32 %v760, %v760
        %v889 = vmul.f32 %v761, %v761
        %v890 = vmul.f32 %v762, %v762
        %v891 = vmul.f32 %v763, %v763
        %v892 = vmul.f32 %v764, %v764
        %v893 = vadd.f32 %v765, %v766
        %v894 = vadd.f32 %v893, %v767
        %v895 = vadd.f32 %v894, %v768
        %896 = vadd.xlane.f32.xlu0 %v895
        %v897 = vpop.xlane.xlu0 %896
        %v898 = vadd.f32 %v769, %v770
        %v899 = vadd.f32 %v898, %v771
        %v900 = vadd.f32 %v899, %v772
        %901 = vadd.xlane.f32.xlu0 %v900
        %v902 = vpop.xlane.xlu0 %901
        %v903 = vadd.f32 %v773, %v774
        %v904 = vadd.f32 %v903, %v775
        %v905 = vadd.f32 %v904, %v776
        %906 = vadd.xlane.f32.xlu0 %v905
        %v907 = vpop.xlane.xlu0 %906
        %v908 = vadd.f32 %v777, %v778
        %v909 = vadd.f32 %v908, %v779
        %v910 = vadd.f32 %v909, %v780
        %911 = vadd.xlane.f32.xlu0 %v910
        %v912 = vpop.xlane.xlu0 %911
        %v913 = vadd.f32 %v781, %v782
        %v914 = vadd.f32 %v913, %v783
        %v915 = vadd.f32 %v914, %v784
        %916 = vadd.xlane.f32.xlu0 %v915
        %v917 = vpop.xlane.xlu0 %916
        %v918 = vadd.f32 %v785, %v786
        %v919 = vadd.f32 %v918, %v787
        %v920 = vadd.f32 %v919, %v788
        %921 = vadd.xlane.f32.xlu0 %v920
        %v922 = vpop.xlane.xlu0 %921
        %v923 = vadd.f32 %v789, %v790
        %v924 = vadd.f32 %v923, %v791
        %v925 = vadd.f32 %v924, %v792
        %926 = vadd.xlane.f32.xlu0 %v925
        %v927 = vpop.xlane.xlu0 %926
        %v928 = vadd.f32 %v793, %v794
        %v929 = vadd.f32 %v928, %v795
        %v930 = vadd.f32 %v929, %v796
        %931 = vadd.xlane.f32.xlu0 %v930
        %v932 = vpop.xlane.xlu0 %931
        %v933 = vadd.f32 %v797, %v798
        %v934 = vadd.f32 %v933, %v799
        %v935 = vadd.f32 %v934, %v800
        %936 = vadd.xlane.f32.xlu0 %v935
        %v937 = vpop.xlane.xlu0 %936
        %v938 = vadd.f32 %v801, %v802
        %v939 = vadd.f32 %v938, %v803
        %v940 = vadd.f32 %v939, %v804
        %941 = vadd.xlane.f32.xlu0 %v940
        %v942 = vpop.xlane.xlu0 %941
        %v943 = vadd.f32 %v805, %v806
        %v944 = vadd.f32 %v943, %v807
        %v945 = vadd.f32 %v944, %v808
        %946 = vadd.xlane.f32.xlu0 %v945
        %v947 = vpop.xlane.xlu0 %946
        %v948 = vadd.f32 %v809, %v810
        %v949 = vadd.f32 %v948, %v811
        %v950 = vadd.f32 %v949, %v812
        %951 = vadd.xlane.f32.xlu0 %v950
        %v952 = vpop.xlane.xlu0 %951
        %v953 = vadd.f32 %v813, %v814
        %v954 = vadd.f32 %v953, %v815
        %v955 = vadd.f32 %v954, %v816
        %956 = vadd.xlane.f32.xlu0 %v955
        %v957 = vpop.xlane.xlu0 %956
        %v958 = vadd.f32 %v817, %v818
        %v959 = vadd.f32 %v958, %v819
        %v960 = vadd.f32 %v959, %v820
        %961 = vadd.xlane.f32.xlu0 %v960
        %v962 = vpop.xlane.xlu0 %961
        %v963 = vadd.f32 %v821, %v822
        %v964 = vadd.f32 %v963, %v823
        %v965 = vadd.f32 %v964, %v824
        %966 = vadd.xlane.f32.xlu0 %v965
        %v967 = vpop.xlane.xlu0 %966
        %v968 = vadd.f32 %v825, %v826
        %v969 = vadd.f32 %v968, %v827
        %v970 = vadd.f32 %v969, %v828
        %971 = vadd.xlane.f32.xlu0 %v970
        %v972 = vpop.xlane.xlu0 %971
        %v973 = vadd.f32 %v829, %v830
        %v974 = vadd.f32 %v973, %v831
        %v975 = vadd.f32 %v974, %v832
        %976 = vadd.xlane.f32.xlu0 %v975
        %v977 = vpop.xlane.xlu0 %976
        %v978 = vadd.f32 %v833, %v834
        %v979 = vadd.f32 %v978, %v835
        %v980 = vadd.f32 %v979, %v836
        %981 = vadd.xlane.f32.xlu0 %v980
        %v982 = vpop.xlane.xlu0 %981
        %v983 = vadd.f32 %v837, %v838
        %v984 = vadd.f32 %v983, %v839
        %v985 = vadd.f32 %v984, %v840
        %986 = vadd.xlane.f32.xlu0 %v985
        %v987 = vpop.xlane.xlu0 %986
        %v988 = vadd.f32 %v841, %v842
        %v989 = vadd.f32 %v988, %v843
        %v990 = vadd.f32 %v989, %v844
        %991 = vadd.xlane.f32.xlu0 %v990
        %v992 = vpop.xlane.xlu0 %991
        %v993 = vadd.f32 %v845, %v846
        %v994 = vadd.f32 %v993, %v847
        %v995 = vadd.f32 %v994, %v848
        %996 = vadd.xlane.f32.xlu0 %v995
        %v997 = vpop.xlane.xlu0 %996
        %v998 = vadd.f32 %v849, %v850
        %v999 = vadd.f32 %v998, %v851
        %v1000 = vadd.f32 %v999, %v852
        %1001 = vadd.xlane.f32.xlu0 %v1000
        %v1002 = vpop.xlane.xlu0 %1001
        %v1003 = vadd.f32 %v853, %v854
        %v1004 = vadd.f32 %v1003, %v855
        %v1005 = vadd.f32 %v1004, %v856
        %1006 = vadd.xlane.f32.xlu0 %v1005
        %v1007 = vpop.xlane.xlu0 %1006
        %v1008 = vadd.f32 %v857, %v858
        %v1009 = vadd.f32 %v1008, %v859
        %v1010 = vadd.f32 %v1009, %v860
        %1011 = vadd.xlane.f32.xlu0 %v1010
        %v1012 = vpop.xlane.xlu0 %1011
        %v1013 = vadd.f32 %v861, %v862
        %v1014 = vadd.f32 %v1013, %v863
        %v1015 = vadd.f32 %v1014, %v864
        %1016 = vadd.xlane.f32.xlu0 %v1015
        %v1017 = vpop.xlane.xlu0 %1016
        %v1018 = vadd.f32 %v865, %v866
        %v1019 = vadd.f32 %v1018, %v867
        %v1020 = vadd.f32 %v1019, %v868
        %1021 = vadd.xlane.f32.xlu0 %v1020
        %v1022 = vpop.xlane.xlu0 %1021
        %v1023 = vadd.f32 %v869, %v870
        %v1024 = vadd.f32 %v1023, %v871
        %v1025 = vadd.f32 %v1024, %v872
        %1026 = vadd.xlane.f32.xlu0 %v1025
        %v1027 = vpop.xlane.xlu0 %1026
        %v1028 = vadd.f32 %v873, %v874
        %v1029 = vadd.f32 %v1028, %v875
        %v1030 = vadd.f32 %v1029, %v876
        %1031 = vadd.xlane.f32.xlu0 %v1030
        %v1032 = vpop.xlane.xlu0 %1031
        %v1033 = vadd.f32 %v877, %v878
        %v1034 = vadd.f32 %v1033, %v879
        %v1035 = vadd.f32 %v1034, %v880
        %1036 = vadd.xlane.f32.xlu0 %v1035
        %v1037 = vpop.xlane.xlu0 %1036
        %v1038 = vadd.f32 %v881, %v882
        %v1039 = vadd.f32 %v1038, %v883
        %v1040 = vadd.f32 %v1039, %v884
        %1041 = vadd.xlane.f32.xlu0 %v1040
        %v1042 = vpop.xlane.xlu0 %1041
        %v1043 = vadd.f32 %v885, %v886
        %v1044 = vadd.f32 %v1043, %v887
        %v1045 = vadd.f32 %v1044, %v888
        %1046 = vadd.xlane.f32.xlu0 %v1045
        %v1047 = vpop.xlane.xlu0 %1046
        %v1048 = vadd.f32 %v889, %v890
        %v1049 = vadd.f32 %v1048, %v891
        %v1050 = vadd.f32 %v1049, %v892
        %1051 = vadd.xlane.f32.xlu0 %v1050
        %v1052 = vpop.xlane.xlu0 %1051
        %v1053 = vmul.f32 %v897, %v604
        %v1054 = vmul.f32 %v902, %v604
        %v1055 = vmul.f32 %v907, %v604
        %v1056 = vmul.f32 %v912, %v604
        %v1057 = vmul.f32 %v917, %v604
        %v1058 = vmul.f32 %v922, %v604
        %v1059 = vmul.f32 %v927, %v604
        %v1060 = vmul.f32 %v932, %v604
        %v1061 = vmul.f32 %v937, %v604
        %v1062 = vmul.f32 %v942, %v604
        %v1063 = vmul.f32 %v947, %v604
        %v1064 = vmul.f32 %v952, %v604
        %v1065 = vmul.f32 %v957, %v604
        %v1066 = vmul.f32 %v962, %v604
        %v1067 = vmul.f32 %v967, %v604
        %v1068 = vmul.f32 %v972, %v604
        %v1069 = vmul.f32 %v977, %v604
        %v1070 = vmul.f32 %v982, %v604
        %v1071 = vmul.f32 %v987, %v604
        %v1072 = vmul.f32 %v992, %v604
        %v1073 = vmul.f32 %v997, %v604
        %v1074 = vmul.f32 %v1002, %v604
        %v1075 = vmul.f32 %v1007, %v604
        %v1076 = vmul.f32 %v1012, %v604
        %v1077 = vmul.f32 %v1017, %v604
        %v1078 = vmul.f32 %v1022, %v604
        %v1079 = vmul.f32 %v1027, %v604
        %v1080 = vmul.f32 %v1032, %v604
        %v1081 = vmul.f32 %v1037, %v604
        %v1082 = vmul.f32 %v1042, %v604
        %v1083 = vmul.f32 %v1047, %v604
        %v1084 = vmul.f32 %v1052, %v604
        %v1085 = vadd.f32 %v1053, 1e-05
        %v1086 = vadd.f32 %v1054, 1e-05
        %v1087 = vadd.f32 %v1055, 1e-05
        %v1088 = vadd.f32 %v1056, 1e-05
        %v1089 = vadd.f32 %v1057, 1e-05
        %v1090 = vadd.f32 %v1058, 1e-05
        %v1091 = vadd.f32 %v1059, 1e-05
        %v1092 = vadd.f32 %v1060, 1e-05
        %v1093 = vadd.f32 %v1061, 1e-05
        %v1094 = vadd.f32 %v1062, 1e-05
        %v1095 = vadd.f32 %v1063, 1e-05
        %v1096 = vadd.f32 %v1064, 1e-05
        %v1097 = vadd.f32 %v1065, 1e-05
        %v1098 = vadd.f32 %v1066, 1e-05
        %v1099 = vadd.f32 %v1067, 1e-05
        %v1100 = vadd.f32 %v1068, 1e-05
        %v1101 = vadd.f32 %v1069, 1e-05
        %v1102 = vadd.f32 %v1070, 1e-05
        %v1103 = vadd.f32 %v1071, 1e-05
        %v1104 = vadd.f32 %v1072, 1e-05
        %v1105 = vadd.f32 %v1073, 1e-05
        %v1106 = vadd.f32 %v1074, 1e-05
        %v1107 = vadd.f32 %v1075, 1e-05
        %v1108 = vadd.f32 %v1076, 1e-05
        %v1109 = vadd.f32 %v1077, 1e-05
        %v1110 = vadd.f32 %v1078, 1e-05
        %v1111 = vadd.f32 %v1079, 1e-05
        %v1112 = vadd.f32 %v1080, 1e-05
        %v1113 = vadd.f32 %v1081, 1e-05
        %v1114 = vadd.f32 %v1082, 1e-05
        %v1115 = vadd.f32 %v1083, 1e-05
        %v1116 = vadd.f32 %v1084, 1e-05
        %v1117 = vrsqrt.pop %v1085
        %v1118 = vrsqrt.pop %v1086
        %v1119 = vrsqrt.pop %v1087
        %v1120 = vrsqrt.pop %v1088
        %v1121 = vrsqrt.pop %v1089
        %v1122 = vrsqrt.pop %v1090
        %v1123 = vrsqrt.pop %v1091
        %v1124 = vrsqrt.pop %v1092
        %v1125 = vrsqrt.pop %v1093
        %v1126 = vrsqrt.pop %v1094
        %v1127 = vrsqrt.pop %v1095
        %v1128 = vrsqrt.pop %v1096
        %v1129 = vrsqrt.pop %v1097
        %v1130 = vrsqrt.pop %v1098
        %v1131 = vrsqrt.pop %v1099
        %v1132 = vrsqrt.pop %v1100
        %v1133 = vrsqrt.pop %v1101
        %v1134 = vrsqrt.pop %v1102
        %v1135 = vrsqrt.pop %v1103
        %v1136 = vrsqrt.pop %v1104
        %v1137 = vrsqrt.pop %v1105
        %v1138 = vrsqrt.pop %v1106
        %v1139 = vrsqrt.pop %v1107
        %v1140 = vrsqrt.pop %v1108
        %v1141 = vrsqrt.pop %v1109
        %v1142 = vrsqrt.pop %v1110
        %v1143 = vrsqrt.pop %v1111
        %v1144 = vrsqrt.pop %v1112
        %v1145 = vrsqrt.pop %v1113
        %v1146 = vrsqrt.pop %v1114
        %v1147 = vrsqrt.pop %v1115
        %v1148 = vrsqrt.pop %v1116
        %v1149 = vmul.f32 %v637, %v1117
        %v1150 = vmul.f32 %v638, %v1117
        %v1151 = vmul.f32 %v639, %v1117
        %v1152 = vmul.f32 %v640, %v1117
        %v1153 = vmul.f32 %v641, %v1118
        %v1154 = vmul.f32 %v642, %v1118
        %v1155 = vmul.f32 %v643, %v1118
        %v1156 = vmul.f32 %v644, %v1118
        %v1157 = vmul.f32 %v645, %v1119
        %v1158 = vmul.f32 %v646, %v1119
        %v1159 = vmul.f32 %v647, %v1119
        %v1160 = vmul.f32 %v648, %v1119
        %v1161 = vmul.f32 %v649, %v1120
        %v1162 = vmul.f32 %v650, %v1120
        %v1163 = vmul.f32 %v651, %v1120
        %v1164 = vmul.f32 %v652, %v1120
        %v1165 = vmul.f32 %v653, %v1121
        %v1166 = vmul.f32 %v654, %v1121
        %v1167 = vmul.f32 %v655, %v1121
        %v1168 = vmul.f32 %v656, %v1121
        %v1169 = vmul.f32 %v657, %v1122
        %v1170 = vmul.f32 %v658, %v1122
        %v1171 = vmul.f32 %v659, %v1122
        %v1172 = vmul.f32 %v660, %v1122
        %v1173 = vmul.f32 %v661, %v1123
        %v1174 = vmul.f32 %v662, %v1123
        %v1175 = vmul.f32 %v663, %v1123
        %v1176 = vmul.f32 %v664, %v1123
        %v1177 = vmul.f32 %v665, %v1124
        %v1178 = vmul.f32 %v666, %v1124
        %v1179 = vmul.f32 %v667, %v1124
        %v1180 = vmul.f32 %v668, %v1124
        %v1181 = vmul.f32 %v669, %v1125
        %v1182 = vmul.f32 %v670, %v1125
        %v1183 = vmul.f32 %v671, %v1125
        %v1184 = vmul.f32 %v672, %v1125
        %v1185 = vmul.f32 %v673, %v1126
        %v1186 = vmul.f32 %v674, %v1126
        %v1187 = vmul.f32 %v675, %v1126
        %v1188 = vmul.f32 %v676, %v1126
        %v1189 = vmul.f32 %v677, %v1127
        %v1190 = vmul.f32 %v678, %v1127
        %v1191 = vmul.f32 %v679, %v1127
        %v1192 = vmul.f32 %v680, %v1127
        %v1193 = vmul.f32 %v681, %v1128
        %v1194 = vmul.f32 %v682, %v1128
        %v1195 = vmul.f32 %v683, %v1128
        %v1196 = vmul.f32 %v684, %v1128
        %v1197 = vmul.f32 %v685, %v1129
        %v1198 = vmul.f32 %v686, %v1129
        %v1199 = vmul.f32 %v687, %v1129
        %v1200 = vmul.f32 %v688, %v1129
        %v1201 = vmul.f32 %v689, %v1130
        %v1202 = vmul.f32 %v690, %v1130
        %v1203 = vmul.f32 %v691, %v1130
        %v1204 = vmul.f32 %v692, %v1130
        %v1205 = vmul.f32 %v693, %v1131
        %v1206 = vmul.f32 %v694, %v1131
        %v1207 = vmul.f32 %v695, %v1131
        %v1208 = vmul.f32 %v696, %v1131
        %v1209 = vmul.f32 %v697, %v1132
        %v1210 = vmul.f32 %v698, %v1132
        %v1211 = vmul.f32 %v699, %v1132
        %v1212 = vmul.f32 %v700, %v1132
        %v1213 = vmul.f32 %v701, %v1133
        %v1214 = vmul.f32 %v702, %v1133
        %v1215 = vmul.f32 %v703, %v1133
        %v1216 = vmul.f32 %v704, %v1133
        %v1217 = vmul.f32 %v705, %v1134
        %v1218 = vmul.f32 %v706, %v1134
        %v1219 = vmul.f32 %v707, %v1134
        %v1220 = vmul.f32 %v708, %v1134
        %v1221 = vmul.f32 %v709, %v1135
        %v1222 = vmul.f32 %v710, %v1135
        %v1223 = vmul.f32 %v711, %v1135
        %v1224 = vmul.f32 %v712, %v1135
        %v1225 = vmul.f32 %v713, %v1136
        %v1226 = vmul.f32 %v714, %v1136
        %v1227 = vmul.f32 %v715, %v1136
        %v1228 = vmul.f32 %v716, %v1136
        %v1229 = vmul.f32 %v717, %v1137
        %v1230 = vmul.f32 %v718, %v1137
        %v1231 = vmul.f32 %v719, %v1137
        %v1232 = vmul.f32 %v720, %v1137
        %v1233 = vmul.f32 %v721, %v1138
        %v1234 = vmul.f32 %v722, %v1138
        %v1235 = vmul.f32 %v723, %v1138
        %v1236 = vmul.f32 %v724, %v1138
        %v1237 = vmul.f32 %v725, %v1139
        %v1238 = vmul.f32 %v726, %v1139
        %v1239 = vmul.f32 %v727, %v1139
        %v1240 = vmul.f32 %v728, %v1139
        %v1241 = vmul.f32 %v729, %v1140
        %v1242 = vmul.f32 %v730, %v1140
        %v1243 = vmul.f32 %v731, %v1140
        %v1244 = vmul.f32 %v732, %v1140
        %v1245 = vmul.f32 %v733, %v1141
        %v1246 = vmul.f32 %v734, %v1141
        %v1247 = vmul.f32 %v735, %v1141
        %v1248 = vmul.f32 %v736, %v1141
        %v1249 = vmul.f32 %v737, %v1142
        %v1250 = vmul.f32 %v738, %v1142
        %v1251 = vmul.f32 %v739, %v1142
        %v1252 = vmul.f32 %v740, %v1142
        %v1253 = vmul.f32 %v741, %v1143
        %v1254 = vmul.f32 %v742, %v1143
        %v1255 = vmul.f32 %v743, %v1143
        %v1256 = vmul.f32 %v744, %v1143
        %v1257 = vmul.f32 %v745, %v1144
        %v1258 = vmul.f32 %v746, %v1144
        %v1259 = vmul.f32 %v747, %v1144
        %v1260 = vmul.f32 %v748, %v1144
        %v1261 = vmul.f32 %v749, %v1145
        %v1262 = vmul.f32 %v750, %v1145
        %v1263 = vmul.f32 %v751, %v1145
        %v1264 = vmul.f32 %v752, %v1145
        %v1265 = vmul.f32 %v753, %v1146
        %v1266 = vmul.f32 %v754, %v1146
        %v1267 = vmul.f32 %v755, %v1146
        %v1268 = vmul.f32 %v756, %v1146
        %v1269 = vmul.f32 %v757, %v1147
        %v1270 = vmul.f32 %v758, %v1147
        %v1271 = vmul.f32 %v759, %v1147
        %v1272 = vmul.f32 %v760, %v1147
        %v1273 = vmul.f32 %v761, %v1148
        %v1274 = vmul.f32 %v762, %v1148
        %v1275 = vmul.f32 %v763, %v1148
        %v1276 = vmul.f32 %v764, %v1148
        %v1277 = vld [vmem:[#allocation5] sm:$0xf]
        %v1279 = vlaneseq
        %v1280 = vshrl.u32 %v1279, 7
        %v1281 = vsub.s32 0, %v1280
        %v1282 = vrot.slane %v1277, %v1281
        %v1283 = vlaneseq
        %v1284 = vshrl.u32 %v1283, 7
        %v1285 = vsub.s32 1, %v1284
        %v1286 = vrot.slane %v1277, %v1285
        %v1287 = vlaneseq
        %v1288 = vshrl.u32 %v1287, 7
        %v1289 = vsub.s32 2, %v1288
        %v1290 = vrot.slane %v1277, %v1289
        %v1291 = vlaneseq
        %v1292 = vshrl.u32 %v1291, 7
        %v1293 = vsub.s32 3, %v1292
        %v1294 = vrot.slane %v1277, %v1293
        %v1299 = vmul.f32 %v1149, %v1282
        %v1300 = vmul.f32 %v1150, %v1286
        %v1301 = vmul.f32 %v1151, %v1290
        %v1302 = vmul.f32 %v1152, %v1294
        %v1303 = vmul.f32 %v1153, %v1282
        %v1304 = vmul.f32 %v1154, %v1286
        %v1305 = vmul.f32 %v1155, %v1290
        %v1306 = vmul.f32 %v1156, %v1294
        %v1307 = vmul.f32 %v1157, %v1282
        %v1308 = vmul.f32 %v1158, %v1286
        %v1309 = vmul.f32 %v1159, %v1290
        %v1310 = vmul.f32 %v1160, %v1294
        %v1311 = vmul.f32 %v1161, %v1282
        %v1312 = vmul.f32 %v1162, %v1286
        %v1313 = vmul.f32 %v1163, %v1290
        %v1314 = vmul.f32 %v1164, %v1294
        %v1315 = vmul.f32 %v1165, %v1282
        %v1316 = vmul.f32 %v1166, %v1286
        %v1317 = vmul.f32 %v1167, %v1290
        %v1318 = vmul.f32 %v1168, %v1294
        %v1319 = vmul.f32 %v1169, %v1282
        %v1320 = vmul.f32 %v1170, %v1286
        %v1321 = vmul.f32 %v1171, %v1290
        %v1322 = vmul.f32 %v1172, %v1294
        %v1323 = vmul.f32 %v1173, %v1282
        %v1324 = vmul.f32 %v1174, %v1286
        %v1325 = vmul.f32 %v1175, %v1290
        %v1326 = vmul.f32 %v1176, %v1294
        %v1327 = vmul.f32 %v1177, %v1282
        %v1328 = vmul.f32 %v1178, %v1286
        %v1329 = vmul.f32 %v1179, %v1290
        %v1330 = vmul.f32 %v1180, %v1294
        %v1331 = vmul.f32 %v1181, %v1282
        %v1332 = vmul.f32 %v1182, %v1286
        %v1333 = vmul.f32 %v1183, %v1290
        %v1334 = vmul.f32 %v1184, %v1294
        %v1335 = vmul.f32 %v1185, %v1282
        %v1336 = vmul.f32 %v1186, %v1286
        %v1337 = vmul.f32 %v1187, %v1290
        %v1338 = vmul.f32 %v1188, %v1294
        %v1339 = vmul.f32 %v1189, %v1282
        %v1340 = vmul.f32 %v1190, %v1286
        %v1341 = vmul.f32 %v1191, %v1290
        %v1342 = vmul.f32 %v1192, %v1294
        %v1343 = vmul.f32 %v1193, %v1282
        %v1344 = vmul.f32 %v1194, %v1286
        %v1345 = vmul.f32 %v1195, %v1290
        %v1346 = vmul.f32 %v1196, %v1294
        %v1347 = vmul.f32 %v1197, %v1282
        %v1348 = vmul.f32 %v1198, %v1286
        %v1349 = vmul.f32 %v1199, %v1290
        %v1350 = vmul.f32 %v1200, %v1294
        %v1351 = vmul.f32 %v1201, %v1282
        %v1352 = vmul.f32 %v1202, %v1286
        %v1353 = vmul.f32 %v1203, %v1290
        %v1354 = vmul.f32 %v1204, %v1294
        %v1355 = vmul.f32 %v1205, %v1282
        %v1356 = vmul.f32 %v1206, %v1286
        %v1357 = vmul.f32 %v1207, %v1290
        %v1358 = vmul.f32 %v1208, %v1294
        %v1359 = vmul.f32 %v1209, %v1282
        %v1360 = vmul.f32 %v1210, %v1286
        %v1361 = vmul.f32 %v1211, %v1290
        %v1362 = vmul.f32 %v1212, %v1294
        %v1363 = vmul.f32 %v1213, %v1282
        %v1364 = vmul.f32 %v1214, %v1286
        %v1365 = vmul.f32 %v1215, %v1290
        %v1366 = vmul.f32 %v1216, %v1294
        %v1367 = vmul.f32 %v1217, %v1282
        %v1368 = vmul.f32 %v1218, %v1286
        %v1369 = vmul.f32 %v1219, %v1290
        %v1370 = vmul.f32 %v1220, %v1294
        %v1371 = vmul.f32 %v1221, %v1282
        %v1372 = vmul.f32 %v1222, %v1286
        %v1373 = vmul.f32 %v1223, %v1290
        %v1374 = vmul.f32 %v1224, %v1294
        %v1375 = vmul.f32 %v1225, %v1282
        %v1376 = vmul.f32 %v1226, %v1286
        %v1377 = vmul.f32 %v1227, %v1290
        %v1378 = vmul.f32 %v1228, %v1294
        %v1379 = vmul.f32 %v1229, %v1282
        %v1380 = vmul.f32 %v1230, %v1286
        %v1381 = vmul.f32 %v1231, %v1290
        %v1382 = vmul.f32 %v1232, %v1294
        %v1383 = vmul.f32 %v1233, %v1282
        %v1384 = vmul.f32 %v1234, %v1286
        %v1385 = vmul.f32 %v1235, %v1290
        %v1386 = vmul.f32 %v1236, %v1294
        %v1387 = vmul.f32 %v1237, %v1282
        %v1388 = vmul.f32 %v1238, %v1286
        %v1389 = vmul.f32 %v1239, %v1290
        %v1390 = vmul.f32 %v1240, %v1294
        %v1391 = vmul.f32 %v1241, %v1282
        %v1392 = vmul.f32 %v1242, %v1286
        %v1393 = vmul.f32 %v1243, %v1290
        %v1394 = vmul.f32 %v1244, %v1294
        %v1395 = vmul.f32 %v1245, %v1282
        %v1396 = vmul.f32 %v1246, %v1286
        %v1397 = vmul.f32 %v1247, %v1290
        %v1398 = vmul.f32 %v1248, %v1294
        %v1399 = vmul.f32 %v1249, %v1282
        %v1400 = vmul.f32 %v1250, %v1286
        %v1401 = vmul.f32 %v1251, %v1290
        %v1402 = vmul.f32 %v1252, %v1294
        %v1403 = vmul.f32 %v1253, %v1282
        %v1404 = vmul.f32 %v1254, %v1286
        %v1405 = vmul.f32 %v1255, %v1290
        %v1406 = vmul.f32 %v1256, %v1294
        %v1407 = vmul.f32 %v1257, %v1282
        %v1408 = vmul.f32 %v1258, %v1286
        %v1409 = vmul.f32 %v1259, %v1290
        %v1410 = vmul.f32 %v1260, %v1294
        %v1411 = vmul.f32 %v1261, %v1282
        %v1412 = vmul.f32 %v1262, %v1286
        %v1413 = vmul.f32 %v1263, %v1290
        %v1414 = vmul.f32 %v1264, %v1294
        %v1415 = vmul.f32 %v1265, %v1282
        %v1416 = vmul.f32 %v1266, %v1286
        %v1417 = vmul.f32 %v1267, %v1290
        %v1418 = vmul.f32 %v1268, %v1294
        %v1419 = vmul.f32 %v1269, %v1282
        %v1420 = vmul.f32 %v1270, %v1286
        %v1421 = vmul.f32 %v1271, %v1290
        %v1422 = vmul.f32 %v1272, %v1294
        %v1423 = vmul.f32 %v1273, %v1282
        %v1424 = vmul.f32 %v1274, %v1286
        %v1425 = vmul.f32 %v1275, %v1290
        %v1426 = vmul.f32 %v1276, %v1294
        %v1427 = vld [vmem:[#allocation7] sm:$0xf]
        %v1429 = vlaneseq
        %v1430 = vshrl.u32 %v1429, 7
        %v1431 = vsub.s32 0, %v1430
        %v1432 = vrot.slane %v1427, %v1431
        %v1433 = vlaneseq
        %v1434 = vshrl.u32 %v1433, 7
        %v1435 = vsub.s32 1, %v1434
        %v1436 = vrot.slane %v1427, %v1435
        %v1437 = vlaneseq
        %v1438 = vshrl.u32 %v1437, 7
        %v1439 = vsub.s32 2, %v1438
        %v1440 = vrot.slane %v1427, %v1439
        %v1441 = vlaneseq
        %v1442 = vshrl.u32 %v1441, 7
        %v1443 = vsub.s32 3, %v1442
        %v1444 = vrot.slane %v1427, %v1443
        %v1449 = vadd.f32 %v1299, %v1432
        %v1450 = vadd.f32 %v1300, %v1436
        %v1451 = vadd.f32 %v1301, %v1440
        %v1452 = vadd.f32 %v1302, %v1444
        %v1453 = vadd.f32 %v1303, %v1432
        %v1454 = vadd.f32 %v1304, %v1436
        %v1455 = vadd.f32 %v1305, %v1440
        %v1456 = vadd.f32 %v1306, %v1444
        %v1457 = vadd.f32 %v1307, %v1432
        %v1458 = vadd.f32 %v1308, %v1436
        %v1459 = vadd.f32 %v1309, %v1440
        %v1460 = vadd.f32 %v1310, %v1444
        %v1461 = vadd.f32 %v1311, %v1432
        %v1462 = vadd.f32 %v1312, %v1436
        %v1463 = vadd.f32 %v1313, %v1440
        %v1464 = vadd.f32 %v1314, %v1444
        %v1465 = vadd.f32 %v1315, %v1432
        %v1466 = vadd.f32 %v1316, %v1436
        %v1467 = vadd.f32 %v1317, %v1440
        %v1468 = vadd.f32 %v1318, %v1444
        %v1469 = vadd.f32 %v1319, %v1432
        %v1470 = vadd.f32 %v1320, %v1436
        %v1471 = vadd.f32 %v1321, %v1440
        %v1472 = vadd.f32 %v1322, %v1444
        %v1473 = vadd.f32 %v1323, %v1432
        %v1474 = vadd.f32 %v1324, %v1436
        %v1475 = vadd.f32 %v1325, %v1440
        %v1476 = vadd.f32 %v1326, %v1444
        %v1477 = vadd.f32 %v1327, %v1432
        %v1478 = vadd.f32 %v1328, %v1436
        %v1479 = vadd.f32 %v1329, %v1440
        %v1480 = vadd.f32 %v1330, %v1444
        %v1481 = vadd.f32 %v1331, %v1432
        %v1482 = vadd.f32 %v1332, %v1436
        %v1483 = vadd.f32 %v1333, %v1440
        %v1484 = vadd.f32 %v1334, %v1444
        %v1485 = vadd.f32 %v1335, %v1432
        %v1486 = vadd.f32 %v1336, %v1436
        %v1487 = vadd.f32 %v1337, %v1440
        %v1488 = vadd.f32 %v1338, %v1444
        %v1489 = vadd.f32 %v1339, %v1432
        %v1490 = vadd.f32 %v1340, %v1436
        %v1491 = vadd.f32 %v1341, %v1440
        %v1492 = vadd.f32 %v1342, %v1444
        %v1493 = vadd.f32 %v1343, %v1432
        %v1494 = vadd.f32 %v1344, %v1436
        %v1495 = vadd.f32 %v1345, %v1440
        %v1496 = vadd.f32 %v1346, %v1444
        %v1497 = vadd.f32 %v1347, %v1432
        %v1498 = vadd.f32 %v1348, %v1436
        %v1499 = vadd.f32 %v1349, %v1440
        %v1500 = vadd.f32 %v1350, %v1444
        %v1501 = vadd.f32 %v1351, %v1432
        %v1502 = vadd.f32 %v1352, %v1436
        %v1503 = vadd.f32 %v1353, %v1440
        %v1504 = vadd.f32 %v1354, %v1444
        %v1505 = vadd.f32 %v1355, %v1432
        %v1506 = vadd.f32 %v1356, %v1436
        %v1507 = vadd.f32 %v1357, %v1440
        %v1508 = vadd.f32 %v1358, %v1444
        %v1509 = vadd.f32 %v1359, %v1432
        %v1510 = vadd.f32 %v1360, %v1436
        %v1511 = vadd.f32 %v1361, %v1440
        %v1512 = vadd.f32 %v1362, %v1444
        %v1513 = vadd.f32 %v1363, %v1432
        %v1514 = vadd.f32 %v1364, %v1436
        %v1515 = vadd.f32 %v1365, %v1440
        %v1516 = vadd.f32 %v1366, %v1444
        %v1517 = vadd.f32 %v1367, %v1432
        %v1518 = vadd.f32 %v1368, %v1436
        %v1519 = vadd.f32 %v1369, %v1440
        %v1520 = vadd.f32 %v1370, %v1444
        %v1521 = vadd.f32 %v1371, %v1432
        %v1522 = vadd.f32 %v1372, %v1436
        %v1523 = vadd.f32 %v1373, %v1440
        %v1524 = vadd.f32 %v1374, %v1444
        %v1525 = vadd.f32 %v1375, %v1432
        %v1526 = vadd.f32 %v1376, %v1436
        %v1527 = vadd.f32 %v1377, %v1440
        %v1528 = vadd.f32 %v1378, %v1444
        %v1529 = vadd.f32 %v1379, %v1432
        %v1530 = vadd.f32 %v1380, %v1436
        %v1531 = vadd.f32 %v1381, %v1440
        %v1532 = vadd.f32 %v1382, %v1444
        %v1533 = vadd.f32 %v1383, %v1432
        %v1534 = vadd.f32 %v1384, %v1436
        %v1535 = vadd.f32 %v1385, %v1440
        %v1536 = vadd.f32 %v1386, %v1444
        %v1537 = vadd.f32 %v1387, %v1432
        %v1538 = vadd.f32 %v1388, %v1436
        %v1539 = vadd.f32 %v1389, %v1440
        %v1540 = vadd.f32 %v1390, %v1444
        %v1541 = vadd.f32 %v1391, %v1432
        %v1542 = vadd.f32 %v1392, %v1436
        %v1543 = vadd.f32 %v1393, %v1440
        %v1544 = vadd.f32 %v1394, %v1444
        %v1545 = vadd.f32 %v1395, %v1432
        %v1546 = vadd.f32 %v1396, %v1436
        %v1547 = vadd.f32 %v1397, %v1440
        %v1548 = vadd.f32 %v1398, %v1444
        %v1549 = vadd.f32 %v1399, %v1432
        %v1550 = vadd.f32 %v1400, %v1436
        %v1551 = vadd.f32 %v1401, %v1440
        %v1552 = vadd.f32 %v1402, %v1444
        %v1553 = vadd.f32 %v1403, %v1432
        %v1554 = vadd.f32 %v1404, %v1436
        %v1555 = vadd.f32 %v1405, %v1440
        %v1556 = vadd.f32 %v1406, %v1444
        %v1557 = vadd.f32 %v1407, %v1432
        %v1558 = vadd.f32 %v1408, %v1436
        %v1559 = vadd.f32 %v1409, %v1440
        %v1560 = vadd.f32 %v1410, %v1444
        %v1561 = vadd.f32 %v1411, %v1432
        %v1562 = vadd.f32 %v1412, %v1436
        %v1563 = vadd.f32 %v1413, %v1440
        %v1564 = vadd.f32 %v1414, %v1444
        %v1565 = vadd.f32 %v1415, %v1432
        %v1566 = vadd.f32 %v1416, %v1436
        %v1567 = vadd.f32 %v1417, %v1440
        %v1568 = vadd.f32 %v1418, %v1444
        %v1569 = vadd.f32 %v1419, %v1432
        %v1570 = vadd.f32 %v1420, %v1436
        %v1571 = vadd.f32 %v1421, %v1440
        %v1572 = vadd.f32 %v1422, %v1444
        %v1573 = vadd.f32 %v1423, %v1432
        %v1574 = vadd.f32 %v1424, %v1436
        %v1575 = vadd.f32 %v1425, %v1440
        %v1576 = vadd.f32 %v1426, %v1444
        %v1577 = vpack.c.bf16 %v1453, %v1449
        %v1578 = vpack.c.bf16 %v1454, %v1450
        %v1579 = vpack.c.bf16 %v1455, %v1451
        %v1580 = vpack.c.bf16 %v1456, %v1452
        %v1581 = vpack.c.bf16 %v1461, %v1457
        %v1582 = vpack.c.bf16 %v1462, %v1458
        %v1583 = vpack.c.bf16 %v1463, %v1459
        %v1584 = vpack.c.bf16 %v1464, %v1460
        %v1585 = vpack.c.bf16 %v1469, %v1465
        %v1586 = vpack.c.bf16 %v1470, %v1466
        %v1587 = vpack.c.bf16 %v1471, %v1467
        %v1588 = vpack.c.bf16 %v1472, %v1468
        %v1589 = vpack.c.bf16 %v1477, %v1473
        %v1590 = vpack.c.bf16 %v1478, %v1474
        %v1591 = vpack.c.bf16 %v1479, %v1475
        %v1592 = vpack.c.bf16 %v1480, %v1476
        %v1593 = vpack.c.bf16 %v1485, %v1481
        %v1594 = vpack.c.bf16 %v1486, %v1482
        %v1595 = vpack.c.bf16 %v1487, %v1483
        %v1596 = vpack.c.bf16 %v1488, %v1484
        %v1597 = vpack.c.bf16 %v1493, %v1489
        %v1598 = vpack.c.bf16 %v1494, %v1490
        %v1599 = vpack.c.bf16 %v1495, %v1491
        %v1600 = vpack.c.bf16 %v1496, %v1492
        %v1601 = vpack.c.bf16 %v1501, %v1497
        %v1602 = vpack.c.bf16 %v1502, %v1498
        %v1603 = vpack.c.bf16 %v1503, %v1499
        %v1604 = vpack.c.bf16 %v1504, %v1500
        %v1605 = vpack.c.bf16 %v1509, %v1505
        %v1606 = vpack.c.bf16 %v1510, %v1506
        %v1607 = vpack.c.bf16 %v1511, %v1507
        %v1608 = vpack.c.bf16 %v1512, %v1508
        %v1609 = vpack.c.bf16 %v1517, %v1513
        %v1610 = vpack.c.bf16 %v1518, %v1514
        %v1611 = vpack.c.bf16 %v1519, %v1515
        %v1612 = vpack.c.bf16 %v1520, %v1516
        %v1613 = vpack.c.bf16 %v1525, %v1521
        %v1614 = vpack.c.bf16 %v1526, %v1522
        %v1615 = vpack.c.bf16 %v1527, %v1523
        %v1616 = vpack.c.bf16 %v1528, %v1524
        %v1617 = vpack.c.bf16 %v1533, %v1529
        %v1618 = vpack.c.bf16 %v1534, %v1530
        %v1619 = vpack.c.bf16 %v1535, %v1531
        %v1620 = vpack.c.bf16 %v1536, %v1532
        %v1621 = vpack.c.bf16 %v1541, %v1537
        %v1622 = vpack.c.bf16 %v1542, %v1538
        %v1623 = vpack.c.bf16 %v1543, %v1539
        %v1624 = vpack.c.bf16 %v1544, %v1540
        %v1625 = vpack.c.bf16 %v1549, %v1545
        %v1626 = vpack.c.bf16 %v1550, %v1546
        %v1627 = vpack.c.bf16 %v1551, %v1547
        %v1628 = vpack.c.bf16 %v1552, %v1548
        %v1629 = vpack.c.bf16 %v1557, %v1553
        %v1630 = vpack.c.bf16 %v1558, %v1554
        %v1631 = vpack.c.bf16 %v1559, %v1555
        %v1632 = vpack.c.bf16 %v1560, %v1556
        %v1633 = vpack.c.bf16 %v1565, %v1561
        %v1634 = vpack.c.bf16 %v1566, %v1562
        %v1635 = vpack.c.bf16 %v1567, %v1563
        %v1636 = vpack.c.bf16 %v1568, %v1564
        %v1637 = vpack.c.bf16 %v1573, %v1569
        %v1638 = vpack.c.bf16 %v1574, %v1570
        %v1639 = vpack.c.bf16 %v1575, %v1571
        %v1640 = vpack.c.bf16 %v1576, %v1572
        %v1641 = vld [vmem:[#allocation8] sm:$0xff]
        %v1642 = vld [vmem:[#allocation8 + $0x8] sm:$0xff]
        %v1643 = vld [vmem:[#allocation8 + $0x10] sm:$0xff]
        %v1644 = vld [vmem:[#allocation8 + $0x18] sm:$0xff]
        %v1645 = vld [vmem:[#allocation8 + $0x20] sm:$0xff]
        %v1646 = vld [vmem:[#allocation8 + $0x28] sm:$0xff]
        %v1647 = vld [vmem:[#allocation8 + $0x30] sm:$0xff]
        %v1648 = vld [vmem:[#allocation8 + $0x38] sm:$0xff]
        %v1649 = vld [vmem:[#allocation8 + $0x40] sm:$0xff]
        %v1650 = vld [vmem:[#allocation8 + $0x48] sm:$0xff]
        %v1651 = vld [vmem:[#allocation8 + $0x50] sm:$0xff]
        %v1652 = vld [vmem:[#allocation8 + $0x58] sm:$0xff]
        %v1653 = vld [vmem:[#allocation8 + $0x60] sm:$0xff]
        %v1654 = vld [vmem:[#allocation8 + $0x68] sm:$0xff]
        %v1655 = vld [vmem:[#allocation8 + $0x70] sm:$0xff]
        %v1656 = vld [vmem:[#allocation8 + $0x78] sm:$0xff]
        %v1657 = vld [vmem:[#allocation8 + $0x80] sm:$0xff]
        %v1658 = vld [vmem:[#allocation8 + $0x88] sm:$0xff]
        %v1659 = vld [vmem:[#allocation8 + $0x90] sm:$0xff]
        %v1660 = vld [vmem:[#allocation8 + $0x98] sm:$0xff]
        %v1661 = vld [vmem:[#allocation8 + $0xa0] sm:$0xff]
        %v1662 = vld [vmem:[#allocation8 + $0xa8] sm:$0xff]
        %v1663 = vld [vmem:[#allocation8 + $0xb0] sm:$0xff]
        %v1664 = vld [vmem:[#allocation8 + $0xb8] sm:$0xff]
        %v1665 = vld [vmem:[#allocation8 + $0xc0] sm:$0xff]
        %v1666 = vld [vmem:[#allocation8 + $0xc8] sm:$0xff]
        %v1667 = vld [vmem:[#allocation8 + $0xd0] sm:$0xff]
        %v1668 = vld [vmem:[#allocation8 + $0xd8] sm:$0xff]
        %v1669 = vld [vmem:[#allocation8 + $0xe0] sm:$0xff]
        %v1670 = vld [vmem:[#allocation8 + $0xe8] sm:$0xff]
        %v1671 = vld [vmem:[#allocation8 + $0xf0] sm:$0xff]
        %v1672 = vld [vmem:[#allocation8 + $0xf8] sm:$0xff]
        %v1673 = vld [vmem:[#allocation8 + $0x100] sm:$0xff]
        %v1674 = vld [vmem:[#allocation8 + $0x108] sm:$0xff]
        %v1675 = vld [vmem:[#allocation8 + $0x110] sm:$0xff]
        %v1676 = vld [vmem:[#allocation8 + $0x118] sm:$0xff]
        %v1677 = vld [vmem:[#allocation8 + $0x120] sm:$0xff]
        %v1678 = vld [vmem:[#allocation8 + $0x128] sm:$0xff]
        %v1679 = vld [vmem:[#allocation8 + $0x130] sm:$0xff]
        %v1680 = vld [vmem:[#allocation8 + $0x138] sm:$0xff]
        %v1681 = vld [vmem:[#allocation8 + $0x140] sm:$0xff]
        %v1682 = vld [vmem:[#allocation8 + $0x148] sm:$0xff]
        %v1683 = vld [vmem:[#allocation8 + $0x150] sm:$0xff]
        %v1684 = vld [vmem:[#allocation8 + $0x158] sm:$0xff]
        %v1685 = vld [vmem:[#allocation8 + $0x160] sm:$0xff]
        %v1686 = vld [vmem:[#allocation8 + $0x168] sm:$0xff]
        %v1687 = vld [vmem:[#allocation8 + $0x170] sm:$0xff]
        %v1688 = vld [vmem:[#allocation8 + $0x178] sm:$0xff]
        %v1689 = vld [vmem:[#allocation8 + $0x180] sm:$0xff]
        %v1690 = vld [vmem:[#allocation8 + $0x188] sm:$0xff]
        %v1691 = vld [vmem:[#allocation8 + $0x190] sm:$0xff]
        %v1692 = vld [vmem:[#allocation8 + $0x198] sm:$0xff]
        %v1693 = vld [vmem:[#allocation8 + $0x1a0] sm:$0xff]
        %v1694 = vld [vmem:[#allocation8 + $0x1a8] sm:$0xff]
        %v1695 = vld [vmem:[#allocation8 + $0x1b0] sm:$0xff]
        %v1696 = vld [vmem:[#allocation8 + $0x1b8] sm:$0xff]
        %v1697 = vld [vmem:[#allocation8 + $0x1c0] sm:$0xff]
        %v1698 = vld [vmem:[#allocation8 + $0x1c8] sm:$0xff]
        %v1699 = vld [vmem:[#allocation8 + $0x1d0] sm:$0xff]
        %v1700 = vld [vmem:[#allocation8 + $0x1d8] sm:$0xff]
        %v1701 = vld [vmem:[#allocation8 + $0x1e0] sm:$0xff]
        %v1702 = vld [vmem:[#allocation8 + $0x1e8] sm:$0xff]
        %v1703 = vld [vmem:[#allocation8 + $0x1f0] sm:$0xff]
        %v1704 = vld [vmem:[#allocation8 + $0x1f8] sm:$0xff]
        %v1705 = vld [vmem:[#allocation8 + $0x200] sm:$0xff]
        %v1706 = vld [vmem:[#allocation8 + $0x208] sm:$0xff]
        %v1707 = vld [vmem:[#allocation8 + $0x210] sm:$0xff]
        %v1708 = vld [vmem:[#allocation8 + $0x218] sm:$0xff]
        %v1709 = vld [vmem:[#allocation8 + $0x220] sm:$0xff]
        %v1710 = vld [vmem:[#allocation8 + $0x228] sm:$0xff]
        %v1711 = vld [vmem:[#allocation8 + $0x230] sm:$0xff]
        %v1712 = vld [vmem:[#allocation8 + $0x238] sm:$0xff]
        %v1713 = vld [vmem:[#allocation8 + $0x240] sm:$0xff]
        %v1714 = vld [vmem:[#allocation8 + $0x248] sm:$0xff]
        %v1715 = vld [vmem:[#allocation8 + $0x250] sm:$0xff]
        %v1716 = vld [vmem:[#allocation8 + $0x258] sm:$0xff]
        %v1717 = vld [vmem:[#allocation8 + $0x260] sm:$0xff]
        %v1718 = vld [vmem:[#allocation8 + $0x268] sm:$0xff]
        %v1719 = vld [vmem:[#allocation8 + $0x270] sm:$0xff]
        %v1720 = vld [vmem:[#allocation8 + $0x278] sm:$0xff]
        %v1721 = vld [vmem:[#allocation8 + $0x280] sm:$0xff]
        %v1722 = vld [vmem:[#allocation8 + $0x288] sm:$0xff]
        %v1723 = vld [vmem:[#allocation8 + $0x290] sm:$0xff]
        %v1724 = vld [vmem:[#allocation8 + $0x298] sm:$0xff]
        %v1725 = vld [vmem:[#allocation8 + $0x2a0] sm:$0xff]
        %v1726 = vld [vmem:[#allocation8 + $0x2a8] sm:$0xff]
        %v1727 = vld [vmem:[#allocation8 + $0x2b0] sm:$0xff]
        %v1728 = vld [vmem:[#allocation8 + $0x2b8] sm:$0xff]
        %v1729 = vld [vmem:[#allocation8 + $0x2c0] sm:$0xff]
        %v1730 = vld [vmem:[#allocation8 + $0x2c8] sm:$0xff]
        %v1731 = vld [vmem:[#allocation8 + $0x2d0] sm:$0xff]
        %v1732 = vld [vmem:[#allocation8 + $0x2d8] sm:$0xff]
        %v1733 = vld [vmem:[#allocation8 + $0x2e0] sm:$0xff]
        %v1734 = vld [vmem:[#allocation8 + $0x2e8] sm:$0xff]
        %v1735 = vld [vmem:[#allocation8 + $0x2f0] sm:$0xff]
        %v1736 = vld [vmem:[#allocation8 + $0x2f8] sm:$0xff]
        %v1737 = vld [vmem:[#allocation8 + $0x300] sm:$0xff]
        %v1738 = vld [vmem:[#allocation8 + $0x308] sm:$0xff]
        %v1739 = vld [vmem:[#allocation8 + $0x310] sm:$0xff]
        %v1740 = vld [vmem:[#allocation8 + $0x318] sm:$0xff]
        %v1741 = vld [vmem:[#allocation8 + $0x320] sm:$0xff]
        %v1742 = vld [vmem:[#allocation8 + $0x328] sm:$0xff]
        %v1743 = vld [vmem:[#allocation8 + $0x330] sm:$0xff]
        %v1744 = vld [vmem:[#allocation8 + $0x338] sm:$0xff]
        %v1745 = vld [vmem:[#allocation8 + $0x340] sm:$0xff]
        %v1746 = vld [vmem:[#allocation8 + $0x348] sm:$0xff]
        %v1747 = vld [vmem:[#allocation8 + $0x350] sm:$0xff]
        %v1748 = vld [vmem:[#allocation8 + $0x358] sm:$0xff]
        %v1749 = vld [vmem:[#allocation8 + $0x360] sm:$0xff]
        %v1750 = vld [vmem:[#allocation8 + $0x368] sm:$0xff]
        %v1751 = vld [vmem:[#allocation8 + $0x370] sm:$0xff]
        %v1752 = vld [vmem:[#allocation8 + $0x378] sm:$0xff]
        %v1753 = vld [vmem:[#allocation8 + $0x380] sm:$0xff]
        %v1754 = vld [vmem:[#allocation8 + $0x388] sm:$0xff]
        %v1755 = vld [vmem:[#allocation8 + $0x390] sm:$0xff]
        %v1756 = vld [vmem:[#allocation8 + $0x398] sm:$0xff]
        %v1757 = vld [vmem:[#allocation8 + $0x3a0] sm:$0xff]
        %v1758 = vld [vmem:[#allocation8 + $0x3a8] sm:$0xff]
        %v1759 = vld [vmem:[#allocation8 + $0x3b0] sm:$0xff]
        %v1760 = vld [vmem:[#allocation8 + $0x3b8] sm:$0xff]
        %v1761 = vld [vmem:[#allocation8 + $0x3c0] sm:$0xff]
        %v1762 = vld [vmem:[#allocation8 + $0x3c8] sm:$0xff]
        %v1763 = vld [vmem:[#allocation8 + $0x3d0] sm:$0xff]
        %v1764 = vld [vmem:[#allocation8 + $0x3d8] sm:$0xff]
        %v1765 = vld [vmem:[#allocation8 + $0x3e0] sm:$0xff]
        %v1766 = vld [vmem:[#allocation8 + $0x3e8] sm:$0xff]
        %v1767 = vld [vmem:[#allocation8 + $0x3f0] sm:$0xff]
        %v1768 = vld [vmem:[#allocation8 + $0x3f8] sm:$0xff]
        %v1769 = vld [vmem:[#allocation10] sm:$0xf]
        %v1771 = vlaneseq
        %v1772 = vshrl.u32 %v1771, 7
        %v1773 = vsub.s32 0, %v1772
        %v1774 = vrot.slane %v1769, %v1773
        %v1775 = vlaneseq
        %v1776 = vshrl.u32 %v1775, 7
        %v1777 = vsub.s32 1, %v1776
        %v1778 = vrot.slane %v1769, %v1777
        %v1779 = vlaneseq
        %v1780 = vshrl.u32 %v1779, 7
        %v1781 = vsub.s32 2, %v1780
        %v1782 = vrot.slane %v1769, %v1781
        %v1783 = vlaneseq
        %v1784 = vshrl.u32 %v1783, 7
        %v1785 = vsub.s32 3, %v1784
        %v1786 = vrot.slane %v1769, %v1785
        %v1919 = vunpack.c.l.b16 %v1641
        %v1920 = vunpack.c.h.b16 %v1641
        %v1921 = vunpack.c.l.b16 %v1642
        %v1922 = vunpack.c.h.b16 %v1642
        %v1923 = vunpack.c.l.b16 %v1643
        %v1924 = vunpack.c.h.b16 %v1643
        %v1925 = vunpack.c.l.b16 %v1644
        %v1926 = vunpack.c.h.b16 %v1644
        %v1927 = vunpack.c.l.b16 %v1645
        %v1928 = vunpack.c.h.b16 %v1645
        %v1929 = vunpack.c.l.b16 %v1646
        %v1930 = vunpack.c.h.b16 %v1646
        %v1931 = vunpack.c.l.b16 %v1647
        %v1932 = vunpack.c.h.b16 %v1647
        %v1933 = vunpack.c.l.b16 %v1648
        %v1934 = vunpack.c.h.b16 %v1648
        %v1935 = vunpack.c.l.b16 %v1649
        %v1936 = vunpack.c.h.b16 %v1649
        %v1937 = vunpack.c.l.b16 %v1650
        %v1938 = vunpack.c.h.b16 %v1650
        %v1939 = vunpack.c.l.b16 %v1651
        %v1940 = vunpack.c.h.b16 %v1651
        %v1941 = vunpack.c.l.b16 %v1652
        %v1942 = vunpack.c.h.b16 %v1652
        %v1943 = vunpack.c.l.b16 %v1653
        %v1944 = vunpack.c.h.b16 %v1653
        %v1945 = vunpack.c.l.b16 %v1654
        %v1946 = vunpack.c.h.b16 %v1654
        %v1947 = vunpack.c.l.b16 %v1655
        %v1948 = vunpack.c.h.b16 %v1655
        %v1949 = vunpack.c.l.b16 %v1656
        %v1950 = vunpack.c.h.b16 %v1656
        %v1951 = vunpack.c.l.b16 %v1657
        %v1952 = vunpack.c.h.b16 %v1657
        %v1953 = vunpack.c.l.b16 %v1658
        %v1954 = vunpack.c.h.b16 %v1658
        %v1955 = vunpack.c.l.b16 %v1659
        %v1956 = vunpack.c.h.b16 %v1659
        %v1957 = vunpack.c.l.b16 %v1660
        %v1958 = vunpack.c.h.b16 %v1660
        %v1959 = vunpack.c.l.b16 %v1661
        %v1960 = vunpack.c.h.b16 %v1661
        %v1961 = vunpack.c.l.b16 %v1662
        %v1962 = vunpack.c.h.b16 %v1662
        %v1963 = vunpack.c.l.b16 %v1663
        %v1964 = vunpack.c.h.b16 %v1663
        %v1965 = vunpack.c.l.b16 %v1664
        %v1966 = vunpack.c.h.b16 %v1664
        %v1967 = vunpack.c.l.b16 %v1665
        %v1968 = vunpack.c.h.b16 %v1665
        %v1969 = vunpack.c.l.b16 %v1666
        %v1970 = vunpack.c.h.b16 %v1666
        %v1971 = vunpack.c.l.b16 %v1667
        %v1972 = vunpack.c.h.b16 %v1667
        %v1973 = vunpack.c.l.b16 %v1668
        %v1974 = vunpack.c.h.b16 %v1668
        %v1975 = vunpack.c.l.b16 %v1669
        %v1976 = vunpack.c.h.b16 %v1669
        %v1977 = vunpack.c.l.b16 %v1670
        %v1978 = vunpack.c.h.b16 %v1670
        %v1979 = vunpack.c.l.b16 %v1671
        %v1980 = vunpack.c.h.b16 %v1671
        %v1981 = vunpack.c.l.b16 %v1672
        %v1982 = vunpack.c.h.b16 %v1672
        %v1983 = vunpack.c.l.b16 %v1673
        %v1984 = vunpack.c.h.b16 %v1673
        %v1985 = vunpack.c.l.b16 %v1674
        %v1986 = vunpack.c.h.b16 %v1674
        %v1987 = vunpack.c.l.b16 %v1675
        %v1988 = vunpack.c.h.b16 %v1675
        %v1989 = vunpack.c.l.b16 %v1676
        %v1990 = vunpack.c.h.b16 %v1676
        %v1991 = vunpack.c.l.b16 %v1677
        %v1992 = vunpack.c.h.b16 %v1677
        %v1993 = vunpack.c.l.b16 %v1678
        %v1994 = vunpack.c.h.b16 %v1678
        %v1995 = vunpack.c.l.b16 %v1679
        %v1996 = vunpack.c.h.b16 %v1679
        %v1997 = vunpack.c.l.b16 %v1680
        %v1998 = vunpack.c.h.b16 %v1680
        %v1999 = vunpack.c.l.b16 %v1681
        %v2000 = vunpack.c.h.b16 %v1681
        %v2001 = vunpack.c.l.b16 %v1682
        %v2002 = vunpack.c.h.b16 %v1682
        %v2003 = vunpack.c.l.b16 %v1683
        %v2004 = vunpack.c.h.b16 %v1683
        %v2005 = vunpack.c.l.b16 %v1684
        %v2006 = vunpack.c.h.b16 %v1684
        %v2007 = vunpack.c.l.b16 %v1685
        %v2008 = vunpack.c.h.b16 %v1685
        %v2009 = vunpack.c.l.b16 %v1686
        %v2010 = vunpack.c.h.b16 %v1686
        %v2011 = vunpack.c.l.b16 %v1687
        %v2012 = vunpack.c.h.b16 %v1687
        %v2013 = vunpack.c.l.b16 %v1688
        %v2014 = vunpack.c.h.b16 %v1688
        %v2015 = vunpack.c.l.b16 %v1689
        %v2016 = vunpack.c.h.b16 %v1689
        %v2017 = vunpack.c.l.b16 %v1690
        %v2018 = vunpack.c.h.b16 %v1690
        %v2019 = vunpack.c.l.b16 %v1691
        %v2020 = vunpack.c.h.b16 %v1691
        %v2021 = vunpack.c.l.b16 %v1692
        %v2022 = vunpack.c.h.b16 %v1692
        %v2023 = vunpack.c.l.b16 %v1693
        %v2024 = vunpack.c.h.b16 %v1693
        %v2025 = vunpack.c.l.b16 %v1694
        %v2026 = vunpack.c.h.b16 %v1694
        %v2027 = vunpack.c.l.b16 %v1695
        %v2028 = vunpack.c.h.b16 %v1695
        %v2029 = vunpack.c.l.b16 %v1696
        %v2030 = vunpack.c.h.b16 %v1696
        %v2031 = vunpack.c.l.b16 %v1697
        %v2032 = vunpack.c.h.b16 %v1697
        %v2033 = vunpack.c.l.b16 %v1698
        %v2034 = vunpack.c.h.b16 %v1698
        %v2035 = vunpack.c.l.b16 %v1699
        %v2036 = vunpack.c.h.b16 %v1699
        %v2037 = vunpack.c.l.b16 %v1700
        %v2038 = vunpack.c.h.b16 %v1700
        %v2039 = vunpack.c.l.b16 %v1701
        %v2040 = vunpack.c.h.b16 %v1701
        %v2041 = vunpack.c.l.b16 %v1702
        %v2042 = vunpack.c.h.b16 %v1702
        %v2043 = vunpack.c.l.b16 %v1703
        %v2044 = vunpack.c.h.b16 %v1703
        %v2045 = vunpack.c.l.b16 %v1704
        %v2046 = vunpack.c.h.b16 %v1704
        %v2047 = vunpack.c.l.b16 %v1705
        %v2048 = vunpack.c.h.b16 %v1705
        %v2049 = vunpack.c.l.b16 %v1706
        %v2050 = vunpack.c.h.b16 %v1706
        %v2051 = vunpack.c.l.b16 %v1707
        %v2052 = vunpack.c.h.b16 %v1707
        %v2053 = vunpack.c.l.b16 %v1708
        %v2054 = vunpack.c.h.b16 %v1708
        %v2055 = vunpack.c.l.b16 %v1709
        %v2056 = vunpack.c.h.b16 %v1709
        %v2057 = vunpack.c.l.b16 %v1710
        %v2058 = vunpack.c.h.b16 %v1710
        %v2059 = vunpack.c.l.b16 %v1711
        %v2060 = vunpack.c.h.b16 %v1711
        %v2061 = vunpack.c.l.b16 %v1712
        %v2062 = vunpack.c.h.b16 %v1712
        %v2063 = vunpack.c.l.b16 %v1713
        %v2064 = vunpack.c.h.b16 %v1713
        %v2065 = vunpack.c.l.b16 %v1714
        %v2066 = vunpack.c.h.b16 %v1714
        %v2067 = vunpack.c.l.b16 %v1715
        %v2068 = vunpack.c.h.b16 %v1715
        %v2069 = vunpack.c.l.b16 %v1716
        %v2070 = vunpack.c.h.b16 %v1716
        %v2071 = vunpack.c.l.b16 %v1717
        %v2072 = vunpack.c.h.b16 %v1717
        %v2073 = vunpack.c.l.b16 %v1718
        %v2074 = vunpack.c.h.b16 %v1718
        %v2075 = vunpack.c.l.b16 %v1719
        %v2076 = vunpack.c.h.b16 %v1719
        %v2077 = vunpack.c.l.b16 %v1720
        %v2078 = vunpack.c.h.b16 %v1720
        %v2079 = vunpack.c.l.b16 %v1721
        %v2080 = vunpack.c.h.b16 %v1721
        %v2081 = vunpack.c.l.b16 %v1722
        %v2082 = vunpack.c.h.b16 %v1722
        %v2083 = vunpack.c.l.b16 %v1723
        %v2084 = vunpack.c.h.b16 %v1723
        %v2085 = vunpack.c.l.b16 %v1724
        %v2086 = vunpack.c.h.b16 %v1724
        %v2087 = vunpack.c.l.b16 %v1725
        %v2088 = vunpack.c.h.b16 %v1725
        %v2089 = vunpack.c.l.b16 %v1726
        %v2090 = vunpack.c.h.b16 %v1726
        %v2091 = vunpack.c.l.b16 %v1727
        %v2092 = vunpack.c.h.b16 %v1727
        %v2093 = vunpack.c.l.b16 %v1728
        %v2094 = vunpack.c.h.b16 %v1728
        %v2095 = vunpack.c.l.b16 %v1729
        %v2096 = vunpack.c.h.b16 %v1729
        %v2097 = vunpack.c.l.b16 %v1730
        %v2098 = vunpack.c.h.b16 %v1730
        %v2099 = vunpack.c.l.b16 %v1731
        %v2100 = vunpack.c.h.b16 %v1731
        %v2101 = vunpack.c.l.b16 %v1732
        %v2102 = vunpack.c.h.b16 %v1732
        %v2103 = vunpack.c.l.b16 %v1733
        %v2104 = vunpack.c.h.b16 %v1733
        %v2105 = vunpack.c.l.b16 %v1734
        %v2106 = vunpack.c.h.b16 %v1734
        %v2107 = vunpack.c.l.b16 %v1735
        %v2108 = vunpack.c.h.b16 %v1735
        %v2109 = vunpack.c.l.b16 %v1736
        %v2110 = vunpack.c.h.b16 %v1736
        %v2111 = vunpack.c.l.b16 %v1737
        %v2112 = vunpack.c.h.b16 %v1737
        %v2113 = vunpack.c.l.b16 %v1738
        %v2114 = vunpack.c.h.b16 %v1738
        %v2115 = vunpack.c.l.b16 %v1739
        %v2116 = vunpack.c.h.b16 %v1739
        %v2117 = vunpack.c.l.b16 %v1740
        %v2118 = vunpack.c.h.b16 %v1740
        %v2119 = vunpack.c.l.b16 %v1741
        %v2120 = vunpack.c.h.b16 %v1741
        %v2121 = vunpack.c.l.b16 %v1742
        %v2122 = vunpack.c.h.b16 %v1742
        %v2123 = vunpack.c.l.b16 %v1743
        %v2124 = vunpack.c.h.b16 %v1743
        %v2125 = vunpack.c.l.b16 %v1744
        %v2126 = vunpack.c.h.b16 %v1744
        %v2127 = vunpack.c.l.b16 %v1745
        %v2128 = vunpack.c.h.b16 %v1745
        %v2129 = vunpack.c.l.b16 %v1746
        %v2130 = vunpack.c.h.b16 %v1746
        %v2131 = vunpack.c.l.b16 %v1747
        %v2132 = vunpack.c.h.b16 %v1747
        %v2133 = vunpack.c.l.b16 %v1748
        %v2134 = vunpack.c.h.b16 %v1748
        %v2135 = vunpack.c.l.b16 %v1749
        %v2136 = vunpack.c.h.b16 %v1749
        %v2137 = vunpack.c.l.b16 %v1750
        %v2138 = vunpack.c.h.b16 %v1750
        %v2139 = vunpack.c.l.b16 %v1751
        %v2140 = vunpack.c.h.b16 %v1751
        %v2141 = vunpack.c.l.b16 %v1752
        %v2142 = vunpack.c.h.b16 %v1752
        %v2143 = vunpack.c.l.b16 %v1753
        %v2144 = vunpack.c.h.b16 %v1753
        %v2145 = vunpack.c.l.b16 %v1754
        %v2146 = vunpack.c.h.b16 %v1754
        %v2147 = vunpack.c.l.b16 %v1755
        %v2148 = vunpack.c.h.b16 %v1755
        %v2149 = vunpack.c.l.b16 %v1756
        %v2150 = vunpack.c.h.b16 %v1756
        %v2151 = vunpack.c.l.b16 %v1757
        %v2152 = vunpack.c.h.b16 %v1757
        %v2153 = vunpack.c.l.b16 %v1758
        %v2154 = vunpack.c.h.b16 %v1758
        %v2155 = vunpack.c.l.b16 %v1759
        %v2156 = vunpack.c.h.b16 %v1759
        %v2157 = vunpack.c.l.b16 %v1760
        %v2158 = vunpack.c.h.b16 %v1760
        %v2159 = vunpack.c.l.b16 %v1761
        %v2160 = vunpack.c.h.b16 %v1761
        %v2161 = vunpack.c.l.b16 %v1762
        %v2162 = vunpack.c.h.b16 %v1762
        %v2163 = vunpack.c.l.b16 %v1763
        %v2164 = vunpack.c.h.b16 %v1763
        %v2165 = vunpack.c.l.b16 %v1764
        %v2166 = vunpack.c.h.b16 %v1764
        %v2167 = vunpack.c.l.b16 %v1765
        %v2168 = vunpack.c.h.b16 %v1765
        %v2169 = vunpack.c.l.b16 %v1766
        %v2170 = vunpack.c.h.b16 %v1766
        %v2171 = vunpack.c.l.b16 %v1767
        %v2172 = vunpack.c.h.b16 %v1767
        %v2173 = vunpack.c.l.b16 %v1768
        %v2174 = vunpack.c.h.b16 %v1768
        %v2175 = vpack.c.b16 %v1923, %v1919
        %v2176 = vpack.c.b16 %v1924, %v1920
        %v2177 = vpack.c.b16 %v1925, %v1921
        %v2178 = vpack.c.b16 %v1926, %v1922
        %v2179 = vpack.c.b16 %v1931, %v1927
        %v2180 = vpack.c.b16 %v1932, %v1928
        %v2181 = vpack.c.b16 %v1933, %v1929
        %v2182 = vpack.c.b16 %v1934, %v1930
        %v2183 = vpack.c.b16 %v1939, %v1935
        %v2184 = vpack.c.b16 %v1940, %v1936
        %v2185 = vpack.c.b16 %v1941, %v1937
        %v2186 = vpack.c.b16 %v1942, %v1938
        %v2187 = vpack.c.b16 %v1947, %v1943
        %v2188 = vpack.c.b16 %v1948, %v1944
        %v2189 = vpack.c.b16 %v1949, %v1945
        %v2190 = vpack.c.b16 %v1950, %v1946
        %v2191 = vpack.c.b16 %v1955, %v1951
        %v2192 = vpack.c.b16 %v1956, %v1952
        %v2193 = vpack.c.b16 %v1957, %v1953
        %v2194 = vpack.c.b16 %v1958, %v1954
        %v2195 = vpack.c.b16 %v1963, %v1959
        %v2196 = vpack.c.b16 %v1964, %v1960
        %v2197 = vpack.c.b16 %v1965, %v1961
        %v2198 = vpack.c.b16 %v1966, %v1962
        %v2199 = vpack.c.b16 %v1971, %v1967
        %v2200 = vpack.c.b16 %v1972, %v1968
        %v2201 = vpack.c.b16 %v1973, %v1969
        %v2202 = vpack.c.b16 %v1974, %v1970
        %v2203 = vpack.c.b16 %v1979, %v1975
        %v2204 = vpack.c.b16 %v1980, %v1976
        %v2205 = vpack.c.b16 %v1981, %v1977
        %v2206 = vpack.c.b16 %v1982, %v1978
        %v2207 = vpack.c.b16 %v1987, %v1983
        %v2208 = vpack.c.b16 %v1988, %v1984
        %v2209 = vpack.c.b16 %v1989, %v1985
        %v2210 = vpack.c.b16 %v1990, %v1986
        %v2211 = vpack.c.b16 %v1995, %v1991
        %v2212 = vpack.c.b16 %v1996, %v1992
        %v2213 = vpack.c.b16 %v1997, %v1993
        %v2214 = vpack.c.b16 %v1998, %v1994
        %v2215 = vpack.c.b16 %v2003, %v1999
        %v2216 = vpack.c.b16 %v2004, %v2000
        %v2217 = vpack.c.b16 %v2005, %v2001
        %v2218 = vpack.c.b16 %v2006, %v2002
        %v2219 = vpack.c.b16 %v2011, %v2007
        %v2220 = vpack.c.b16 %v2012, %v2008
        %v2221 = vpack.c.b16 %v2013, %v2009
        %v2222 = vpack.c.b16 %v2014, %v2010
        %v2223 = vpack.c.b16 %v2019, %v2015
        %v2224 = vpack.c.b16 %v2020, %v2016
        %v2225 = vpack.c.b16 %v2021, %v2017
        %v2226 = vpack.c.b16 %v2022, %v2018
        %v2227 = vpack.c.b16 %v2027, %v2023
        %v2228 = vpack.c.b16 %v2028, %v2024
        %v2229 = vpack.c.b16 %v2029, %v2025
        %v2230 = vpack.c.b16 %v2030, %v2026
        %v2231 = vpack.c.b16 %v2035, %v2031
        %v2232 = vpack.c.b16 %v2036, %v2032
        %v2233 = vpack.c.b16 %v2037, %v2033
        %v2234 = vpack.c.b16 %v2038, %v2034
        %v2235 = vpack.c.b16 %v2043, %v2039
        %v2236 = vpack.c.b16 %v2044, %v2040
        %v2237 = vpack.c.b16 %v2045, %v2041
        %v2238 = vpack.c.b16 %v2046, %v2042
        %v2239 = vpack.c.b16 %v2051, %v2047
        %v2240 = vpack.c.b16 %v2052, %v2048
        %v2241 = vpack.c.b16 %v2053, %v2049
        %v2242 = vpack.c.b16 %v2054, %v2050
        %v2243 = vpack.c.b16 %v2059, %v2055
        %v2244 = vpack.c.b16 %v2060, %v2056
        %v2245 = vpack.c.b16 %v2061, %v2057
        %v2246 = vpack.c.b16 %v2062, %v2058
        %v2247 = vpack.c.b16 %v2067, %v2063
        %v2248 = vpack.c.b16 %v2068, %v2064
        %v2249 = vpack.c.b16 %v2069, %v2065
        %v2250 = vpack.c.b16 %v2070, %v2066
        %v2251 = vpack.c.b16 %v2075, %v2071
        %v2252 = vpack.c.b16 %v2076, %v2072
        %v2253 = vpack.c.b16 %v2077, %v2073
        %v2254 = vpack.c.b16 %v2078, %v2074
        %v2255 = vpack.c.b16 %v2083, %v2079
        %v2256 = vpack.c.b16 %v2084, %v2080
        %v2257 = vpack.c.b16 %v2085, %v2081
        %v2258 = vpack.c.b16 %v2086, %v2082
        %v2259 = vpack.c.b16 %v2091, %v2087
        %v2260 = vpack.c.b16 %v2092, %v2088
        %v2261 = vpack.c.b16 %v2093, %v2089
        %v2262 = vpack.c.b16 %v2094, %v2090
        %v2263 = vpack.c.b16 %v2099, %v2095
        %v2264 = vpack.c.b16 %v2100, %v2096
        %v2265 = vpack.c.b16 %v2101, %v2097
        %v2266 = vpack.c.b16 %v2102, %v2098
        %v2267 = vpack.c.b16 %v2107, %v2103
        %v2268 = vpack.c.b16 %v2108, %v2104
        %v2269 = vpack.c.b16 %v2109, %v2105
        %v2270 = vpack.c.b16 %v2110, %v2106
        %v2271 = vpack.c.b16 %v2115, %v2111
        %v2272 = vpack.c.b16 %v2116, %v2112
        %v2273 = vpack.c.b16 %v2117, %v2113
        %v2274 = vpack.c.b16 %v2118, %v2114
        %v2275 = vpack.c.b16 %v2123, %v2119
        %v2276 = vpack.c.b16 %v2124, %v2120
        %v2277 = vpack.c.b16 %v2125, %v2121
        %v2278 = vpack.c.b16 %v2126, %v2122
        %v2279 = vpack.c.b16 %v2131, %v2127
        %v2280 = vpack.c.b16 %v2132, %v2128
        %v2281 = vpack.c.b16 %v2133, %v2129
        %v2282 = vpack.c.b16 %v2134, %v2130
        %v2283 = vpack.c.b16 %v2139, %v2135
        %v2284 = vpack.c.b16 %v2140, %v2136
        %v2285 = vpack.c.b16 %v2141, %v2137
        %v2286 = vpack.c.b16 %v2142, %v2138
        %v2287 = vpack.c.b16 %v2147, %v2143
        %v2288 = vpack.c.b16 %v2148, %v2144
        %v2289 = vpack.c.b16 %v2149, %v2145
        %v2290 = vpack.c.b16 %v2150, %v2146
        %v2291 = vpack.c.b16 %v2155, %v2151
        %v2292 = vpack.c.b16 %v2156, %v2152
        %v2293 = vpack.c.b16 %v2157, %v2153
        %v2294 = vpack.c.b16 %v2158, %v2154
        %v2295 = vpack.c.b16 %v2163, %v2159
        %v2296 = vpack.c.b16 %v2164, %v2160
        %v2297 = vpack.c.b16 %v2165, %v2161
        %v2298 = vpack.c.b16 %v2166, %v2162
        %v2299 = vpack.c.b16 %v2171, %v2167
        %v2300 = vpack.c.b16 %v2172, %v2168
        %v2301 = vpack.c.b16 %v2173, %v2169
        %v2302 = vpack.c.b16 %v2174, %v2170
        %2431 = vmatprep.subr.bf16.mxu0 %v2176
        %2432 = vmatpush1.bf16.msra.mxu0 %v2175
        %2433 = vmatprep.subr.bf16.mxu0 %v2180
        %2434 = vmatpush1.bf16.msra.mxu0 %v2179
        %2435 = vmatprep.subr.bf16.mxu0 %v2184
        %2436 = vmatpush1.bf16.msra.mxu0 %v2183
        %2437 = vmatprep.subr.bf16.mxu0 %v2188
        %2438 = vmatpush1.bf16.msra.mxu0 %v2187
        %2439 = vmatprep.subr.bf16.mxu0 %v2192
        %2440 = vmatpush1.bf16.msra.mxu0 %v2191
        %2441 = vmatprep.subr.bf16.mxu0 %v2196
        %2442 = vmatpush1.bf16.msra.mxu0 %v2195
        %2443 = vmatprep.subr.bf16.mxu0 %v2200
        %2444 = vmatpush1.bf16.msra.mxu0 %v2199
        %2445 = vmatprep.subr.bf16.mxu0 %v2204
        %2446 = vmatpush1.bf16.msra.mxu0 %v2203
        %2447 = vmatprep.subr.bf16.mxu0 %v2208
        %2448 = vmatpush1.bf16.msra.mxu0 %v2207
        %2449 = vmatprep.subr.bf16.mxu0 %v2212
        %2450 = vmatpush1.bf16.msra.mxu0 %v2211
        %2451 = vmatprep.subr.bf16.mxu0 %v2216
        %2452 = vmatpush1.bf16.msra.mxu0 %v2215
        %2453 = vmatprep.subr.bf16.mxu0 %v2220
        %2454 = vmatpush1.bf16.msra.mxu0 %v2219
        %2455 = vmatprep.subr.bf16.mxu0 %v2224
        %2456 = vmatpush1.bf16.msra.mxu0 %v2223
        %2457 = vmatprep.subr.bf16.mxu0 %v2228
        %2458 = vmatpush1.bf16.msra.mxu0 %v2227
        %2459 = vmatprep.subr.bf16.mxu0 %v2232
        %2460 = vmatpush1.bf16.msra.mxu0 %v2231
        %2461 = vmatprep.subr.bf16.mxu0 %v2236
        %2462 = vmatpush1.bf16.msra.mxu0 %v2235
        %2463 = vmatprep.mubr.bf16.mxu0 %v1578
        %2464 = vmatmul.mubr.bf16.gmra.mrb[0].mxu0 %v1577
        %v2465 = vpop.f32.mrb[0].mxu0
        %v2466 = vadd.f32 %v1774, %v2465
        %v2467 = vpop.f32.mrb[0].mxu0
        %v2468 = vadd.f32 %v1778, %v2467
        %v2469 = vpop.f32.mrb[0].mxu0
        %v2470 = vadd.f32 %v1774, %v2469
        %v2471 = vpop.f32.mrb[0].mxu0
        %v2472 = vadd.f32 %v1778, %v2471
        %2473 = vmatprep.mubr.bf16.mxu0 %v1582
        %2474 = vmatmul.mubr.bf16.gmra.mrb[0].mxu0 %v1581
        %v2475 = vpop.f32.mrb[0].mxu0
        %v2476 = vadd.f32 %v1774, %v2475
        %v2477 = vpop.f32.mrb[0].mxu0
        %v2478 = vadd.f32 %v1778, %v2477
        %v2479 = vpop.f32.mrb[0].mxu0
        %v2480 = vadd.f32 %v1774, %v2479
        %v2481 = vpop.f32.mrb[0].mxu0
        %v2482 = vadd.f32 %v1778, %v2481
        %2483 = vmatprep.mubr.bf16.mxu0 %v1586
        %2484 = vmatmul.mubr.bf16.gmra.mrb[0].mxu0 %v1585
        %v2485 = vpop.f32.mrb[0].mxu0
        %v2486 = vadd.f32 %v1774, %v2485
        %v2487 = vpop.f32.mrb[0].mxu0
        %v2488 = vadd.f32 %v1778, %v2487
        %v2489 = vpop.f32.mrb[0].mxu0
        %v2490 = vadd.f32 %v1774, %v2489
        %v2491 = vpop.f32.mrb[0].mxu0
        %v2492 = vadd.f32 %v1778, %v2491
        %2493 = vmatprep.mubr.bf16.mxu0 %v1590
        %2494 = vmatmul.mubr.bf16.gmra.mrb[0].mxu0 %v1589
        %v2495 = vpop.f32.mrb[0].mxu0
        %v2496 = vadd.f32 %v1774, %v2495
        %v2497 = vpop.f32.mrb[0].mxu0
        %v2498 = vadd.f32 %v1778, %v2497
        %v2499 = vpop.f32.mrb[0].mxu0
        %v2500 = vadd.f32 %v1774, %v2499
        %v2501 = vpop.f32.mrb[0].mxu0
        %v2502 = vadd.f32 %v1778, %v2501
        %2503 = vmatprep.mubr.bf16.mxu0 %v1594
        %2504 = vmatmul.mubr.bf16.gmra.mrb[0].mxu0 %v1593
        %v2505 = vpop.f32.mrb[0].mxu0
        %v2506 = vadd.f32 %v1774, %v2505
        %v2507 = vpop.f32.mrb[0].mxu0
        %v2508 = vadd.f32 %v1778, %v2507
        %v2509 = vpop.f32.mrb[0].mxu0
        %v2510 = vadd.f32 %v1774, %v2509
        %v2511 = vpop.f32.mrb[0].mxu0
        %v2512 = vadd.f32 %v1778, %v2511
        %2513 = vmatprep.mubr.bf16.mxu0 %v1598
        %2514 = vmatmul.mubr.bf16.gmra.mrb[0].mxu0 %v1597
        %v2515 = vpop.f32.mrb[0].mxu0
        %v2516 = vadd.f32 %v1774, %v2515
        %v2517 = vpop.f32.mrb[0].mxu0
        %v2518 = vadd.f32 %v1778, %v2517
        %v2519 = vpop.f32.mrb[0].mxu0
        %v2520 = vadd.f32 %v1774, %v2519
        %v2521 = vpop.f32.mrb[0].mxu0
        %v2522 = vadd.f32 %v1778, %v2521
        %2523 = vmatprep.mubr.bf16.mxu0 %v1602
        %2524 = vmatmul.mubr.bf16.gmra.mrb[0].mxu0 %v1601
        %v2525 = vpop.f32.mrb[0].mxu0
        %v2526 = vadd.f32 %v1774, %v2525
        %v2527 = vpop.f32.mrb[0].mxu0
        %v2528 = vadd.f32 %v1778, %v2527
        %v2529 = vpop.f32.mrb[0].mxu0
        %v2530 = vadd.f32 %v1774, %v2529
        %v2531 = vpop.f32.mrb[0].mxu0
        %v2532 = vadd.f32 %v1778, %v2531
        %2533 = vmatprep.mubr.bf16.mxu0 %v1606
        %2534 = vmatmul.mubr.bf16.gmra.mrb[0].mxu0 %v1605
        %v2535 = vpop.f32.mrb[0].mxu0
        %v2536 = vadd.f32 %v1774, %v2535
        %v2537 = vpop.f32.mrb[0].mxu0
        %v2538 = vadd.f32 %v1778, %v2537
        %v2539 = vpop.f32.mrb[0].mxu0
        %v2540 = vadd.f32 %v1774, %v2539
        %v2541 = vpop.f32.mrb[0].mxu0
        %v2542 = vadd.f32 %v1778, %v2541
        %2543 = vmatprep.mubr.bf16.mxu0 %v1610
        %2544 = vmatmul.mubr.bf16.gmra.mrb[0].mxu0 %v1609
        %v2545 = vpop.f32.mrb[0].mxu0
        %v2546 = vadd.f32 %v1774, %v2545
        %v2547 = vpop.f32.mrb[0].mxu0
        %v2548 = vadd.f32 %v1778, %v2547
        %v2549 = vpop.f32.mrb[0].mxu0
        %v2550 = vadd.f32 %v1774, %v2549
        %v2551 = vpop.f32.mrb[0].mxu0
        %v2552 = vadd.f32 %v1778, %v2551
        %2553 = vmatprep.mubr.bf16.mxu0 %v1614
        %2554 = vmatmul.mubr.bf16.gmra.mrb[0].mxu0 %v1613
        %v2555 = vpop.f32.mrb[0].mxu0
        %v2556 = vadd.f32 %v1774, %v2555
        %v2557 = vpop.f32.mrb[0].mxu0
        %v2558 = vadd.f32 %v1778, %v2557
        %v2559 = vpop.f32.mrb[0].mxu0
        %v2560 = vadd.f32 %v1774, %v2559
        %v2561 = vpop.f32.mrb[0].mxu0
        %v2562 = vadd.f32 %v1778, %v2561
        %2563 = vmatprep.mubr.bf16.mxu0 %v1618
        %2564 = vmatmul.mubr.bf16.gmra.mrb[0].mxu0 %v1617
        %v2565 = vpop.f32.mrb[0].mxu0
        %v2566 = vadd.f32 %v1774, %v2565
        %v2567 = vpop.f32.mrb[0].mxu0
        %v2568 = vadd.f32 %v1778, %v2567
        %v2569 = vpop.f32.mrb[0].mxu0
        %v2570 = vadd.f32 %v1774, %v2569
        %v2571 = vpop.f32.mrb[0].mxu0
        %v2572 = vadd.f32 %v1778, %v2571
        %2573 = vmatprep.mubr.bf16.mxu0 %v1622
        %2574 = vmatmul.mubr.bf16.gmra.mrb[0].mxu0 %v1621
        %v2575 = vpop.f32.mrb[0].mxu0
        %v2576 = vadd.f32 %v1774, %v2575
        %v2577 = vpop.f32.mrb[0].mxu0
        %v2578 = vadd.f32 %v1778, %v2577
        %v2579 = vpop.f32.mrb[0].mxu0
        %v2580 = vadd.f32 %v1774, %v2579
        %v2581 = vpop.f32.mrb[0].mxu0
        %v2582 = vadd.f32 %v1778, %v2581
        %2583 = vmatprep.mubr.bf16.mxu0 %v1626
        %2584 = vmatmul.mubr.bf16.gmra.mrb[0].mxu0 %v1625
        %v2585 = vpop.f32.mrb[0].mxu0
        %v2586 = vadd.f32 %v1774, %v2585
        %v2587 = vpop.f32.mrb[0].mxu0
        %v2588 = vadd.f32 %v1778, %v2587
        %v2589 = vpop.f32.mrb[0].mxu0
        %v2590 = vadd.f32 %v1774, %v2589
        %v2591 = vpop.f32.mrb[0].mxu0
        %v2592 = vadd.f32 %v1778, %v2591
        %2593 = vmatprep.mubr.bf16.mxu0 %v1630
        %2594 = vmatmul.mubr.bf16.gmra.mrb[0].mxu0 %v1629
        %v2595 = vpop.f32.mrb[0].mxu0
        %v2596 = vadd.f32 %v1774, %v2595
        %v2597 = vpop.f32.mrb[0].mxu0
        %v2598 = vadd.f32 %v1778, %v2597
        %v2599 = vpop.f32.mrb[0].mxu0
        %v2600 = vadd.f32 %v1774, %v2599
        %v2601 = vpop.f32.mrb[0].mxu0
        %v2602 = vadd.f32 %v1778, %v2601
        %2603 = vmatprep.mubr.bf16.mxu0 %v1634
        %2604 = vmatmul.mubr.bf16.gmra.mrb[0].mxu0 %v1633
        %v2605 = vpop.f32.mrb[0].mxu0
        %v2606 = vadd.f32 %v1774, %v2605
        %v2607 = vpop.f32.mrb[0].mxu0
        %v2608 = vadd.f32 %v1778, %v2607
        %v2609 = vpop.f32.mrb[0].mxu0
        %v2610 = vadd.f32 %v1774, %v2609
        %v2611 = vpop.f32.mrb[0].mxu0
        %v2612 = vadd.f32 %v1778, %v2611
        %2613 = vmatprep.mubr.bf16.mxu0 %v1638
        %2614 = vmatmul.mubr.bf16.gmra.mrb[0].mxu0 %v1637
        %v2615 = vpop.f32.mrb[0].mxu0
        %v2616 = vadd.f32 %v1774, %v2615
        %v2617 = vpop.f32.mrb[0].mxu0
        %v2618 = vadd.f32 %v1778, %v2617
        %v2619 = vpop.f32.mrb[0].mxu0
        %v2620 = vadd.f32 %v1774, %v2619
        %v2621 = vpop.f32.mrb[0].mxu0
        %v2622 = vadd.f32 %v1778, %v2621
        %2623 = vdwg.mxu0
        %2624 = vmatprep.subr.bf16.mxu0 %v2240
        %2625 = vmatpush1.bf16.msra.mxu0 %v2239
        %2626 = vmatprep.subr.bf16.mxu0 %v2244
        %2627 = vmatpush1.bf16.msra.mxu0 %v2243
        %2628 = vmatprep.subr.bf16.mxu0 %v2248
        %2629 = vmatpush1.bf16.msra.mxu0 %v2247
        %2630 = vmatprep.subr.bf16.mxu0 %v2252
        %2631 = vmatpush1.bf16.msra.mxu0 %v2251
        %2632 = vmatprep.subr.bf16.mxu0 %v2256
        %2633 = vmatpush1.bf16.msra.mxu0 %v2255
        %2634 = vmatprep.subr.bf16.mxu0 %v2260
        %2635 = vmatpush1.bf16.msra.mxu0 %v2259
        %2636 = vmatprep.subr.bf16.mxu0 %v2264
        %2637 = vmatpush1.bf16.msra.mxu0 %v2263
        %2638 = vmatprep.subr.bf16.mxu0 %v2268
        %2639 = vmatpush1.bf16.msra.mxu0 %v2267
        %2640 = vmatprep.subr.bf16.mxu0 %v2272
        %2641 = vmatpush1.bf16.msra.mxu0 %v2271
        %2642 = vmatprep.subr.bf16.mxu0 %v2276
        %2643 = vmatpush1.bf16.msra.mxu0 %v2275
        %2644 = vmatprep.subr.bf16.mxu0 %v2280
        %2645 = vmatpush1.bf16.msra.mxu0 %v2279
        %2646 = vmatprep.subr.bf16.mxu0 %v2284
        %2647 = vmatpush1.bf16.msra.mxu0 %v2283
        %2648 = vmatprep.subr.bf16.mxu0 %v2288
        %2649 = vmatpush1.bf16.msra.mxu0 %v2287
        %2650 = vmatprep.subr.bf16.mxu0 %v2292
        %2651 = vmatpush1.bf16.msra.mxu0 %v2291
        %2652 = vmatprep.subr.bf16.mxu0 %v2296
        %2653 = vmatpush1.bf16.msra.mxu0 %v2295
        %2654 = vmatprep.subr.bf16.mxu0 %v2300
        %2655 = vmatpush1.bf16.msra.mxu0 %v2299
        %2656 = vmatprep.mubr.bf16.mxu0 %v1580
        %2657 = vmatmul.mubr.bf16.gmra.mrb[0].mxu0 %v1579
        %v2658 = vpop.f32.mrb[0].mxu0
        %v2659 = vadd.f32 %v2466, %v2658
        %v2660 = vpop.f32.mrb[0].mxu0
        %v2661 = vadd.f32 %v2468, %v2660
        %v2662 = vpop.f32.mrb[0].mxu0
        %v2663 = vadd.f32 %v2470, %v2662
        %v2664 = vpop.f32.mrb[0].mxu0
        %v2665 = vadd.f32 %v2472, %v2664
        %2666 = vmatprep.mubr.bf16.mxu0 %v1584
        %2667 = vmatmul.mubr.bf16.gmra.mrb[0].mxu0 %v1583
        %v2668 = vpop.f32.mrb[0].mxu0
        %v2669 = vadd.f32 %v2476, %v2668
        %v2670 = vpop.f32.mrb[0].mxu0
        %v2671 = vadd.f32 %v2478, %v2670
        %v2672 = vpop.f32.mrb[0].mxu0
        %v2673 = vadd.f32 %v2480, %v2672
        %v2674 = vpop.f32.mrb[0].mxu0
        %v2675 = vadd.f32 %v2482, %v2674
        %2676 = vmatprep.mubr.bf16.mxu0 %v1588
        %2677 = vmatmul.mubr.bf16.gmra.mrb[0].mxu0 %v1587
        %v2678 = vpop.f32.mrb[0].mxu0
        %v2679 = vadd.f32 %v2486, %v2678
        %v2680 = vpop.f32.mrb[0].mxu0
        %v2681 = vadd.f32 %v2488, %v2680
        %v2682 = vpop.f32.mrb[0].mxu0
        %v2683 = vadd.f32 %v2490, %v2682
        %v2684 = vpop.f32.mrb[0].mxu0
        %v2685 = vadd.f32 %v2492, %v2684
        %2686 = vmatprep.mubr.bf16.mxu0 %v1592
        %2687 = vmatmul.mubr.bf16.gmra.mrb[0].mxu0 %v1591
        %v2688 = vpop.f32.mrb[0].mxu0
        %v2689 = vadd.f32 %v2496, %v2688
        %v2690 = vpop.f32.mrb[0].mxu0
        %v2691 = vadd.f32 %v2498, %v2690
        %v2692 = vpop.f32.mrb[0].mxu0
        %v2693 = vadd.f32 %v2500, %v2692
        %v2694 = vpop.f32.mrb[0].mxu0
        %v2695 = vadd.f32 %v2502, %v2694
        %2696 = vmatprep.mubr.bf16.mxu0 %v1596
        %2697 = vmatmul.mubr.bf16.gmra.mrb[0].mxu0 %v1595
        %v2698 = vpop.f32.mrb[0].mxu0
        %v2699 = vadd.f32 %v2506, %v2698
        %v2700 = vpop.f32.mrb[0].mxu0
        %v2701 = vadd.f32 %v2508, %v2700
        %v2702 = vpop.f32.mrb[0].mxu0
        %v2703 = vadd.f32 %v2510, %v2702
        %v2704 = vpop.f32.mrb[0].mxu0
        %v2705 = vadd.f32 %v2512, %v2704
        %2706 = vmatprep.mubr.bf16.mxu0 %v1600
        %2707 = vmatmul.mubr.bf16.gmra.mrb[0].mxu0 %v1599
        %v2708 = vpop.f32.mrb[0].mxu0
        %v2709 = vadd.f32 %v2516, %v2708
        %v2710 = vpop.f32.mrb[0].mxu0
        %v2711 = vadd.f32 %v2518, %v2710
        %v2712 = vpop.f32.mrb[0].mxu0
        %v2713 = vadd.f32 %v2520, %v2712
        %v2714 = vpop.f32.mrb[0].mxu0
        %v2715 = vadd.f32 %v2522, %v2714
        %2716 = vmatprep.mubr.bf16.mxu0 %v1604
        %2717 = vmatmul.mubr.bf16.gmra.mrb[0].mxu0 %v1603
        %v2718 = vpop.f32.mrb[0].mxu0
        %v2719 = vadd.f32 %v2526, %v2718
        %v2720 = vpop.f32.mrb[0].mxu0
        %v2721 = vadd.f32 %v2528, %v2720
        %v2722 = vpop.f32.mrb[0].mxu0
        %v2723 = vadd.f32 %v2530, %v2722
        %v2724 = vpop.f32.mrb[0].mxu0
        %v2725 = vadd.f32 %v2532, %v2724
        %2726 = vmatprep.mubr.bf16.mxu0 %v1608
        %2727 = vmatmul.mubr.bf16.gmra.mrb[0].mxu0 %v1607
        %v2728 = vpop.f32.mrb[0].mxu0
        %v2729 = vadd.f32 %v2536, %v2728
        %v2730 = vpop.f32.mrb[0].mxu0
        %v2731 = vadd.f32 %v2538, %v2730
        %v2732 = vpop.f32.mrb[0].mxu0
        %v2733 = vadd.f32 %v2540, %v2732
        %v2734 = vpop.f32.mrb[0].mxu0
        %v2735 = vadd.f32 %v2542, %v2734
        %2736 = vmatprep.mubr.bf16.mxu0 %v1612
        %2737 = vmatmul.mubr.bf16.gmra.mrb[0].mxu0 %v1611
        %v2738 = vpop.f32.mrb[0].mxu0
        %v2739 = vadd.f32 %v2546, %v2738
        %v2740 = vpop.f32.mrb[0].mxu0
        %v2741 = vadd.f32 %v2548, %v2740
        %v2742 = vpop.f32.mrb[0].mxu0
        %v2743 = vadd.f32 %v2550, %v2742
        %v2744 = vpop.f32.mrb[0].mxu0
        %v2745 = vadd.f32 %v2552, %v2744
        %2746 = vmatprep.mubr.bf16.mxu0 %v1616
        %2747 = vmatmul.mubr.bf16.gmra.mrb[0].mxu0 %v1615
        %v2748 = vpop.f32.mrb[0].mxu0
        %v2749 = vadd.f32 %v2556, %v2748
        %v2750 = vpop.f32.mrb[0].mxu0
        %v2751 = vadd.f32 %v2558, %v2750
        %v2752 = vpop.f32.mrb[0].mxu0
        %v2753 = vadd.f32 %v2560, %v2752
        %v2754 = vpop.f32.mrb[0].mxu0
        %v2755 = vadd.f32 %v2562, %v2754
        %2756 = vmatprep.mubr.bf16.mxu0 %v1620
        %2757 = vmatmul.mubr.bf16.gmra.mrb[0].mxu0 %v1619
        %v2758 = vpop.f32.mrb[0].mxu0
        %v2759 = vadd.f32 %v2566, %v2758
        %v2760 = vpop.f32.mrb[0].mxu0
        %v2761 = vadd.f32 %v2568, %v2760
        %v2762 = vpop.f32.mrb[0].mxu0
        %v2763 = vadd.f32 %v2570, %v2762
        %v2764 = vpop.f32.mrb[0].mxu0
        %v2765 = vadd.f32 %v2572, %v2764
        %2766 = vmatprep.mubr.bf16.mxu0 %v1624
        %2767 = vmatmul.mubr.bf16.gmra.mrb[0].mxu0 %v1623
        %v2768 = vpop.f32.mrb[0].mxu0
        %v2769 = vadd.f32 %v2576, %v2768
        %v2770 = vpop.f32.mrb[0].mxu0
        %v2771 = vadd.f32 %v2578, %v2770
        %v2772 = vpop.f32.mrb[0].mxu0
        %v2773 = vadd.f32 %v2580, %v2772
        %v2774 = vpop.f32.mrb[0].mxu0
        %v2775 = vadd.f32 %v2582, %v2774
        %2776 = vmatprep.mubr.bf16.mxu0 %v1628
        %2777 = vmatmul.mubr.bf16.gmra.mrb[0].mxu0 %v1627
        %v2778 = vpop.f32.mrb[0].mxu0
        %v2779 = vadd.f32 %v2586, %v2778
        %v2780 = vpop.f32.mrb[0].mxu0
        %v2781 = vadd.f32 %v2588, %v2780
        %v2782 = vpop.f32.mrb[0].mxu0
        %v2783 = vadd.f32 %v2590, %v2782
        %v2784 = vpop.f32.mrb[0].mxu0
        %v2785 = vadd.f32 %v2592, %v2784
        %2786 = vmatprep.mubr.bf16.mxu0 %v1632
        %2787 = vmatmul.mubr.bf16.gmra.mrb[0].mxu0 %v1631
        %v2788 = vpop.f32.mrb[0].mxu0
        %v2789 = vadd.f32 %v2596, %v2788
        %v2790 = vpop.f32.mrb[0].mxu0
        %v2791 = vadd.f32 %v2598, %v2790
        %v2792 = vpop.f32.mrb[0].mxu0
        %v2793 = vadd.f32 %v2600, %v2792
        %v2794 = vpop.f32.mrb[0].mxu0
        %v2795 = vadd.f32 %v2602, %v2794
        %2796 = vmatprep.mubr.bf16.mxu0 %v1636
        %2797 = vmatmul.mubr.bf16.gmra.mrb[0].mxu0 %v1635
        %v2798 = vpop.f32.mrb[0].mxu0
        %v2799 = vadd.f32 %v2606, %v2798
        %v2800 = vpop.f32.mrb[0].mxu0
        %v2801 = vadd.f32 %v2608, %v2800
        %v2802 = vpop.f32.mrb[0].mxu0
        %v2803 = vadd.f32 %v2610, %v2802
        %v2804 = vpop.f32.mrb[0].mxu0
        %v2805 = vadd.f32 %v2612, %v2804
        %2806 = vmatprep.mubr.bf16.mxu0 %v1640
        %2807 = vmatmul.mubr.bf16.gmra.mrb[0].mxu0 %v1639
        %v2808 = vpop.f32.mrb[0].mxu0
        %v2809 = vadd.f32 %v2616, %v2808
        %v2810 = vpop.f32.mrb[0].mxu0
        %v2811 = vadd.f32 %v2618, %v2810
        %v2812 = vpop.f32.mrb[0].mxu0
        %v2813 = vadd.f32 %v2620, %v2812
        %v2814 = vpop.f32.mrb[0].mxu0
        %v2815 = vadd.f32 %v2622, %v2814
        %2816 = vdwg.mxu0
        %2817 = vmatprep.subr.bf16.mxu0 %v2178
        %2818 = vmatpush1.bf16.msra.mxu0 %v2177
        %2819 = vmatprep.subr.bf16.mxu0 %v2182
        %2820 = vmatpush1.bf16.msra.mxu0 %v2181
        %2821 = vmatprep.subr.bf16.mxu0 %v2186
        %2822 = vmatpush1.bf16.msra.mxu0 %v2185
        %2823 = vmatprep.subr.bf16.mxu0 %v2190
        %2824 = vmatpush1.bf16.msra.mxu0 %v2189
        %2825 = vmatprep.subr.bf16.mxu0 %v2194
        %2826 = vmatpush1.bf16.msra.mxu0 %v2193
        %2827 = vmatprep.subr.bf16.mxu0 %v2198
        %2828 = vmatpush1.bf16.msra.mxu0 %v2197
        %2829 = vmatprep.subr.bf16.mxu0 %v2202
        %2830 = vmatpush1.bf16.msra.mxu0 %v2201
        %2831 = vmatprep.subr.bf16.mxu0 %v2206
        %2832 = vmatpush1.bf16.msra.mxu0 %v2205
        %2833 = vmatprep.subr.bf16.mxu0 %v2210
        %2834 = vmatpush1.bf16.msra.mxu0 %v2209
        %2835 = vmatprep.subr.bf16.mxu0 %v2214
        %2836 = vmatpush1.bf16.msra.mxu0 %v2213
        %2837 = vmatprep.subr.bf16.mxu0 %v2218
        %2838 = vmatpush1.bf16.msra.mxu0 %v2217
        %2839 = vmatprep.subr.bf16.mxu0 %v2222
        %2840 = vmatpush1.bf16.msra.mxu0 %v2221
        %2841 = vmatprep.subr.bf16.mxu0 %v2226
        %2842 = vmatpush1.bf16.msra.mxu0 %v2225
        %2843 = vmatprep.subr.bf16.mxu0 %v2230
        %2844 = vmatpush1.bf16.msra.mxu0 %v2229
        %2845 = vmatprep.subr.bf16.mxu0 %v2234
        %2846 = vmatpush1.bf16.msra.mxu0 %v2233
        %2847 = vmatprep.subr.bf16.mxu0 %v2238
        %2848 = vmatpush1.bf16.msra.mxu0 %v2237
        %2849 = vmatprep.mubr.bf16.mxu0 %v1578
        %2850 = vmatmul.mubr.bf16.gmra.mrb[0].mxu0 %v1577
        %v2851 = vpop.f32.mrb[0].mxu0
        %v2852 = vadd.f32 %v1782, %v2851
        %v2853 = vpop.f32.mrb[0].mxu0
        %v2854 = vadd.f32 %v1786, %v2853
        %v2855 = vpop.f32.mrb[0].mxu0
        %v2856 = vadd.f32 %v1782, %v2855
        %v2857 = vpop.f32.mrb[0].mxu0
        %v2858 = vadd.f32 %v1786, %v2857
        %2859 = vmatprep.mubr.bf16.mxu0 %v1582
        %2860 = vmatmul.mubr.bf16.gmra.mrb[0].mxu0 %v1581
        %v2861 = vpop.f32.mrb[0].mxu0
        %v2862 = vadd.f32 %v1782, %v2861
        %v2863 = vpop.f32.mrb[0].mxu0
        %v2864 = vadd.f32 %v1786, %v2863
        %v2865 = vpop.f32.mrb[0].mxu0
        %v2866 = vadd.f32 %v1782, %v2865
        %v2867 = vpop.f32.mrb[0].mxu0
        %v2868 = vadd.f32 %v1786, %v2867
        %2869 = vmatprep.mubr.bf16.mxu0 %v1586
        %2870 = vmatmul.mubr.bf16.gmra.mrb[0].mxu0 %v1585
        %v2871 = vpop.f32.mrb[0].mxu0
        %v2872 = vadd.f32 %v1782, %v2871
        %v2873 = vpop.f32.mrb[0].mxu0
        %v2874 = vadd.f32 %v1786, %v2873
        %v2875 = vpop.f32.mrb[0].mxu0
        %v2876 = vadd.f32 %v1782, %v2875
        %v2877 = vpop.f32.mrb[0].mxu0
        %v2878 = vadd.f32 %v1786, %v2877
        %2879 = vmatprep.mubr.bf16.mxu0 %v1590
        %2880 = vmatmul.mubr.bf16.gmra.mrb[0].mxu0 %v1589
        %v2881 = vpop.f32.mrb[0].mxu0
        %v2882 = vadd.f32 %v1782, %v2881
        %v2883 = vpop.f32.mrb[0].mxu0
        %v2884 = vadd.f32 %v1786, %v2883
        %v2885 = vpop.f32.mrb[0].mxu0
        %v2886 = vadd.f32 %v1782, %v2885
        %v2887 = vpop.f32.mrb[0].mxu0
        %v2888 = vadd.f32 %v1786, %v2887
        %2889 = vmatprep.mubr.bf16.mxu0 %v1594
        %2890 = vmatmul.mubr.bf16.gmra.mrb[0].mxu0 %v1593
        %v2891 = vpop.f32.mrb[0].mxu0
        %v2892 = vadd.f32 %v1782, %v2891
        %v2893 = vpop.f32.mrb[0].mxu0
        %v2894 = vadd.f32 %v1786, %v2893
        %v2895 = vpop.f32.mrb[0].mxu0
        %v2896 = vadd.f32 %v1782, %v2895
        %v2897 = vpop.f32.mrb[0].mxu0
        %v2898 = vadd.f32 %v1786, %v2897
        %2899 = vmatprep.mubr.bf16.mxu0 %v1598
        %2900 = vmatmul.mubr.bf16.gmra.mrb[0].mxu0 %v1597
        %v2901 = vpop.f32.mrb[0].mxu0
        %v2902 = vadd.f32 %v1782, %v2901
        %v2903 = vpop.f32.mrb[0].mxu0
        %v2904 = vadd.f32 %v1786, %v2903
        %v2905 = vpop.f32.mrb[0].mxu0
        %v2906 = vadd.f32 %v1782, %v2905
        %v2907 = vpop.f32.mrb[0].mxu0
        %v2908 = vadd.f32 %v1786, %v2907
        %2909 = vmatprep.mubr.bf16.mxu0 %v1602
        %2910 = vmatmul.mubr.bf16.gmra.mrb[0].mxu0 %v1601
        %v2911 = vpop.f32.mrb[0].mxu0
        %v2912 = vadd.f32 %v1782, %v2911
        %v2913 = vpop.f32.mrb[0].mxu0
        %v2914 = vadd.f32 %v1786, %v2913
        %v2915 = vpop.f32.mrb[0].mxu0
        %v2916 = vadd.f32 %v1782, %v2915
        %v2917 = vpop.f32.mrb[0].mxu0
        %v2918 = vadd.f32 %v1786, %v2917
        %2919 = vmatprep.mubr.bf16.mxu0 %v1606
        %2920 = vmatmul.mubr.bf16.gmra.mrb[0].mxu0 %v1605
        %v2921 = vpop.f32.mrb[0].mxu0
        %v2922 = vadd.f32 %v1782, %v2921
        %v2923 = vpop.f32.mrb[0].mxu0
        %v2924 = vadd.f32 %v1786, %v2923
        %v2925 = vpop.f32.mrb[0].mxu0
        %v2926 = vadd.f32 %v1782, %v2925
        %v2927 = vpop.f32.mrb[0].mxu0
        %v2928 = vadd.f32 %v1786, %v2927
        %2929 = vmatprep.mubr.bf16.mxu0 %v1610
        %2930 = vmatmul.mubr.bf16.gmra.mrb[0].mxu0 %v1609
        %v2931 = vpop.f32.mrb[0].mxu0
        %v2932 = vadd.f32 %v1782, %v2931
        %v2933 = vpop.f32.mrb[0].mxu0
        %v2934 = vadd.f32 %v1786, %v2933
        %v2935 = vpop.f32.mrb[0].mxu0
        %v2936 = vadd.f32 %v1782, %v2935
        %v2937 = vpop.f32.mrb[0].mxu0
        %v2938 = vadd.f32 %v1786, %v2937
        %2939 = vmatprep.mubr.bf16.mxu0 %v1614
        %2940 = vmatmul.mubr.bf16.gmra.mrb[0].mxu0 %v1613
        %v2941 = vpop.f32.mrb[0].mxu0
        %v2942 = vadd.f32 %v1782, %v2941
        %v2943 = vpop.f32.mrb[0].mxu0
        %v2944 = vadd.f32 %v1786, %v2943
        %v2945 = vpop.f32.mrb[0].mxu0
        %v2946 = vadd.f32 %v1782, %v2945
        %v2947 = vpop.f32.mrb[0].mxu0
        %v2948 = vadd.f32 %v1786, %v2947
        %2949 = vmatprep.mubr.bf16.mxu0 %v1618
        %2950 = vmatmul.mubr.bf16.gmra.mrb[0].mxu0 %v1617
        %v2951 = vpop.f32.mrb[0].mxu0
        %v2952 = vadd.f32 %v1782, %v2951
        %v2953 = vpop.f32.mrb[0].mxu0
        %v2954 = vadd.f32 %v1786, %v2953
        %v2955 = vpop.f32.mrb[0].mxu0
        %v2956 = vadd.f32 %v1782, %v2955
        %v2957 = vpop.f32.mrb[0].mxu0
        %v2958 = vadd.f32 %v1786, %v2957
        %2959 = vmatprep.mubr.bf16.mxu0 %v1622
        %2960 = vmatmul.mubr.bf16.gmra.mrb[0].mxu0 %v1621
        %v2961 = vpop.f32.mrb[0].mxu0
        %v2962 = vadd.f32 %v1782, %v2961
        %v2963 = vpop.f32.mrb[0].mxu0
        %v2964 = vadd.f32 %v1786, %v2963
        %v2965 = vpop.f32.mrb[0].mxu0
        %v2966 = vadd.f32 %v1782, %v2965
        %v2967 = vpop.f32.mrb[0].mxu0
        %v2968 = vadd.f32 %v1786, %v2967
        %2969 = vmatprep.mubr.bf16.mxu0 %v1626
        %2970 = vmatmul.mubr.bf16.gmra.mrb[0].mxu0 %v1625
        %v2971 = vpop.f32.mrb[0].mxu0
        %v2972 = vadd.f32 %v1782, %v2971
        %v2973 = vpop.f32.mrb[0].mxu0
        %v2974 = vadd.f32 %v1786, %v2973
        %v2975 = vpop.f32.mrb[0].mxu0
        %v2976 = vadd.f32 %v1782, %v2975
        %v2977 = vpop.f32.mrb[0].mxu0
        %v2978 = vadd.f32 %v1786, %v2977
        %2979 = vmatprep.mubr.bf16.mxu0 %v1630
        %2980 = vmatmul.mubr.bf16.gmra.mrb[0].mxu0 %v1629
        %v2981 = vpop.f32.mrb[0].mxu0
        %v2982 = vadd.f32 %v1782, %v2981
        %v2983 = vpop.f32.mrb[0].mxu0
        %v2984 = vadd.f32 %v1786, %v2983
        %v2985 = vpop.f32.mrb[0].mxu0
        %v2986 = vadd.f32 %v1782, %v2985
        %v2987 = vpop.f32.mrb[0].mxu0
        %v2988 = vadd.f32 %v1786, %v2987
        %2989 = vmatprep.mubr.bf16.mxu0 %v1634
        %2990 = vmatmul.mubr.bf16.gmra.mrb[0].mxu0 %v1633
        %v2991 = vpop.f32.mrb[0].mxu0
        %v2992 = vadd.f32 %v1782, %v2991
        %v2993 = vpop.f32.mrb[0].mxu0
        %v2994 = vadd.f32 %v1786, %v2993
        %v2995 = vpop.f32.mrb[0].mxu0
        %v2996 = vadd.f32 %v1782, %v2995
        %v2997 = vpop.f32.mrb[0].mxu0
        %v2998 = vadd.f32 %v1786, %v2997
        %2999 = vmatprep.mubr.bf16.mxu0 %v1638
        %3000 = vmatmul.mubr.bf16.gmra.mrb[0].mxu0 %v1637
        %v3001 = vpop.f32.mrb[0].mxu0
        %v3002 = vadd.f32 %v1782, %v3001
        %v3003 = vpop.f32.mrb[0].mxu0
        %v3004 = vadd.f32 %v1786, %v3003
        %v3005 = vpop.f32.mrb[0].mxu0
        %v3006 = vadd.f32 %v1782, %v3005
        %v3007 = vpop.f32.mrb[0].mxu0
        %v3008 = vadd.f32 %v1786, %v3007
        %3009 = vdwg.mxu0
        %3010 = vmatprep.subr.bf16.mxu0 %v2242
        %3011 = vmatpush1.bf16.msra.mxu0 %v2241
        %3012 = vmatprep.subr.bf16.mxu0 %v2246
        %3013 = vmatpush1.bf16.msra.mxu0 %v2245
        %3014 = vmatprep.subr.bf16.mxu0 %v2250
        %3015 = vmatpush1.bf16.msra.mxu0 %v2249
        %3016 = vmatprep.subr.bf16.mxu0 %v2254
        %3017 = vmatpush1.bf16.msra.mxu0 %v2253
        %3018 = vmatprep.subr.bf16.mxu0 %v2258
        %3019 = vmatpush1.bf16.msra.mxu0 %v2257
        %3020 = vmatprep.subr.bf16.mxu0 %v2262
        %3021 = vmatpush1.bf16.msra.mxu0 %v2261
        %3022 = vmatprep.subr.bf16.mxu0 %v2266
        %3023 = vmatpush1.bf16.msra.mxu0 %v2265
        %3024 = vmatprep.subr.bf16.mxu0 %v2270
        %3025 = vmatpush1.bf16.msra.mxu0 %v2269
        %3026 = vmatprep.subr.bf16.mxu0 %v2274
        %3027 = vmatpush1.bf16.msra.mxu0 %v2273
        %3028 = vmatprep.subr.bf16.mxu0 %v2278
        %3029 = vmatpush1.bf16.msra.mxu0 %v2277
        %3030 = vmatprep.subr.bf16.mxu0 %v2282
        %3031 = vmatpush1.bf16.msra.mxu0 %v2281
        %3032 = vmatprep.subr.bf16.mxu0 %v2286
        %3033 = vmatpush1.bf16.msra.mxu0 %v2285
        %3034 = vmatprep.subr.bf16.mxu0 %v2290
        %3035 = vmatpush1.bf16.msra.mxu0 %v2289
        %3036 = vmatprep.subr.bf16.mxu0 %v2294
        %3037 = vmatpush1.bf16.msra.mxu0 %v2293
        %3038 = vmatprep.subr.bf16.mxu0 %v2298
        %3039 = vmatpush1.bf16.msra.mxu0 %v2297
        %3040 = vmatprep.subr.bf16.mxu0 %v2302
        %3041 = vmatpush1.bf16.msra.mxu0 %v2301
        %3042 = vmatprep.mubr.bf16.mxu0 %v1580
        %3043 = vmatmul.mubr.bf16.gmra.mrb[0].mxu0 %v1579
        %v3044 = vpop.f32.mrb[0].mxu0
        %v3045 = vadd.f32 %v2852, %v3044
        %v3046 = vpop.f32.mrb[0].mxu0
        %v3047 = vadd.f32 %v2854, %v3046
        %v3048 = vpop.f32.mrb[0].mxu0
        %v3049 = vadd.f32 %v2856, %v3048
        %v3050 = vpop.f32.mrb[0].mxu0
        %v3051 = vadd.f32 %v2858, %v3050
        %3052 = vmatprep.mubr.bf16.mxu0 %v1584
        %3053 = vmatmul.mubr.bf16.gmra.mrb[0].mxu0 %v1583
        %v3054 = vpop.f32.mrb[0].mxu0
        %v3055 = vadd.f32 %v2862, %v3054
        %v3056 = vpop.f32.mrb[0].mxu0
        %v3057 = vadd.f32 %v2864, %v3056
        %v3058 = vpop.f32.mrb[0].mxu0
        %v3059 = vadd.f32 %v2866, %v3058
        %v3060 = vpop.f32.mrb[0].mxu0
        %v3061 = vadd.f32 %v2868, %v3060
        %3062 = vmatprep.mubr.bf16.mxu0 %v1588
        %3063 = vmatmul.mubr.bf16.gmra.mrb[0].mxu0 %v1587
        %v3064 = vpop.f32.mrb[0].mxu0
        %v3065 = vadd.f32 %v2872, %v3064
        %v3066 = vpop.f32.mrb[0].mxu0
        %v3067 = vadd.f32 %v2874, %v3066
        %v3068 = vpop.f32.mrb[0].mxu0
        %v3069 = vadd.f32 %v2876, %v3068
        %v3070 = vpop.f32.mrb[0].mxu0
        %v3071 = vadd.f32 %v2878, %v3070
        %3072 = vmatprep.mubr.bf16.mxu0 %v1592
        %3073 = vmatmul.mubr.bf16.gmra.mrb[0].mxu0 %v1591
        %v3074 = vpop.f32.mrb[0].mxu0
        %v3075 = vadd.f32 %v2882, %v3074
        %v3076 = vpop.f32.mrb[0].mxu0
        %v3077 = vadd.f32 %v2884, %v3076
        %v3078 = vpop.f32.mrb[0].mxu0
        %v3079 = vadd.f32 %v2886, %v3078
        %v3080 = vpop.f32.mrb[0].mxu0
        %v3081 = vadd.f32 %v2888, %v3080
        %3082 = vmatprep.mubr.bf16.mxu0 %v1596
        %3083 = vmatmul.mubr.bf16.gmra.mrb[0].mxu0 %v1595
        %v3084 = vpop.f32.mrb[0].mxu0
        %v3085 = vadd.f32 %v2892, %v3084
        %v3086 = vpop.f32.mrb[0].mxu0
        %v3087 = vadd.f32 %v2894, %v3086
        %v3088 = vpop.f32.mrb[0].mxu0
        %v3089 = vadd.f32 %v2896, %v3088
        %v3090 = vpop.f32.mrb[0].mxu0
        %v3091 = vadd.f32 %v2898, %v3090
        %3092 = vmatprep.mubr.bf16.mxu0 %v1600
        %3093 = vmatmul.mubr.bf16.gmra.mrb[0].mxu0 %v1599
        %v3094 = vpop.f32.mrb[0].mxu0
        %v3095 = vadd.f32 %v2902, %v3094
        %v3096 = vpop.f32.mrb[0].mxu0
        %v3097 = vadd.f32 %v2904, %v3096
        %v3098 = vpop.f32.mrb[0].mxu0
        %v3099 = vadd.f32 %v2906, %v3098
        %v3100 = vpop.f32.mrb[0].mxu0
        %v3101 = vadd.f32 %v2908, %v3100
        %3102 = vmatprep.mubr.bf16.mxu0 %v1604
        %3103 = vmatmul.mubr.bf16.gmra.mrb[0].mxu0 %v1603
        %v3104 = vpop.f32.mrb[0].mxu0
        %v3105 = vadd.f32 %v2912, %v3104
        %v3106 = vpop.f32.mrb[0].mxu0
        %v3107 = vadd.f32 %v2914, %v3106
        %v3108 = vpop.f32.mrb[0].mxu0
        %v3109 = vadd.f32 %v2916, %v3108
        %v3110 = vpop.f32.mrb[0].mxu0
        %v3111 = vadd.f32 %v2918, %v3110
        %3112 = vmatprep.mubr.bf16.mxu0 %v1608
        %3113 = vmatmul.mubr.bf16.gmra.mrb[0].mxu0 %v1607
        %v3114 = vpop.f32.mrb[0].mxu0
        %v3115 = vadd.f32 %v2922, %v3114
        %v3116 = vpop.f32.mrb[0].mxu0
        %v3117 = vadd.f32 %v2924, %v3116
        %v3118 = vpop.f32.mrb[0].mxu0
        %v3119 = vadd.f32 %v2926, %v3118
        %v3120 = vpop.f32.mrb[0].mxu0
        %v3121 = vadd.f32 %v2928, %v3120
        %3122 = vmatprep.mubr.bf16.mxu0 %v1612
        %3123 = vmatmul.mubr.bf16.gmra.mrb[0].mxu0 %v1611
        %v3124 = vpop.f32.mrb[0].mxu0
        %v3125 = vadd.f32 %v2932, %v3124
        %v3126 = vpop.f32.mrb[0].mxu0
        %v3127 = vadd.f32 %v2934, %v3126
        %v3128 = vpop.f32.mrb[0].mxu0
        %v3129 = vadd.f32 %v2936, %v3128
        %v3130 = vpop.f32.mrb[0].mxu0
        %v3131 = vadd.f32 %v2938, %v3130
        %3132 = vmatprep.mubr.bf16.mxu0 %v1616
        %3133 = vmatmul.mubr.bf16.gmra.mrb[0].mxu0 %v1615
        %v3134 = vpop.f32.mrb[0].mxu0
        %v3135 = vadd.f32 %v2942, %v3134
        %v3136 = vpop.f32.mrb[0].mxu0
        %v3137 = vadd.f32 %v2944, %v3136
        %v3138 = vpop.f32.mrb[0].mxu0
        %v3139 = vadd.f32 %v2946, %v3138
        %v3140 = vpop.f32.mrb[0].mxu0
        %v3141 = vadd.f32 %v2948, %v3140
        %3142 = vmatprep.mubr.bf16.mxu0 %v1620
        %3143 = vmatmul.mubr.bf16.gmra.mrb[0].mxu0 %v1619
        %v3144 = vpop.f32.mrb[0].mxu0
        %v3145 = vadd.f32 %v2952, %v3144
        %v3146 = vpop.f32.mrb[0].mxu0
        %v3147 = vadd.f32 %v2954, %v3146
        %v3148 = vpop.f32.mrb[0].mxu0
        %v3149 = vadd.f32 %v2956, %v3148
        %v3150 = vpop.f32.mrb[0].mxu0
        %v3151 = vadd.f32 %v2958, %v3150
        %3152 = vmatprep.mubr.bf16.mxu0 %v1624
        %3153 = vmatmul.mubr.bf16.gmra.mrb[0].mxu0 %v1623
        %v3154 = vpop.f32.mrb[0].mxu0
        %v3155 = vadd.f32 %v2962, %v3154
        %v3156 = vpop.f32.mrb[0].mxu0
        %v3157 = vadd.f32 %v2964, %v3156
        %v3158 = vpop.f32.mrb[0].mxu0
        %v3159 = vadd.f32 %v2966, %v3158
        %v3160 = vpop.f32.mrb[0].mxu0
        %v3161 = vadd.f32 %v2968, %v3160
        %3162 = vmatprep.mubr.bf16.mxu0 %v1628
        %3163 = vmatmul.mubr.bf16.gmra.mrb[0].mxu0 %v1627
        %v3164 = vpop.f32.mrb[0].mxu0
        %v3165 = vadd.f32 %v2972, %v3164
        %v3166 = vpop.f32.mrb[0].mxu0
        %v3167 = vadd.f32 %v2974, %v3166
        %v3168 = vpop.f32.mrb[0].mxu0
        %v3169 = vadd.f32 %v2976, %v3168
        %v3170 = vpop.f32.mrb[0].mxu0
        %v3171 = vadd.f32 %v2978, %v3170
        %3172 = vmatprep.mubr.bf16.mxu0 %v1632
        %3173 = vmatmul.mubr.bf16.gmra.mrb[0].mxu0 %v1631
        %v3174 = vpop.f32.mrb[0].mxu0
        %v3175 = vadd.f32 %v2982, %v3174
        %v3176 = vpop.f32.mrb[0].mxu0
        %v3177 = vadd.f32 %v2984, %v3176
        %v3178 = vpop.f32.mrb[0].mxu0
        %v3179 = vadd.f32 %v2986, %v3178
        %v3180 = vpop.f32.mrb[0].mxu0
        %v3181 = vadd.f32 %v2988, %v3180
        %3182 = vmatprep.mubr.bf16.mxu0 %v1636
        %3183 = vmatmul.mubr.bf16.gmra.mrb[0].mxu0 %v1635
        %v3184 = vpop.f32.mrb[0].mxu0
        %v3185 = vadd.f32 %v2992, %v3184
        %v3186 = vpop.f32.mrb[0].mxu0
        %v3187 = vadd.f32 %v2994, %v3186
        %v3188 = vpop.f32.mrb[0].mxu0
        %v3189 = vadd.f32 %v2996, %v3188
        %v3190 = vpop.f32.mrb[0].mxu0
        %v3191 = vadd.f32 %v2998, %v3190
        %3192 = vmatprep.mubr.bf16.mxu0 %v1640
        %3193 = vmatmul.mubr.bf16.gmra.mrb[0].mxu0 %v1639
        %v3194 = vpop.f32.mrb[0].mxu0
        %v3195 = vadd.f32 %v3002, %v3194
        %v3196 = vpop.f32.mrb[0].mxu0
        %v3197 = vadd.f32 %v3004, %v3196
        %v3198 = vpop.f32.mrb[0].mxu0
        %v3199 = vadd.f32 %v3006, %v3198
        %v3200 = vpop.f32.mrb[0].mxu0
        %v3201 = vadd.f32 %v3008, %v3200
        %3202 = vdwg.mxu0
        %v3203 = vpack.c.bf16 %v2663, %v2659
        %v3204 = vpack.c.bf16 %v2665, %v2661
        %v3205 = vpack.c.bf16 %v3049, %v3045
        %v3206 = vpack.c.bf16 %v3051, %v3047
        %v3207 = vpack.c.bf16 %v2673, %v2669
        %v3208 = vpack.c.bf16 %v2675, %v2671
        %v3209 = vpack.c.bf16 %v3059, %v3055
        %v3210 = vpack.c.bf16 %v3061, %v3057
        %v3211 = vpack.c.bf16 %v2683, %v2679
        %v3212 = vpack.c.bf16 %v2685, %v2681
        %v3213 = vpack.c.bf16 %v3069, %v3065
        %v3214 = vpack.c.bf16 %v3071, %v3067
        %v3215 = vpack.c.bf16 %v2693, %v2689
        %v3216 = vpack.c.bf16 %v2695, %v2691
        %v3217 = vpack.c.bf16 %v3079, %v3075
        %v3218 = vpack.c.bf16 %v3081, %v3077
        %v3219 = vpack.c.bf16 %v2703, %v2699
        %v3220 = vpack.c.bf16 %v2705, %v2701
        %v3221 = vpack.c.bf16 %v3089, %v3085
        %v3222 = vpack.c.bf16 %v3091, %v3087
        %v3223 = vpack.c.bf16 %v2713, %v2709
        %v3224 = vpack.c.bf16 %v2715, %v2711
        %v3225 = vpack.c.bf16 %v3099, %v3095
        %v3226 = vpack.c.bf16 %v3101, %v3097
        %v3227 = vpack.c.bf16 %v2723, %v2719
        %v3228 = vpack.c.bf16 %v2725, %v2721
        %v3229 = vpack.c.bf16 %v3109, %v3105
        %v3230 = vpack.c.bf16 %v3111, %v3107
        %v3231 = vpack.c.bf16 %v2733, %v2729
        %v3232 = vpack.c.bf16 %v2735, %v2731
        %v3233 = vpack.c.bf16 %v3119, %v3115
        %v3234 = vpack.c.bf16 %v3121, %v3117
        %v3235 = vpack.c.bf16 %v2743, %v2739
        %v3236 = vpack.c.bf16 %v2745, %v2741
        %v3237 = vpack.c.bf16 %v3129, %v3125
        %v3238 = vpack.c.bf16 %v3131, %v3127
        %v3239 = vpack.c.bf16 %v2753, %v2749
        %v3240 = vpack.c.bf16 %v2755, %v2751
        %v3241 = vpack.c.bf16 %v3139, %v3135
        %v3242 = vpack.c.bf16 %v3141, %v3137
        %v3243 = vpack.c.bf16 %v2763, %v2759
        %v3244 = vpack.c.bf16 %v2765, %v2761
        %v3245 = vpack.c.bf16 %v3149, %v3145
        %v3246 = vpack.c.bf16 %v3151, %v3147
        %v3247 = vpack.c.bf16 %v2773, %v2769
        %v3248 = vpack.c.bf16 %v2775, %v2771
        %v3249 = vpack.c.bf16 %v3159, %v3155
        %v3250 = vpack.c.bf16 %v3161, %v3157
        %v3251 = vpack.c.bf16 %v2783, %v2779
        %v3252 = vpack.c.bf16 %v2785, %v2781
        %v3253 = vpack.c.bf16 %v3169, %v3165
        %v3254 = vpack.c.bf16 %v3171, %v3167
        %v3255 = vpack.c.bf16 %v2793, %v2789
        %v3256 = vpack.c.bf16 %v2795, %v2791
        %v3257 = vpack.c.bf16 %v3179, %v3175
        %v3258 = vpack.c.bf16 %v3181, %v3177
        %v3259 = vpack.c.bf16 %v2803, %v2799
        %v3260 = vpack.c.bf16 %v2805, %v2801
        %v3261 = vpack.c.bf16 %v3189, %v3185
        %v3262 = vpack.c.bf16 %v3191, %v3187
        %v3263 = vpack.c.bf16 %v2813, %v2809
        %v3264 = vpack.c.bf16 %v2815, %v2811
        %v3265 = vpack.c.bf16 %v3199, %v3195
        %v3266 = vpack.c.bf16 %v3201, %v3197
        %v3331 = vunpack.c.l.b16 %v3203
        %v3332 = vunpack.c.l.b16 %v3204
        %v3333 = vunpack.c.l.b16 %v3205
        %v3334 = vunpack.c.l.b16 %v3206
        %v3335 = vunpack.c.h.b16 %v3203
        %v3336 = vunpack.c.h.b16 %v3204
        %v3337 = vunpack.c.h.b16 %v3205
        %v3338 = vunpack.c.h.b16 %v3206
        %v3339 = vunpack.c.l.b16 %v3207
        %v3340 = vunpack.c.l.b16 %v3208
        %v3341 = vunpack.c.l.b16 %v3209
        %v3342 = vunpack.c.l.b16 %v3210
        %v3343 = vunpack.c.h.b16 %v3207
        %v3344 = vunpack.c.h.b16 %v3208
        %v3345 = vunpack.c.h.b16 %v3209
        %v3346 = vunpack.c.h.b16 %v3210
        %v3347 = vunpack.c.l.b16 %v3211
        %v3348 = vunpack.c.l.b16 %v3212
        %v3349 = vunpack.c.l.b16 %v3213
        %v3350 = vunpack.c.l.b16 %v3214
        %v3351 = vunpack.c.h.b16 %v3211
        %v3352 = vunpack.c.h.b16 %v3212
        %v3353 = vunpack.c.h.b16 %v3213
        %v3354 = vunpack.c.h.b16 %v3214
        %v3355 = vunpack.c.l.b16 %v3215
        %v3356 = vunpack.c.l.b16 %v3216
        %v3357 = vunpack.c.l.b16 %v3217
        %v3358 = vunpack.c.l.b16 %v3218
        %v3359 = vunpack.c.h.b16 %v3215
        %v3360 = vunpack.c.h.b16 %v3216
        %v3361 = vunpack.c.h.b16 %v3217
        %v3362 = vunpack.c.h.b16 %v3218
        %v3363 = vunpack.c.l.b16 %v3219
        %v3364 = vunpack.c.l.b16 %v3220
        %v3365 = vunpack.c.l.b16 %v3221
        %v3366 = vunpack.c.l.b16 %v3222
        %v3367 = vunpack.c.h.b16 %v3219
        %v3368 = vunpack.c.h.b16 %v3220
        %v3369 = vunpack.c.h.b16 %v3221
        %v3370 = vunpack.c.h.b16 %v3222
        %v3371 = vunpack.c.l.b16 %v3223
        %v3372 = vunpack.c.l.b16 %v3224
        %v3373 = vunpack.c.l.b16 %v3225
        %v3374 = vunpack.c.l.b16 %v3226
        %v3375 = vunpack.c.h.b16 %v3223
        %v3376 = vunpack.c.h.b16 %v3224
        %v3377 = vunpack.c.h.b16 %v3225
        %v3378 = vunpack.c.h.b16 %v3226
        %v3379 = vunpack.c.l.b16 %v3227
        %v3380 = vunpack.c.l.b16 %v3228
        %v3381 = vunpack.c.l.b16 %v3229
        %v3382 = vunpack.c.l.b16 %v3230
        %v3383 = vunpack.c.h.b16 %v3227
        %v3384 = vunpack.c.h.b16 %v3228
        %v3385 = vunpack.c.h.b16 %v3229
        %v3386 = vunpack.c.h.b16 %v3230
        %v3387 = vunpack.c.l.b16 %v3231
        %v3388 = vunpack.c.l.b16 %v3232
        %v3389 = vunpack.c.l.b16 %v3233
        %v3390 = vunpack.c.l.b16 %v3234
        %v3391 = vunpack.c.h.b16 %v3231
        %v3392 = vunpack.c.h.b16 %v3232
        %v3393 = vunpack.c.h.b16 %v3233
        %v3394 = vunpack.c.h.b16 %v3234
        %v3395 = vunpack.c.l.b16 %v3235
        %v3396 = vunpack.c.l.b16 %v3236
        %v3397 = vunpack.c.l.b16 %v3237
        %v3398 = vunpack.c.l.b16 %v3238
        %v3399 = vunpack.c.h.b16 %v3235
        %v3400 = vunpack.c.h.b16 %v3236
        %v3401 = vunpack.c.h.b16 %v3237
        %v3402 = vunpack.c.h.b16 %v3238
        %v3403 = vunpack.c.l.b16 %v3239
        %v3404 = vunpack.c.l.b16 %v3240
        %v3405 = vunpack.c.l.b16 %v3241
        %v3406 = vunpack.c.l.b16 %v3242
        %v3407 = vunpack.c.h.b16 %v3239
        %v3408 = vunpack.c.h.b16 %v3240
        %v3409 = vunpack.c.h.b16 %v3241
        %v3410 = vunpack.c.h.b16 %v3242
        %v3411 = vunpack.c.l.b16 %v3243
        %v3412 = vunpack.c.l.b16 %v3244
        %v3413 = vunpack.c.l.b16 %v3245
        %v3414 = vunpack.c.l.b16 %v3246
        %v3415 = vunpack.c.h.b16 %v3243
        %v3416 = vunpack.c.h.b16 %v3244
        %v3417 = vunpack.c.h.b16 %v3245
        %v3418 = vunpack.c.h.b16 %v3246
        %v3419 = vunpack.c.l.b16 %v3247
        %v3420 = vunpack.c.l.b16 %v3248
        %v3421 = vunpack.c.l.b16 %v3249
        %v3422 = vunpack.c.l.b16 %v3250
        %v3423 = vunpack.c.h.b16 %v3247
        %v3424 = vunpack.c.h.b16 %v3248
        %v3425 = vunpack.c.h.b16 %v3249
        %v3426 = vunpack.c.h.b16 %v3250
        %v3427 = vunpack.c.l.b16 %v3251
        %v3428 = vunpack.c.l.b16 %v3252
        %v3429 = vunpack.c.l.b16 %v3253
        %v3430 = vunpack.c.l.b16 %v3254
        %v3431 = vunpack.c.h.b16 %v3251
        %v3432 = vunpack.c.h.b16 %v3252
        %v3433 = vunpack.c.h.b16 %v3253
        %v3434 = vunpack.c.h.b16 %v3254
        %v3435 = vunpack.c.l.b16 %v3255
        %v3436 = vunpack.c.l.b16 %v3256
        %v3437 = vunpack.c.l.b16 %v3257
        %v3438 = vunpack.c.l.b16 %v3258
        %v3439 = vunpack.c.h.b16 %v3255
        %v3440 = vunpack.c.h.b16 %v3256
        %v3441 = vunpack.c.h.b16 %v3257
        %v3442 = vunpack.c.h.b16 %v3258
        %v3443 = vunpack.c.l.b16 %v3259
        %v3444 = vunpack.c.l.b16 %v3260
        %v3445 = vunpack.c.l.b16 %v3261
        %v3446 = vunpack.c.l.b16 %v3262
        %v3447 = vunpack.c.h.b16 %v3259
        %v3448 = vunpack.c.h.b16 %v3260
        %v3449 = vunpack.c.h.b16 %v3261
        %v3450 = vunpack.c.h.b16 %v3262
        %v3451 = vunpack.c.l.b16 %v3263
        %v3452 = vunpack.c.l.b16 %v3264
        %v3453 = vunpack.c.l.b16 %v3265
        %v3454 = vunpack.c.l.b16 %v3266
        %v3455 = vunpack.c.h.b16 %v3263
        %v3456 = vunpack.c.h.b16 %v3264
        %v3457 = vunpack.c.h.b16 %v3265
        %v3458 = vunpack.c.h.b16 %v3266
        %v3459 = vpack.c.b16 %v3332, %v3331
        %v3460 = vpack.c.b16 %v3334, %v3333
        %v3461 = vpack.c.b16 %v3336, %v3335
        %v3462 = vpack.c.b16 %v3338, %v3337
        %v3463 = vpack.c.b16 %v3340, %v3339
        %v3464 = vpack.c.b16 %v3342, %v3341
        %v3465 = vpack.c.b16 %v3344, %v3343
        %v3466 = vpack.c.b16 %v3346, %v3345
        %v3467 = vpack.c.b16 %v3348, %v3347
        %v3468 = vpack.c.b16 %v3350, %v3349
        %v3469 = vpack.c.b16 %v3352, %v3351
        %v3470 = vpack.c.b16 %v3354, %v3353
        %v3471 = vpack.c.b16 %v3356, %v3355
        %v3472 = vpack.c.b16 %v3358, %v3357
        %v3473 = vpack.c.b16 %v3360, %v3359
        %v3474 = vpack.c.b16 %v3362, %v3361
        %v3475 = vpack.c.b16 %v3364, %v3363
        %v3476 = vpack.c.b16 %v3366, %v3365
        %v3477 = vpack.c.b16 %v3368, %v3367
        %v3478 = vpack.c.b16 %v3370, %v3369
        %v3479 = vpack.c.b16 %v3372, %v3371
        %v3480 = vpack.c.b16 %v3374, %v3373
        %v3481 = vpack.c.b16 %v3376, %v3375
        %v3482 = vpack.c.b16 %v3378, %v3377
        %v3483 = vpack.c.b16 %v3380, %v3379
        %v3484 = vpack.c.b16 %v3382, %v3381
        %v3485 = vpack.c.b16 %v3384, %v3383
        %v3486 = vpack.c.b16 %v3386, %v3385
        %v3487 = vpack.c.b16 %v3388, %v3387
        %v3488 = vpack.c.b16 %v3390, %v3389
        %v3489 = vpack.c.b16 %v3392, %v3391
        %v3490 = vpack.c.b16 %v3394, %v3393
        %v3491 = vpack.c.b16 %v3396, %v3395
        %v3492 = vpack.c.b16 %v3398, %v3397
        %v3493 = vpack.c.b16 %v3400, %v3399
        %v3494 = vpack.c.b16 %v3402, %v3401
        %v3495 = vpack.c.b16 %v3404, %v3403
        %v3496 = vpack.c.b16 %v3406, %v3405
        %v3497 = vpack.c.b16 %v3408, %v3407
        %v3498 = vpack.c.b16 %v3410, %v3409
        %v3499 = vpack.c.b16 %v3412, %v3411
        %v3500 = vpack.c.b16 %v3414, %v3413
        %v3501 = vpack.c.b16 %v3416, %v3415
        %v3502 = vpack.c.b16 %v3418, %v3417
        %v3503 = vpack.c.b16 %v3420, %v3419
        %v3504 = vpack.c.b16 %v3422, %v3421
        %v3505 = vpack.c.b16 %v3424, %v3423
        %v3506 = vpack.c.b16 %v3426, %v3425
        %v3507 = vpack.c.b16 %v3428, %v3427
        %v3508 = vpack.c.b16 %v3430, %v3429
        %v3509 = vpack.c.b16 %v3432, %v3431
        %v3510 = vpack.c.b16 %v3434, %v3433
        %v3511 = vpack.c.b16 %v3436, %v3435
        %v3512 = vpack.c.b16 %v3438, %v3437
        %v3513 = vpack.c.b16 %v3440, %v3439
        %v3514 = vpack.c.b16 %v3442, %v3441
        %v3515 = vpack.c.b16 %v3444, %v3443
        %v3516 = vpack.c.b16 %v3446, %v3445
        %v3517 = vpack.c.b16 %v3448, %v3447
        %v3518 = vpack.c.b16 %v3450, %v3449
        %v3519 = vpack.c.b16 %v3452, %v3451
        %v3520 = vpack.c.b16 %v3454, %v3453
        %v3521 = vpack.c.b16 %v3456, %v3455
        %v3522 = vpack.c.b16 %v3458, %v3457
        %3587 = vst [vmem:[%s313] sm:$0xff] %v3459
        %3588 = vst [vmem:[%s313 + $0x8] sm:$0xff] %v3460
        %3589 = vst [vmem:[%s313 + $0x10] sm:$0xff] %v3461
        %3590 = vst [vmem:[%s313 + $0x18] sm:$0xff] %v3462
        %3591 = vst [vmem:[%s313 + $0x20] sm:$0xff] %v3463
        %3592 = vst [vmem:[%s313 + $0x28] sm:$0xff] %v3464
        %3593 = vst [vmem:[%s313 + $0x30] sm:$0xff] %v3465
        %3594 = vst [vmem:[%s313 + $0x38] sm:$0xff] %v3466
        %3595 = vst [vmem:[%s313 + $0x40] sm:$0xff] %v3467
        %3596 = vst [vmem:[%s313 + $0x48] sm:$0xff] %v3468
        %3597 = vst [vmem:[%s313 + $0x50] sm:$0xff] %v3469
        %3598 = vst [vmem:[%s313 + $0x58] sm:$0xff] %v3470
        %3599 = vst [vmem:[%s313 + $0x60] sm:$0xff] %v3471
        %3600 = vst [vmem:[%s313 + $0x68] sm:$0xff] %v3472
        %3601 = vst [vmem:[%s313 + $0x70] sm:$0xff] %v3473
        %3602 = vst [vmem:[%s313 + $0x78] sm:$0xff] %v3474
        %3603 = vst [vmem:[%s313 + $0x80] sm:$0xff] %v3475
        %3604 = vst [vmem:[%s313 + $0x88] sm:$0xff] %v3476
        %3605 = vst [vmem:[%s313 + $0x90] sm:$0xff] %v3477
        %3606 = vst [vmem:[%s313 + $0x98] sm:$0xff] %v3478
        %3607 = vst [vmem:[%s313 + $0xa0] sm:$0xff] %v3479
        %3608 = vst [vmem:[%s313 + $0xa8] sm:$0xff] %v3480
        %3609 = vst [vmem:[%s313 + $0xb0] sm:$0xff] %v3481
        %3610 = vst [vmem:[%s313 + $0xb8] sm:$0xff] %v3482
        %3611 = vst [vmem:[%s313 + $0xc0] sm:$0xff] %v3483
        %3612 = vst [vmem:[%s313 + $0xc8] sm:$0xff] %v3484
        %3613 = vst [vmem:[%s313 + $0xd0] sm:$0xff] %v3485
        %3614 = vst [vmem:[%s313 + $0xd8] sm:$0xff] %v3486
        %3615 = vst [vmem:[%s313 + $0xe0] sm:$0xff] %v3487
        %3616 = vst [vmem:[%s313 + $0xe8] sm:$0xff] %v3488
        %3617 = vst [vmem:[%s313 + $0xf0] sm:$0xff] %v3489
        %3618 = vst [vmem:[%s313 + $0xf8] sm:$0xff] %v3490
        %3619 = vst [vmem:[%s313 + $0x100] sm:$0xff] %v3491
        %3620 = vst [vmem:[%s313 + $0x108] sm:$0xff] %v3492
        %3621 = vst [vmem:[%s313 + $0x110] sm:$0xff] %v3493
        %3622 = vst [vmem:[%s313 + $0x118] sm:$0xff] %v3494
        %3623 = vst [vmem:[%s313 + $0x120] sm:$0xff] %v3495
        %3624 = vst [vmem:[%s313 + $0x128] sm:$0xff] %v3496
        %3625 = vst [vmem:[%s313 + $0x130] sm:$0xff] %v3497
        %3626 = vst [vmem:[%s313 + $0x138] sm:$0xff] %v3498
        %3627 = vst [vmem:[%s313 + $0x140] sm:$0xff] %v3499
        %3628 = vst [vmem:[%s313 + $0x148] sm:$0xff] %v3500
        %3629 = vst [vmem:[%s313 + $0x150] sm:$0xff] %v3501
        %3630 = vst [vmem:[%s313 + $0x158] sm:$0xff] %v3502
        %3631 = vst [vmem:[%s313 + $0x160] sm:$0xff] %v3503
        %3632 = vst [vmem:[%s313 + $0x168] sm:$0xff] %v3504
        %3633 = vst [vmem:[%s313 + $0x170] sm:$0xff] %v3505
        %3634 = vst [vmem:[%s313 + $0x178] sm:$0xff] %v3506
        %3635 = vst [vmem:[%s313 + $0x180] sm:$0xff] %v3507
        %3636 = vst [vmem:[%s313 + $0x188] sm:$0xff] %v3508
        %3637 = vst [vmem:[%s313 + $0x190] sm:$0xff] %v3509
        %3638 = vst [vmem:[%s313 + $0x198] sm:$0xff] %v3510
        %3639 = vst [vmem:[%s313 + $0x1a0] sm:$0xff] %v3511
        %3640 = vst [vmem:[%s313 + $0x1a8] sm:$0xff] %v3512
        %3641 = vst [vmem:[%s313 + $0x1b0] sm:$0xff] %v3513
        %3642 = vst [vmem:[%s313 + $0x1b8] sm:$0xff] %v3514
        %3643 = vst [vmem:[%s313 + $0x1c0] sm:$0xff] %v3515
        %3644 = vst [vmem:[%s313 + $0x1c8] sm:$0xff] %v3516
        %3645 = vst [vmem:[%s313 + $0x1d0] sm:$0xff] %v3517
        %3646 = vst [vmem:[%s313 + $0x1d8] sm:$0xff] %v3518
        %3647 = vst [vmem:[%s313 + $0x1e0] sm:$0xff] %v3519
        %3648 = vst [vmem:[%s313 + $0x1e8] sm:$0xff] %v3520
        %3649 = vst [vmem:[%s313 + $0x1f0] sm:$0xff] %v3521
        %3650 = vst [vmem:[%s313 + $0x1f8] sm:$0xff] %v3522
        %s3651 = sand.u32 %s158, 1
        %s3652 = scalar_lea.sflag [#allocation4], %s3651
        %s3653 = sand.u32 %s158, 1
        %s3654 = smul.addr %s3653, 512
        %s3655 = scalar_lea.vmem [#allocation11], %s3654
        // Predicated region
        $region61: #{tpu_custom_call.1} parent=39 // pred_check
          %p3656 = pneg %p168
        $region62: #{tpu_custom_call.1} parent=39 // pred_check_branch
          %3658 = sbr.rel (%p3656) target = $region64
        $region63: #{tpu_custom_call.1} parent=39 // pred_region
          %s3659 = smul.u32 32, %s29
          %s3661 = ssub.s32 8192, 8192
          %3662 = vsyncadd %s3652, %s3661
          %s3663 = smul.addr %s3659, 4
          %s3664 = smul.addr %s28, 256
          %s3665 = sadd.s32 %s3663, %s3664
          %s3666 = smul.addr %s3665, 64
          %s3667 = scalar_lea.hbm %s5, %s3666
          %s3668 = sshll.u32 %s3655, 4
          %s3669 = int_to_ptr.vmem [resolvable:$true] %s3668
          %3674 = dma.vmem_to_hbm [thread:$0]  %s3669, 8192, %s3667, %s3652, 256, 256, 16
        $region64: #{tpu_custom_call.1} parent=39 // pred_fallthru
          _
      $region40: #{tpu_custom_call.1} parent=5 // pred_fallthru
        _
      %p3675 = scmp.le.s32.totalorder 2, %s19
      // Predicated region
      $region65: #{tpu_custom_call.1} parent=5 // pred_check
        %p3676 = pneg %p3675
      $region66: #{tpu_custom_call.1} parent=5 // pred_check_branch
        %3678 = sbr.rel (%p3676) target = $region68
      $region67: #{tpu_custom_call.1} parent=5 // pred_region
        %s3679 = ssub.s32 %s19, 2
        // Predicated region
        $region69: #{tpu_custom_call.1} parent=67 // pred_check
          %p3680 = pneg %p174
        $region70: #{tpu_custom_call.1} parent=67 // pred_check_branch
          %3682 = sbr.rel (%p3680) target = $region72
        $region71: #{tpu_custom_call.1} parent=67 // pred_region
          %s3683 = sand.u32 %s159, 1
          %s3684 = scalar_lea.sflag [#allocation4], %s3683
          %s3685 = sand.u32 %s159, 1
          %s3686 = smul.addr %s3685, 512
          %s3687 = scalar_lea.vmem [#allocation11], %s3686
          %3688 = dma.done %s3684, 8192
        $region72: #{tpu_custom_call.1} parent=67 // pred_fallthru
          _
      $region68: #{tpu_custom_call.1} parent=5 // pred_fallthru
        _
    $region6: #{tpu_custom_call.1} parent=1 // loop_footer
      %s23 = sadd.s32 1, %s19
    $region7: #{tpu_custom_call.1} parent=1 // loop_footer_branch
      %18 = sbr.rel target = $region3
    $region8: #{tpu_custom_call.1} parent=1 // loop_exit
      _
    %3689 = vsyncpa [#allocation3], 1
    %s3690 = scalar_lea.sflag [#allocation3], 1
    %3691 = vsyncpa %s3690, 1
    %3692 = vsyncpa [#allocation6], 1
    %3693 = vsyncpa [#allocation9], 1
    %3694 = vsyncpa [#allocation4], 1
    %s3695 = scalar_lea.sflag [#allocation4], 1
    %3696 = vsyncpa %s3695, 1

</llo_original>
